<compile_context>
chip_gen: v7x
topology: tpu7x:2x2x1
jax: 0.10.0
libtpu: 0.0.40
codegen_flags: <defaults>
</compile_context>

<pallas_src>
import math

import jax
import jax.numpy as jnp
from jax.experimental import pallas as pl
from jax.experimental.pallas import tpu as pltpu


def _round_up(x, m):
    return ((x + m - 1) // m) * m


def _vmem_budgets():
    """Generation-aware VMEM sizing: (tile budget, scoped vmem limit)."""
    cap = 64 * 1024 * 1024                       # conservative fallback (v7x per-TC VMEM)
    try:
        cap = int(pltpu.get_tpu_info().vmem_capacity_bytes)
    except Exception:
        pass
    budget = min(max(cap - 28 * 1024 * 1024, 24 * 1024 * 1024), 100 * 1024 * 1024)
    limit = min(max(cap - 16 * 1024 * 1024, 40 * 1024 * 1024), 112 * 1024 * 1024)
    return budget, limit


# ----------------------------------------------------------------------------
# Fused kernel: per-scale (scaled-z @ row-repeated-We) embedding + MLP head
# ----------------------------------------------------------------------------
def _make_csview_kernel(S, NF, NF_pad, tile_bc):
    """Ref order: z, wrep, we, ebias, w1, b1, w2, b2, w3, b3, w4, b4, out."""

    def kernel(z_ref, wrep_ref, we_ref, eb_ref,
               w1, b1, w2, b2, w3, b3, w4, b4, o_ref):
        z32 = z_ref[...].astype(jnp.float32)                        # (T, L)

        feats = []
        for i in range(S):
            # depthwise stride-k conv + Linear(L//k -> D), reformulated as a per-row
            # per-lane scale followed by a lane-dense (T, L) @ (L, D) MXU matmul.
            zs = (z32 * wrep_ref[i]).astype(jnp.bfloat16)           # (T, L)
            feats.append(jnp.dot(zs, we_ref[i],
                                 preferred_element_type=jnp.float32))  # (T, D) f32
        if NF_pad > NF:
            feats.append(jnp.zeros((tile_bc, NF_pad - NF), jnp.float32))
        # scale-major concat == torch stack(dim=1)+rearranges+Flatten; add conv/emb bias
        x = jnp.concatenate(feats, axis=-1) + eb_ref[...]           # (T, NF_pad) f32

        # Flatten_MLP_Head: 3x residual ReLU Linear + projection (bf16 MXU, f32 accum)
        for w_r, b_r in ((w1, b1), (w2, b2), (w3, b3)):
            h = jnp.dot(x.astype(jnp.bfloat16), w_r[...],
                        preferred_element_type=jnp.float32) + b_r[...]
            x = jnp.maximum(h, 0.0) + x
        out = jnp.dot(x.astype(jnp.bfloat16), w4[...],
                      preferred_element_type=jnp.float32) + b4[...]
        o_ref[...] = out.astype(o_ref.dtype)

    return kernel


def _pick_tile_bc(BC, C, L, S, D, NF_pad, PRED_pad, vmem_budget_bytes):
    """Row-tile size: channel-aligned, bf16-sublane-aligned, MXU-friendly, VMEM-sized."""
    base = math.lcm(C, 16)          # tile starts must be channel-aligned; bf16 packs 16 sublanes
    pref = math.lcm(base, 128)      # prefer MXU-native M multiples
    if pref > 2048:
        pref = base

    # single-buffered resident weights (constant index maps)
    fixed = (S * L * D * 2                                     # bf16 row-repeated embedding W
             + (3 * NF_pad * NF_pad + NF_pad * PRED_pad) * 2   # bf16 head weights
             + (3 * NF_pad + PRED_pad) * 4)                    # f32 head biases
    # TILE_BC-proportional bytes: streamed z/out (double-buffered), resident conv scales
    # and embedding bias (single-buffered), plus activation temporaries.
    per_row = (2 * L * 2 + 2 * PRED_pad * 4
               + S * L * 4 + NF_pad * 4
               + 4 * NF_pad * 4 + 3 * L * 4)

    avail = max(vmem_budget_bytes - fixed, base * per_row)
    tile = int(avail // per_row)
    tile = max(base, min(2048, tile))
    bc_base = _round_up(BC, base)
    tile = min(tile, bc_base)
    if tile >= pref:
        tile = (tile // pref) * pref
    tile = max(base, (tile // base) * base)
    # v7x: guarantee >= 2 row tiles when possible so both TensorCores get work.
    if tile >= bc_base and bc_base >= 2 * base:
        tile = _round_up((bc_base + 1) // 2, base)
    return tile


# ----------------------------------------------------------------------------
# CSView forward (one fused pallas_call)
# ----------------------------------------------------------------------------
def csview_forward(z, params):
    B, C, L = z.shape
    rates = list(params["rates"])
    S = len(rates)
    D = params["emb_w"][0].shape[1]
    NF = S * D
    PRED = params["w4"].shape[1]
    NF_pad = _round_up(NF, 128)
    PRED_pad = _round_up(PRED, 128)

    BC = B * C
    vmem_budget, vmem_limit = _vmem_budgets()
    TILE_BC = _pick_tile_bc(BC, C, L, S, D, NF_pad, PRED_pad, vmem_budget)
    BC_pad = _round_up(BC, TILE_BC)
    nt = BC_pad // TILE_BC
    reps = TILE_BC // C

    # --- single bf16 z stream: (BC_pad, L); no per-scale replication / transpose ---
    z2 = z.reshape(BC, L).astype(jnp.bfloat16)
    if BC_pad > BC:
        z2 = jnp.pad(z2, ((0, BC_pad - BC), (0, 0)))

    # --- resident per-tile conv tap scales: wrep[i, r, l] = conv_w[i][r % C, l % k_i] ---
    wrep_c = jnp.stack([jnp.tile(params["conv_w"][i], (1, L // k))
                        for i, k in enumerate(rates)], axis=0)            # (S, C, L)
    wrep_tile = jnp.tile(wrep_c, (1, reps, 1)).astype(jnp.float32)        # (S, TILE_BC, L)

    # --- row-repeated embedding weights: we[i, l, :] = emb_w[i][l // k_i, :] ---
    we_all = jnp.stack([jnp.repeat(params["emb_w"][i], k, axis=0)
                        for i, k in enumerate(rates)], axis=0).astype(jnp.bfloat16)  # (S, L, D)

    # --- resident per-tile embedding bias: conv_b * colsum(emb_w) + emb_b (scale-major) ---
    eb_blocks = [params["conv_b"][i][:, None] * jnp.sum(params["emb_w"][i], axis=0)[None, :]
                 + params["emb_b"][i][None, :] for i in range(S)]         # each (C, D)
    eb_c = jnp.concatenate(eb_blocks, axis=-1)                            # (C, NF)
    if NF_pad > NF:
        eb_c = jnp.pad(eb_c, ((0, 0), (0, NF_pad - NF)))
    eb_tile = jnp.tile(eb_c, (reps, 1)).astype(jnp.float32)               # (TILE_BC, NF_pad)

    # --- head weights: zero-padded to lane-friendly NF_pad / PRED_pad, bf16 operands ---
    def pad_w(w, r, c):
        return jnp.pad(w, ((0, r - w.shape[0]), (0, c - w.shape[1])))

    w1 = pad_w(params["w1"], NF_pad, NF_pad).astype(jnp.bfloat16)
    w2 = pad_w(params["w2"], NF_pad, NF_pad).astype(jnp.bfloat16)
    w3 = pad_w(params["w3"], NF_pad, NF_pad).astype(jnp.bfloat16)
    w4 = pad_w(params["w4"], NF_pad, PRED_pad).astype(jnp.bfloat16)
    b1 = jnp.pad(params["b1"], (0, NF_pad - NF)).reshape(1, NF_pad)
    b2 = jnp.pad(params["b2"], (0, NF_pad - NF)).reshape(1, NF_pad)
    b3 = jnp.pad(params["b3"], (0, NF_pad - NF)).reshape(1, NF_pad)
    b4 = jnp.pad(params["b4"], (0, PRED_pad - PRED)).reshape(1, PRED_pad)

    inputs = [z2, wrep_tile, we_all, eb_tile, w1, b1, w2, b2, w3, b3, w4, b4]
    kernel = _make_csview_kernel(S, NF, NF_pad, TILE_BC)

    def _run(resident_kwargs):
        rk = resident_kwargs
        in_specs = [
            pl.BlockSpec((TILE_BC, L), lambda t: (t, 0)),                        # z (streamed)
            pl.BlockSpec((S, TILE_BC, L), lambda t: (0, 0, 0), **rk),            # conv tap scales
            pl.BlockSpec((S, L, D), lambda t: (0, 0, 0), **rk),                  # embedding weights
            pl.BlockSpec((TILE_BC, NF_pad), lambda t: (0, 0), **rk),             # embedding bias
            pl.BlockSpec((NF_pad, NF_pad), lambda t: (0, 0), **rk),              # w1
            pl.BlockSpec((1, NF_pad), lambda t: (0, 0), **rk),                   # b1
            pl.BlockSpec((NF_pad, NF_pad), lambda t: (0, 0), **rk),              # w2
            pl.BlockSpec((1, NF_pad), lambda t: (0, 0), **rk),                   # b2
            pl.BlockSpec((NF_pad, NF_pad), lambda t: (0, 0), **rk),              # w3
            pl.BlockSpec((1, NF_pad), lambda t: (0, 0), **rk),                   # b3
            pl.BlockSpec((NF_pad, PRED_pad), lambda t: (0, 0), **rk),            # w4
            pl.BlockSpec((1, PRED_pad), lambda t: (0, 0), **rk),                 # b4
        ]
        out_spec = pl.BlockSpec((TILE_BC, PRED_pad), lambda t: (t, 0))
        return pl.pallas_call(
            kernel,
            grid=(nt,),
            in_specs=in_specs,
            out_specs=out_spec,
            out_shape=jax.ShapeDtypeStruct((BC_pad, PRED_pad), jnp.float32),
            compiler_params=pltpu.CompilerParams(
                dimension_semantics=("parallel",),   # shards row tiles across v7x's 2 TCs
                vmem_limit_bytes=vmem_limit,
            ),
        )(*inputs)

    try:
        # grid-invariant weights: single-buffered VMEM residents (halves their footprint)
        out = _run(dict(pipeline_mode=pl.Buffered(1)))
    except Exception:
        # portability fallback: default double-buffering (correct, slightly more VMEM)
        out = _run({})

    return out[:BC, :PRED].reshape(B, C, PRED)


# ----------------------------------------------------------------------------
# Deterministic parameter init (shapes per CSView.__init__)
# ----------------------------------------------------------------------------
def init_params(key, seq_len, d_model, enc_in, pred_len, sample_rate=5):
    factors = set()
    for i in range(1, int(math.sqrt(seq_len)) + 1):
        if seq_len % i == 0:
            factors.add(i)
            factors.add(seq_len // i)
    rates = sorted(factors)[:sample_rate]
    num_scale = len(rates)
    nf = d_model * num_scale

    keys = iter(jax.random.split(key, 4 * num_scale + 8))

    def lin(fan_in, fan_out):
        wk, bk = next(keys), next(keys)
        s = 1.0 / math.sqrt(fan_in)
        w = jax.random.uniform(wk, (fan_in, fan_out), jnp.float32, -s, s)  # stored as W.T
        b = jax.random.uniform(bk, (fan_out,), jnp.float32, -s, s)
        return w, b

    conv_w, conv_b, emb_w, emb_b = [], [], [], []
    for k in rates:
        wk, bk = next(keys), next(keys)
        s = 1.0 / math.sqrt(k)                     # groups=C -> fan_in = k
        conv_w.append(jax.random.uniform(wk, (enc_in, k), jnp.float32, -s, s))
        conv_b.append(jax.random.uniform(bk, (enc_in,), jnp.float32, -s, s))
        w, b = lin(seq_len // k, d_model)
        emb_w.append(w)
        emb_b.append(b)

    w1, b1 = lin(nf, nf)
    w2, b2 = lin(nf, nf)
    w3, b3 = lin(nf, nf)
    w4, b4 = lin(nf, pred_len)

    return dict(
        rates=rates,
        conv_w=conv_w, conv_b=conv_b, emb_w=emb_w, emb_b=emb_b,
        w1=w1, b1=b1, w2=w2, b2=b2, w3=w3, b3=b3, w4=w4, b4=b4,
    )


# ----------------------------------------------------------------------------
# Pure-JAX reference mirroring the kernel's numerics (bf16 operands, f32 accumulate)
# ----------------------------------------------------------------------------
def reference_forward(z, p):
    B, C, L = z.shape
    BC = B * C
    bf = jnp.bfloat16
    zb = z.reshape(BC, L).astype(bf).astype(jnp.float32)
    feats = []
    for i, k in enumerate(p["rates"]):
        wrep = jnp.tile(jnp.tile(p["conv_w"][i], (1, L // k)), (B, 1))      # (BC, L)
        zs = (zb * wrep).astype(bf)
        we_rep = jnp.repeat(p["emb_w"][i], k, axis=0).astype(bf)            # (L, D)
        eb = (jnp.tile(p["conv_b"][i], B)[:, None]
              * jnp.sum(p["emb_w"][i], axis=0)[None, :] + p["emb_b"][i][None, :])
        feats.append(jnp.dot(zs, we_rep, preferred_element_type=jnp.float32) + eb)
    x = jnp.concatenate(feats, axis=-1)                                     # (BC, S*D) scale-major
    for w, b in ((p["w1"], p["b1"]), (p["w2"], p["b2"]), (p["w3"], p["b3"])):
        h = jnp.dot(x.astype(bf), w.astype(bf), preferred_element_type=jnp.float32) + b
        x = jnp.maximum(h, 0.0) + x
    out = jnp.dot(x.astype(bf), p["w4"].astype(bf), preferred_element_type=jnp.float32) + p["b4"]
    return out.reshape(B, C, -1)


if __name__ == "__main__":
    # small shapes consistent with the module
    B, C, L, D, PRED = 2, 4, 16, 32, 8        # batch, enc_in, seq_len, d_model, pred_len
    key = jax.random.PRNGKey(0)
    zkey, pkey = jax.random.split(key)
    z = jax.random.normal(zkey, (B, C, L), dtype=jnp.float32)

    params = init_params(pkey, seq_len=L, d_model=D, enc_in=C, pred_len=PRED)

    out = jax.block_until_ready(csview_forward(z, params))
    ref = reference_forward(z, params)

    assert out.shape == (B, C, PRED), out.shape
    max_err = float(jnp.max(jnp.abs(out - ref)))
    assert jnp.allclose(out, ref, rtol=1e-2, atol=1e-2), max_err
    print("KERNEL_OK")
</pallas_src>

<mosaic_0001>
module attributes {stable_mosaic.version = 11 : i64} {
  func.func @kernel(%arg0: i32, %arg1: memref<16x16xbf16, #tpu.memory_space<vmem>>, %arg2: memref<5x16x16xf32, #tpu.memory_space<vmem>>, %arg3: memref<5x16x32xbf16, #tpu.memory_space<vmem>>, %arg4: memref<16x256xf32, #tpu.memory_space<vmem>>, %arg5: memref<256x256xbf16, #tpu.memory_space<vmem>>, %arg6: memref<1x256xf32, #tpu.memory_space<vmem>>, %arg7: memref<256x256xbf16, #tpu.memory_space<vmem>>, %arg8: memref<1x256xf32, #tpu.memory_space<vmem>>, %arg9: memref<256x256xbf16, #tpu.memory_space<vmem>>, %arg10: memref<1x256xf32, #tpu.memory_space<vmem>>, %arg11: memref<256x128xbf16, #tpu.memory_space<vmem>>, %arg12: memref<1x128xf32, #tpu.memory_space<vmem>>, %arg13: memref<16x128xf32, #tpu.memory_space<vmem>>) attributes {dimension_semantics = [#tpu.dimension_semantics<parallel>], iteration_bounds = array<i64: 1>, scalar_prefetch = 0 : i64, scratch_operands = 0 : i64, tpu.core_type = #tpu.core_type<tc>, window_params = [{transform_indices = @transform_0, window_bounds = array<i64: 16, 16>}, {pipeline_mode = #tpu.pipeline_mode<synchronous>, transform_indices = @transform_1, window_bounds = array<i64: 5, 16, 16>}, {pipeline_mode = #tpu.pipeline_mode<synchronous>, transform_indices = @transform_2, window_bounds = array<i64: 5, 16, 32>}, {pipeline_mode = #tpu.pipeline_mode<synchronous>, transform_indices = @transform_3, window_bounds = array<i64: 16, 256>}, {pipeline_mode = #tpu.pipeline_mode<synchronous>, transform_indices = @transform_4, window_bounds = array<i64: 256, 256>}, {pipeline_mode = #tpu.pipeline_mode<synchronous>, transform_indices = @transform_5, window_bounds = array<i64: 1, 256>}, {pipeline_mode = #tpu.pipeline_mode<synchronous>, transform_indices = @transform_6, window_bounds = array<i64: 256, 256>}, {pipeline_mode = #tpu.pipeline_mode<synchronous>, transform_indices = @transform_7, window_bounds = array<i64: 1, 256>}, {pipeline_mode = #tpu.pipeline_mode<synchronous>, transform_indices = @transform_8, window_bounds = array<i64: 256, 256>}, {pipeline_mode = #tpu.pipeline_mode<synchronous>, transform_indices = @transform_9, window_bounds = array<i64: 1, 256>}, {pipeline_mode = #tpu.pipeline_mode<synchronous>, transform_indices = @transform_10, window_bounds = array<i64: 256, 128>}, {pipeline_mode = #tpu.pipeline_mode<synchronous>, transform_indices = @transform_11, window_bounds = array<i64: 1, 128>}, {transform_indices = @transform_12, window_bounds = array<i64: 16, 128>}]} {
    %c0 = arith.constant 0 : index
    %c0_0 = arith.constant 0 : index
    %0 = vector.load %arg1[%c0, %c0_0] : memref<16x16xbf16, #tpu.memory_space<vmem>>, vector<16x16xbf16>
    %1 = arith.extf %0 : vector<16x16xbf16> to vector<16x16xf32>
    %c0_1 = arith.constant 0 : index
    %c0_2 = arith.constant 0 : index
    %c0_3 = arith.constant 0 : index
    %2 = vector.load %arg2[%c0_1, %c0_2, %c0_3] : memref<5x16x16xf32, #tpu.memory_space<vmem>>, vector<1x16x16xf32>
    %3 = vector.shape_cast %2 : vector<1x16x16xf32> to vector<16x16xf32>
    %4 = arith.mulf %1, %3 : vector<16x16xf32>
    %5 = arith.truncf %4 : vector<16x16xf32> to vector<16x16xbf16>
    %c0_4 = arith.constant 0 : index
    %c0_5 = arith.constant 0 : index
    %c0_6 = arith.constant 0 : index
    %6 = vector.load %arg3[%c0_4, %c0_5, %c0_6] : memref<5x16x32xbf16, #tpu.memory_space<vmem>>, vector<1x16x32xbf16>
    %7 = vector.shape_cast %6 : vector<1x16x32xbf16> to vector<16x32xbf16>
    %cst = arith.constant dense<0.000000e+00> : vector<16x32xf32>
    %8 = tpu.matmul %5, %7, %cst {dimension_numbers = #tpu.dot_dimension_numbers<[1], [0], [0], [1], [0, 0, 1, 1], [], []>} : vector<16x16xbf16>, vector<16x32xbf16>, vector<16x32xf32> -> vector<16x32xf32>
    %c1 = arith.constant 1 : index
    %c0_7 = arith.constant 0 : index
    %c0_8 = arith.constant 0 : index
    %9 = vector.load %arg2[%c1, %c0_7, %c0_8] : memref<5x16x16xf32, #tpu.memory_space<vmem>>, vector<1x16x16xf32>
    %10 = vector.shape_cast %9 : vector<1x16x16xf32> to vector<16x16xf32>
    %11 = arith.mulf %1, %10 : vector<16x16xf32>
    %12 = arith.truncf %11 : vector<16x16xf32> to vector<16x16xbf16>
    %c1_9 = arith.constant 1 : index
    %c0_10 = arith.constant 0 : index
    %c0_11 = arith.constant 0 : index
    %13 = vector.load %arg3[%c1_9, %c0_10, %c0_11] : memref<5x16x32xbf16, #tpu.memory_space<vmem>>, vector<1x16x32xbf16>
    %14 = vector.shape_cast %13 : vector<1x16x32xbf16> to vector<16x32xbf16>
    %cst_12 = arith.constant dense<0.000000e+00> : vector<16x32xf32>
    %15 = tpu.matmul %12, %14, %cst_12 {dimension_numbers = #tpu.dot_dimension_numbers<[1], [0], [0], [1], [0, 0, 1, 1], [], []>} : vector<16x16xbf16>, vector<16x32xbf16>, vector<16x32xf32> -> vector<16x32xf32>
    %c2 = arith.constant 2 : index
    %c0_13 = arith.constant 0 : index
    %c0_14 = arith.constant 0 : index
    %16 = vector.load %arg2[%c2, %c0_13, %c0_14] : memref<5x16x16xf32, #tpu.memory_space<vmem>>, vector<1x16x16xf32>
    %17 = vector.shape_cast %16 : vector<1x16x16xf32> to vector<16x16xf32>
    %18 = arith.mulf %1, %17 : vector<16x16xf32>
    %19 = arith.truncf %18 : vector<16x16xf32> to vector<16x16xbf16>
    %c2_15 = arith.constant 2 : index
    %c0_16 = arith.constant 0 : index
    %c0_17 = arith.constant 0 : index
    %20 = vector.load %arg3[%c2_15, %c0_16, %c0_17] : memref<5x16x32xbf16, #tpu.memory_space<vmem>>, vector<1x16x32xbf16>
    %21 = vector.shape_cast %20 : vector<1x16x32xbf16> to vector<16x32xbf16>
    %cst_18 = arith.constant dense<0.000000e+00> : vector<16x32xf32>
    %22 = tpu.matmul %19, %21, %cst_18 {dimension_numbers = #tpu.dot_dimension_numbers<[1], [0], [0], [1], [0, 0, 1, 1], [], []>} : vector<16x16xbf16>, vector<16x32xbf16>, vector<16x32xf32> -> vector<16x32xf32>
    %c3 = arith.constant 3 : index
    %c0_19 = arith.constant 0 : index
    %c0_20 = arith.constant 0 : index
    %23 = vector.load %arg2[%c3, %c0_19, %c0_20] : memref<5x16x16xf32, #tpu.memory_space<vmem>>, vector<1x16x16xf32>
    %24 = vector.shape_cast %23 : vector<1x16x16xf32> to vector<16x16xf32>
    %25 = arith.mulf %1, %24 : vector<16x16xf32>
    %26 = arith.truncf %25 : vector<16x16xf32> to vector<16x16xbf16>
    %c3_21 = arith.constant 3 : index
    %c0_22 = arith.constant 0 : index
    %c0_23 = arith.constant 0 : index
    %27 = vector.load %arg3[%c3_21, %c0_22, %c0_23] : memref<5x16x32xbf16, #tpu.memory_space<vmem>>, vector<1x16x32xbf16>
    %28 = vector.shape_cast %27 : vector<1x16x32xbf16> to vector<16x32xbf16>
    %cst_24 = arith.constant dense<0.000000e+00> : vector<16x32xf32>
    %29 = tpu.matmul %26, %28, %cst_24 {dimension_numbers = #tpu.dot_dimension_numbers<[1], [0], [0], [1], [0, 0, 1, 1], [], []>} : vector<16x16xbf16>, vector<16x32xbf16>, vector<16x32xf32> -> vector<16x32xf32>
    %c4 = arith.constant 4 : index
    %c0_25 = arith.constant 0 : index
    %c0_26 = arith.constant 0 : index
    %30 = vector.load %arg2[%c4, %c0_25, %c0_26] : memref<5x16x16xf32, #tpu.memory_space<vmem>>, vector<1x16x16xf32>
    %31 = vector.shape_cast %30 : vector<1x16x16xf32> to vector<16x16xf32>
    %32 = arith.mulf %1, %31 : vector<16x16xf32>
    %33 = arith.truncf %32 : vector<16x16xf32> to vector<16x16xbf16>
    %c4_27 = arith.constant 4 : index
    %c0_28 = arith.constant 0 : index
    %c0_29 = arith.constant 0 : index
    %34 = vector.load %arg3[%c4_27, %c0_28, %c0_29] : memref<5x16x32xbf16, #tpu.memory_space<vmem>>, vector<1x16x32xbf16>
    %35 = vector.shape_cast %34 : vector<1x16x32xbf16> to vector<16x32xbf16>
    %cst_30 = arith.constant dense<0.000000e+00> : vector<16x32xf32>
    %36 = tpu.matmul %33, %35, %cst_30 {dimension_numbers = #tpu.dot_dimension_numbers<[1], [0], [0], [1], [0, 0, 1, 1], [], []>} : vector<16x16xbf16>, vector<16x32xbf16>, vector<16x32xf32> -> vector<16x32xf32>
    %cst_31 = arith.constant 0.000000e+00 : f32
    %37 = vector.broadcast %cst_31 : f32 to vector<16x96xf32>
    %38 = tpu.concatenate %8, %15, %22, %29, %36, %37 in 1 : vector<16x32xf32>, vector<16x32xf32>, vector<16x32xf32>, vector<16x32xf32>, vector<16x32xf32>, vector<16x96xf32> -> vector<16x256xf32>
    %c0_32 = arith.constant 0 : index
    %c0_33 = arith.constant 0 : index
    %39 = vector.load %arg4[%c0_32, %c0_33] : memref<16x256xf32, #tpu.memory_space<vmem>>, vector<16x256xf32>
    %40 = arith.addf %38, %39 : vector<16x256xf32>
    %41 = arith.truncf %40 : vector<16x256xf32> to vector<16x256xbf16>
    %c0_34 = arith.constant 0 : index
    %c0_35 = arith.constant 0 : index
    %42 = vector.load %arg5[%c0_34, %c0_35] : memref<256x256xbf16, #tpu.memory_space<vmem>>, vector<256x256xbf16>
    %cst_36 = arith.constant dense<0.000000e+00> : vector<16x256xf32>
    %43 = tpu.matmul %41, %42, %cst_36 {dimension_numbers = #tpu.dot_dimension_numbers<[1], [0], [0], [1], [0, 0, 1, 1], [], []>} : vector<16x256xbf16>, vector<256x256xbf16>, vector<16x256xf32> -> vector<16x256xf32>
    %c0_37 = arith.constant 0 : index
    %c0_38 = arith.constant 0 : index
    %44 = vector.load %arg6[%c0_37, %c0_38] : memref<1x256xf32, #tpu.memory_space<vmem>>, vector<1x256xf32>
    %45 = vector.broadcast %44 : vector<1x256xf32> to vector<16x256xf32>
    %46 = arith.addf %43, %45 : vector<16x256xf32>
    %cst_39 = arith.constant 0.000000e+00 : f32
    %47 = vector.broadcast %cst_39 : f32 to vector<16x256xf32>
    %48 = arith.maximumf %46, %47 : vector<16x256xf32>
    %49 = arith.addf %48, %40 : vector<16x256xf32>
    %50 = arith.truncf %49 : vector<16x256xf32> to vector<16x256xbf16>
    %c0_40 = arith.constant 0 : index
    %c0_41 = arith.constant 0 : index
    %51 = vector.load %arg7[%c0_40, %c0_41] : memref<256x256xbf16, #tpu.memory_space<vmem>>, vector<256x256xbf16>
    %cst_42 = arith.constant dense<0.000000e+00> : vector<16x256xf32>
    %52 = tpu.matmul %50, %51, %cst_42 {dimension_numbers = #tpu.dot_dimension_numbers<[1], [0], [0], [1], [0, 0, 1, 1], [], []>} : vector<16x256xbf16>, vector<256x256xbf16>, vector<16x256xf32> -> vector<16x256xf32>
    %c0_43 = arith.constant 0 : index
    %c0_44 = arith.constant 0 : index
    %53 = vector.load %arg8[%c0_43, %c0_44] : memref<1x256xf32, #tpu.memory_space<vmem>>, vector<1x256xf32>
    %54 = vector.broadcast %53 : vector<1x256xf32> to vector<16x256xf32>
    %55 = arith.addf %52, %54 : vector<16x256xf32>
    %cst_45 = arith.constant 0.000000e+00 : f32
    %56 = vector.broadcast %cst_45 : f32 to vector<16x256xf32>
    %57 = arith.maximumf %55, %56 : vector<16x256xf32>
    %58 = arith.addf %57, %49 : vector<16x256xf32>
    %59 = arith.truncf %58 : vector<16x256xf32> to vector<16x256xbf16>
    %c0_46 = arith.constant 0 : index
    %c0_47 = arith.constant 0 : index
    %60 = vector.load %arg9[%c0_46, %c0_47] : memref<256x256xbf16, #tpu.memory_space<vmem>>, vector<256x256xbf16>
    %cst_48 = arith.constant dense<0.000000e+00> : vector<16x256xf32>
    %61 = tpu.matmul %59, %60, %cst_48 {dimension_numbers = #tpu.dot_dimension_numbers<[1], [0], [0], [1], [0, 0, 1, 1], [], []>} : vector<16x256xbf16>, vector<256x256xbf16>, vector<16x256xf32> -> vector<16x256xf32>
    %c0_49 = arith.constant 0 : index
    %c0_50 = arith.constant 0 : index
    %62 = vector.load %arg10[%c0_49, %c0_50] : memref<1x256xf32, #tpu.memory_space<vmem>>, vector<1x256xf32>
    %63 = vector.broadcast %62 : vector<1x256xf32> to vector<16x256xf32>
    %64 = arith.addf %61, %63 : vector<16x256xf32>
    %cst_51 = arith.constant 0.000000e+00 : f32
    %65 = vector.broadcast %cst_51 : f32 to vector<16x256xf32>
    %66 = arith.maximumf %64, %65 : vector<16x256xf32>
    %67 = arith.addf %66, %58 : vector<16x256xf32>
    %68 = arith.truncf %67 : vector<16x256xf32> to vector<16x256xbf16>
    %c0_52 = arith.constant 0 : index
    %c0_53 = arith.constant 0 : index
    %69 = vector.load %arg11[%c0_52, %c0_53] : memref<256x128xbf16, #tpu.memory_space<vmem>>, vector<256x128xbf16>
    %cst_54 = arith.constant dense<0.000000e+00> : vector<16x128xf32>
    %70 = tpu.matmul %68, %69, %cst_54 {dimension_numbers = #tpu.dot_dimension_numbers<[1], [0], [0], [1], [0, 0, 1, 1], [], []>} : vector<16x256xbf16>, vector<256x128xbf16>, vector<16x128xf32> -> vector<16x128xf32>
    %c0_55 = arith.constant 0 : index
    %c0_56 = arith.constant 0 : index
    %71 = vector.load %arg12[%c0_55, %c0_56] : memref<1x128xf32, #tpu.memory_space<vmem>>, vector<1x128xf32>
    %72 = vector.broadcast %71 : vector<1x128xf32> to vector<16x128xf32>
    %73 = arith.addf %70, %72 : vector<16x128xf32>
    %c0_57 = arith.constant 0 : index
    %c0_58 = arith.constant 0 : index
    %74 = vector.load %arg13[%c0_57, %c0_58] : memref<16x128xf32, #tpu.memory_space<vmem>>, vector<16x128xf32>
    tpu.vector_store %arg13[%c0_57, %c0_58], %73 {strides = array<i32>} : memref<16x128xf32, #tpu.memory_space<vmem>>, vector<16x128xf32>,
    return
  }
  func.func @transform_0(%arg0: i32) -> (i32, i32) {
    %c0_i32 = arith.constant 0 : i32
    %c0_i32_0 = arith.constant 0 : i32
    return %arg0, %c0_i32 : i32, i32
  }
  func.func @transform_1(%arg0: i32) -> (i32, i32, i32) {
    %c0_i32 = arith.constant 0 : i32
    %c0_i32_0 = arith.constant 0 : i32
    %c0_i32_1 = arith.constant 0 : i32
    %c0_i32_2 = arith.constant 0 : i32
    return %c0_i32, %c0_i32_0, %c0_i32_1 : i32, i32, i32
  }
  func.func @transform_2(%arg0: i32) -> (i32, i32, i32) {
    %c0_i32 = arith.constant 0 : i32
    %c0_i32_0 = arith.constant 0 : i32
    %c0_i32_1 = arith.constant 0 : i32
    %c0_i32_2 = arith.constant 0 : i32
    return %c0_i32, %c0_i32_0, %c0_i32_1 : i32, i32, i32
  }
  func.func @transform_3(%arg0: i32) -> (i32, i32) {
    %c0_i32 = arith.constant 0 : i32
    %c0_i32_0 = arith.constant 0 : i32
    %c0_i32_1 = arith.constant 0 : i32
    return %c0_i32, %c0_i32_0 : i32, i32
  }
  func.func @transform_4(%arg0: i32) -> (i32, i32) {
    %c0_i32 = arith.constant 0 : i32
    %c0_i32_0 = arith.constant 0 : i32
    %c0_i32_1 = arith.constant 0 : i32
    return %c0_i32, %c0_i32_0 : i32, i32
  }
  func.func @transform_5(%arg0: i32) -> (i32, i32) {
    %c0_i32 = arith.constant 0 : i32
    %c0_i32_0 = arith.constant 0 : i32
    %c0_i32_1 = arith.constant 0 : i32
    return %c0_i32, %c0_i32_0 : i32, i32
  }
  func.func @transform_6(%arg0: i32) -> (i32, i32) {
    %c0_i32 = arith.constant 0 : i32
    %c0_i32_0 = arith.constant 0 : i32
    %c0_i32_1 = arith.constant 0 : i32
    return %c0_i32, %c0_i32_0 : i32, i32
  }
  func.func @transform_7(%arg0: i32) -> (i32, i32) {
    %c0_i32 = arith.constant 0 : i32
    %c0_i32_0 = arith.constant 0 : i32
    %c0_i32_1 = arith.constant 0 : i32
    return %c0_i32, %c0_i32_0 : i32, i32
  }
  func.func @transform_8(%arg0: i32) -> (i32, i32) {
    %c0_i32 = arith.constant 0 : i32
    %c0_i32_0 = arith.constant 0 : i32
    %c0_i32_1 = arith.constant 0 : i32
    return %c0_i32, %c0_i32_0 : i32, i32
  }
  func.func @transform_9(%arg0: i32) -> (i32, i32) {
    %c0_i32 = arith.constant 0 : i32
    %c0_i32_0 = arith.constant 0 : i32
    %c0_i32_1 = arith.constant 0 : i32
    return %c0_i32, %c0_i32_0 : i32, i32
  }
  func.func @transform_10(%arg0: i32) -> (i32, i32) {
    %c0_i32 = arith.constant 0 : i32
    %c0_i32_0 = arith.constant 0 : i32
    %c0_i32_1 = arith.constant 0 : i32
    return %c0_i32, %c0_i32_0 : i32, i32
  }
  func.func @transform_11(%arg0: i32) -> (i32, i32) {
    %c0_i32 = arith.constant 0 : i32
    %c0_i32_0 = arith.constant 0 : i32
    %c0_i32_1 = arith.constant 0 : i32
    return %c0_i32, %c0_i32_0 : i32, i32
  }
  func.func @transform_12(%arg0: i32) -> (i32, i32) {
    %c0_i32 = arith.constant 0 : i32
    %c0_i32_0 = arith.constant 0 : i32
    return %arg0, %c0_i32 : i32, i32
  }
}

module attributes {stable_mosaic.version = 11 : i64} {
  func.func @kernel(%arg0: i32, %arg1: memref<16x16xbf16, #tpu.memory_space<vmem>>, %arg2: memref<5x16x16xf32, #tpu.memory_space<vmem>>, %arg3: memref<5x16x32xbf16, #tpu.memory_space<vmem>>, %arg4: memref<16x256xf32, #tpu.memory_space<vmem>>, %arg5: memref<256x256xbf16, #tpu.memory_space<vmem>>, %arg6: memref<1x256xf32, #tpu.memory_space<vmem>>, %arg7: memref<256x256xbf16, #tpu.memory_space<vmem>>, %arg8: memref<1x256xf32, #tpu.memory_space<vmem>>, %arg9: memref<256x256xbf16, #tpu.memory_space<vmem>>, %arg10: memref<1x256xf32, #tpu.memory_space<vmem>>, %arg11: memref<256x128xbf16, #tpu.memory_space<vmem>>, %arg12: memref<1x128xf32, #tpu.memory_space<vmem>>, %arg13: memref<16x128xf32, #tpu.memory_space<vmem>>) attributes {dimension_semantics = [#tpu.dimension_semantics<parallel>], iteration_bounds = array<i64: 1>, scalar_prefetch = 0 : i64, scratch_operands = 0 : i64, tpu.core_type = #tpu.core_type<tc>, window_params = [{transform_indices = @transform_0, window_bounds = array<i64: 16, 16>}, {pipeline_mode = #tpu.pipeline_mode<synchronous>, transform_indices = @transform_1, window_bounds = array<i64: 5, 16, 16>}, {pipeline_mode = #tpu.pipeline_mode<synchronous>, transform_indices = @transform_2, window_bounds = array<i64: 5, 16, 32>}, {pipeline_mode = #tpu.pipeline_mode<synchronous>, transform_indices = @transform_3, window_bounds = array<i64: 16, 256>}, {pipeline_mode = #tpu.pipeline_mode<synchronous>, transform_indices = @transform_4, window_bounds = array<i64: 256, 256>}, {pipeline_mode = #tpu.pipeline_mode<synchronous>, transform_indices = @transform_5, window_bounds = array<i64: 1, 256>}, {pipeline_mode = #tpu.pipeline_mode<synchronous>, transform_indices = @transform_6, window_bounds = array<i64: 256, 256>}, {pipeline_mode = #tpu.pipeline_mode<synchronous>, transform_indices = @transform_7, window_bounds = array<i64: 1, 256>}, {pipeline_mode = #tpu.pipeline_mode<synchronous>, transform_indices = @transform_8, window_bounds = array<i64: 256, 256>}, {pipeline_mode = #tpu.pipeline_mode<synchronous>, transform_indices = @transform_9, window_bounds = array<i64: 1, 256>}, {pipeline_mode = #tpu.pipeline_mode<synchronous>, transform_indices = @transform_10, window_bounds = array<i64: 256, 128>}, {pipeline_mode = #tpu.pipeline_mode<synchronous>, transform_indices = @transform_11, window_bounds = array<i64: 1, 128>}, {transform_indices = @transform_12, window_bounds = array<i64: 16, 128>}]} {
    %c0 = arith.constant 0 : index
    %c0_0 = arith.constant 0 : index
    %0 = vector.load %arg1[%c0, %c0_0] : memref<16x16xbf16, #tpu.memory_space<vmem>>, vector<16x16xbf16>
    %1 = arith.extf %0 : vector<16x16xbf16> to vector<16x16xf32>
    %c0_1 = arith.constant 0 : index
    %c0_2 = arith.constant 0 : index
    %c0_3 = arith.constant 0 : index
    %2 = vector.load %arg2[%c0_1, %c0_2, %c0_3] : memref<5x16x16xf32, #tpu.memory_space<vmem>>, vector<1x16x16xf32>
    %3 = vector.shape_cast %2 : vector<1x16x16xf32> to vector<16x16xf32>
    %4 = arith.mulf %1, %3 : vector<16x16xf32>
    %5 = arith.truncf %4 : vector<16x16xf32> to vector<16x16xbf16>
    %c0_4 = arith.constant 0 : index
    %c0_5 = arith.constant 0 : index
    %c0_6 = arith.constant 0 : index
    %6 = vector.load %arg3[%c0_4, %c0_5, %c0_6] : memref<5x16x32xbf16, #tpu.memory_space<vmem>>, vector<1x16x32xbf16>
    %7 = vector.shape_cast %6 : vector<1x16x32xbf16> to vector<16x32xbf16>
    %cst = arith.constant dense<0.000000e+00> : vector<16x32xf32>
    %8 = tpu.matmul %5, %7, %cst {dimension_numbers = #tpu.dot_dimension_numbers<[1], [0], [0], [1], [0, 0, 1, 1], [], []>} : vector<16x16xbf16>, vector<16x32xbf16>, vector<16x32xf32> -> vector<16x32xf32>
    %c1 = arith.constant 1 : index
    %c0_7 = arith.constant 0 : index
    %c0_8 = arith.constant 0 : index
    %9 = vector.load %arg2[%c1, %c0_7, %c0_8] : memref<5x16x16xf32, #tpu.memory_space<vmem>>, vector<1x16x16xf32>
    %10 = vector.shape_cast %9 : vector<1x16x16xf32> to vector<16x16xf32>
    %11 = arith.mulf %1, %10 : vector<16x16xf32>
    %12 = arith.truncf %11 : vector<16x16xf32> to vector<16x16xbf16>
    %c1_9 = arith.constant 1 : index
    %c0_10 = arith.constant 0 : index
    %c0_11 = arith.constant 0 : index
    %13 = vector.load %arg3[%c1_9, %c0_10, %c0_11] : memref<5x16x32xbf16, #tpu.memory_space<vmem>>, vector<1x16x32xbf16>
    %14 = vector.shape_cast %13 : vector<1x16x32xbf16> to vector<16x32xbf16>
    %cst_12 = arith.constant dense<0.000000e+00> : vector<16x32xf32>
    %15 = tpu.matmul %12, %14, %cst_12 {dimension_numbers = #tpu.dot_dimension_numbers<[1], [0], [0], [1], [0, 0, 1, 1], [], []>} : vector<16x16xbf16>, vector<16x32xbf16>, vector<16x32xf32> -> vector<16x32xf32>
    %c2 = arith.constant 2 : index
    %c0_13 = arith.constant 0 : index
    %c0_14 = arith.constant 0 : index
    %16 = vector.load %arg2[%c2, %c0_13, %c0_14] : memref<5x16x16xf32, #tpu.memory_space<vmem>>, vector<1x16x16xf32>
    %17 = vector.shape_cast %16 : vector<1x16x16xf32> to vector<16x16xf32>
    %18 = arith.mulf %1, %17 : vector<16x16xf32>
    %19 = arith.truncf %18 : vector<16x16xf32> to vector<16x16xbf16>
    %c2_15 = arith.constant 2 : index
    %c0_16 = arith.constant 0 : index
    %c0_17 = arith.constant 0 : index
    %20 = vector.load %arg3[%c2_15, %c0_16, %c0_17] : memref<5x16x32xbf16, #tpu.memory_space<vmem>>, vector<1x16x32xbf16>
    %21 = vector.shape_cast %20 : vector<1x16x32xbf16> to vector<16x32xbf16>
    %cst_18 = arith.constant dense<0.000000e+00> : vector<16x32xf32>
    %22 = tpu.matmul %19, %21, %cst_18 {dimension_numbers = #tpu.dot_dimension_numbers<[1], [0], [0], [1], [0, 0, 1, 1], [], []>} : vector<16x16xbf16>, vector<16x32xbf16>, vector<16x32xf32> -> vector<16x32xf32>
    %c3 = arith.constant 3 : index
    %c0_19 = arith.constant 0 : index
    %c0_20 = arith.constant 0 : index
    %23 = vector.load %arg2[%c3, %c0_19, %c0_20] : memref<5x16x16xf32, #tpu.memory_space<vmem>>, vector<1x16x16xf32>
    %24 = vector.shape_cast %23 : vector<1x16x16xf32> to vector<16x16xf32>
    %25 = arith.mulf %1, %24 : vector<16x16xf32>
    %26 = arith.truncf %25 : vector<16x16xf32> to vector<16x16xbf16>
    %c3_21 = arith.constant 3 : index
    %c0_22 = arith.constant 0 : index
    %c0_23 = arith.constant 0 : index
    %27 = vector.load %arg3[%c3_21, %c0_22, %c0_23] : memref<5x16x32xbf16, #tpu.memory_space<vmem>>, vector<1x16x32xbf16>
    %28 = vector.shape_cast %27 : vector<1x16x32xbf16> to vector<16x32xbf16>
    %cst_24 = arith.constant dense<0.000000e+00> : vector<16x32xf32>
    %29 = tpu.matmul %26, %28, %cst_24 {dimension_numbers = #tpu.dot_dimension_numbers<[1], [0], [0], [1], [0, 0, 1, 1], [], []>} : vector<16x16xbf16>, vector<16x32xbf16>, vector<16x32xf32> -> vector<16x32xf32>
    %c4 = arith.constant 4 : index
    %c0_25 = arith.constant 0 : index
    %c0_26 = arith.constant 0 : index
    %30 = vector.load %arg2[%c4, %c0_25, %c0_26] : memref<5x16x16xf32, #tpu.memory_space<vmem>>, vector<1x16x16xf32>
    %31 = vector.shape_cast %30 : vector<1x16x16xf32> to vector<16x16xf32>
    %32 = arith.mulf %1, %31 : vector<16x16xf32>
    %33 = arith.truncf %32 : vector<16x16xf32> to vector<16x16xbf16>
    %c4_27 = arith.constant 4 : index
    %c0_28 = arith.constant 0 : index
    %c0_29 = arith.constant 0 : index
    %34 = vector.load %arg3[%c4_27, %c0_28, %c0_29] : memref<5x16x32xbf16, #tpu.memory_space<vmem>>, vector<1x16x32xbf16>
    %35 = vector.shape_cast %34 : vector<1x16x32xbf16> to vector<16x32xbf16>
    %cst_30 = arith.constant dense<0.000000e+00> : vector<16x32xf32>
    %36 = tpu.matmul %33, %35, %cst_30 {dimension_numbers = #tpu.dot_dimension_numbers<[1], [0], [0], [1], [0, 0, 1, 1], [], []>} : vector<16x16xbf16>, vector<16x32xbf16>, vector<16x32xf32> -> vector<16x32xf32>
    %cst_31 = arith.constant 0.000000e+00 : f32
    %37 = vector.broadcast %cst_31 : f32 to vector<16x96xf32>
    %38 = tpu.concatenate %8, %15, %22, %29, %36, %37 in 1 : vector<16x32xf32>, vector<16x32xf32>, vector<16x32xf32>, vector<16x32xf32>, vector<16x32xf32>, vector<16x96xf32> -> vector<16x256xf32>
    %c0_32 = arith.constant 0 : index
    %c0_33 = arith.constant 0 : index
    %39 = vector.load %arg4[%c0_32, %c0_33] : memref<16x256xf32, #tpu.memory_space<vmem>>, vector<16x256xf32>
    %40 = arith.addf %38, %39 : vector<16x256xf32>
    %41 = arith.truncf %40 : vector<16x256xf32> to vector<16x256xbf16>
    %c0_34 = arith.constant 0 : index
    %c0_35 = arith.constant 0 : index
    %42 = vector.load %arg5[%c0_34, %c0_35] : memref<256x256xbf16, #tpu.memory_space<vmem>>, vector<256x256xbf16>
    %cst_36 = arith.constant dense<0.000000e+00> : vector<16x256xf32>
    %43 = tpu.matmul %41, %42, %cst_36 {dimension_numbers = #tpu.dot_dimension_numbers<[1], [0], [0], [1], [0, 0, 1, 1], [], []>} : vector<16x256xbf16>, vector<256x256xbf16>, vector<16x256xf32> -> vector<16x256xf32>
    %c0_37 = arith.constant 0 : index
    %c0_38 = arith.constant 0 : index
    %44 = vector.load %arg6[%c0_37, %c0_38] : memref<1x256xf32, #tpu.memory_space<vmem>>, vector<1x256xf32>
    %45 = vector.broadcast %44 : vector<1x256xf32> to vector<16x256xf32>
    %46 = arith.addf %43, %45 : vector<16x256xf32>
    %cst_39 = arith.constant 0.000000e+00 : f32
    %47 = vector.broadcast %cst_39 : f32 to vector<16x256xf32>
    %48 = arith.maximumf %46, %47 : vector<16x256xf32>
    %49 = arith.addf %48, %40 : vector<16x256xf32>
    %50 = arith.truncf %49 : vector<16x256xf32> to vector<16x256xbf16>
    %c0_40 = arith.constant 0 : index
    %c0_41 = arith.constant 0 : index
    %51 = vector.load %arg7[%c0_40, %c0_41] : memref<256x256xbf16, #tpu.memory_space<vmem>>, vector<256x256xbf16>
    %cst_42 = arith.constant dense<0.000000e+00> : vector<16x256xf32>
    %52 = tpu.matmul %50, %51, %cst_42 {dimension_numbers = #tpu.dot_dimension_numbers<[1], [0], [0], [1], [0, 0, 1, 1], [], []>} : vector<16x256xbf16>, vector<256x256xbf16>, vector<16x256xf32> -> vector<16x256xf32>
    %c0_43 = arith.constant 0 : index
    %c0_44 = arith.constant 0 : index
    %53 = vector.load %arg8[%c0_43, %c0_44] : memref<1x256xf32, #tpu.memory_space<vmem>>, vector<1x256xf32>
    %54 = vector.broadcast %53 : vector<1x256xf32> to vector<16x256xf32>
    %55 = arith.addf %52, %54 : vector<16x256xf32>
    %cst_45 = arith.constant 0.000000e+00 : f32
    %56 = vector.broadcast %cst_45 : f32 to vector<16x256xf32>
    %57 = arith.maximumf %55, %56 : vector<16x256xf32>
    %58 = arith.addf %57, %49 : vector<16x256xf32>
    %59 = arith.truncf %58 : vector<16x256xf32> to vector<16x256xbf16>
    %c0_46 = arith.constant 0 : index
    %c0_47 = arith.constant 0 : index
    %60 = vector.load %arg9[%c0_46, %c0_47] : memref<256x256xbf16, #tpu.memory_space<vmem>>, vector<256x256xbf16>
    %cst_48 = arith.constant dense<0.000000e+00> : vector<16x256xf32>
    %61 = tpu.matmul %59, %60, %cst_48 {dimension_numbers = #tpu.dot_dimension_numbers<[1], [0], [0], [1], [0, 0, 1, 1], [], []>} : vector<16x256xbf16>, vector<256x256xbf16>, vector<16x256xf32> -> vector<16x256xf32>
    %c0_49 = arith.constant 0 : index
    %c0_50 = arith.constant 0 : index
    %62 = vector.load %arg10[%c0_49, %c0_50] : memref<1x256xf32, #tpu.memory_space<vmem>>, vector<1x256xf32>
    %63 = vector.broadcast %62 : vector<1x256xf32> to vector<16x256xf32>
    %64 = arith.addf %61, %63 : vector<16x256xf32>
    %cst_51 = arith.constant 0.000000e+00 : f32
    %65 = vector.broadcast %cst_51 : f32 to vector<16x256xf32>
    %66 = arith.maximumf %64, %65 : vector<16x256xf32>
    %67 = arith.addf %66, %58 : vector<16x256xf32>
    %68 = arith.truncf %67 : vector<16x256xf32> to vector<16x256xbf16>
    %c0_52 = arith.constant 0 : index
    %c0_53 = arith.constant 0 : index
    %69 = vector.load %arg11[%c0_52, %c0_53] : memref<256x128xbf16, #tpu.memory_space<vmem>>, vector<256x128xbf16>
    %cst_54 = arith.constant dense<0.000000e+00> : vector<16x128xf32>
    %70 = tpu.matmul %68, %69, %cst_54 {dimension_numbers = #tpu.dot_dimension_numbers<[1], [0], [0], [1], [0, 0, 1, 1], [], []>} : vector<16x256xbf16>, vector<256x128xbf16>, vector<16x128xf32> -> vector<16x128xf32>
    %c0_55 = arith.constant 0 : index
    %c0_56 = arith.constant 0 : index
    %71 = vector.load %arg12[%c0_55, %c0_56] : memref<1x128xf32, #tpu.memory_space<vmem>>, vector<1x128xf32>
    %72 = vector.broadcast %71 : vector<1x128xf32> to vector<16x128xf32>
    %73 = arith.addf %70, %72 : vector<16x128xf32>
    %c0_57 = arith.constant 0 : index
    %c0_58 = arith.constant 0 : index
    %74 = vector.load %arg13[%c0_57, %c0_58] : memref<16x128xf32, #tpu.memory_space<vmem>>, vector<16x128xf32>
    tpu.vector_store %arg13[%c0_57, %c0_58], %73 {strides = array<i32>} : memref<16x128xf32, #tpu.memory_space<vmem>>, vector<16x128xf32>,
    return
  }
  func.func @transform_0(%arg0: i32) -> (i32, i32) {
    %c0_i32 = arith.constant 0 : i32
    %c0_i32_0 = arith.constant 0 : i32
    return %arg0, %c0_i32 : i32, i32
  }
  func.func @transform_1(%arg0: i32) -> (i32, i32, i32) {
    %c0_i32 = arith.constant 0 : i32
    %c0_i32_0 = arith.constant 0 : i32
    %c0_i32_1 = arith.constant 0 : i32
    %c0_i32_2 = arith.constant 0 : i32
    return %c0_i32, %c0_i32_0, %c0_i32_1 : i32, i32, i32
  }
  func.func @transform_2(%arg0: i32) -> (i32, i32, i32) {
    %c0_i32 = arith.constant 0 : i32
    %c0_i32_0 = arith.constant 0 : i32
    %c0_i32_1 = arith.constant 0 : i32
    %c0_i32_2 = arith.constant 0 : i32
    return %c0_i32, %c0_i32_0, %c0_i32_1 : i32, i32, i32
  }
  func.func @transform_3(%arg0: i32) -> (i32, i32) {
    %c0_i32 = arith.constant 0 : i32
    %c0_i32_0 = arith.constant 0 : i32
    %c0_i32_1 = arith.constant 0 : i32
    return %c0_i32, %c0_i32_0 : i32, i32
  }
  func.func @transform_4(%arg0: i32) -> (i32, i32) {
    %c0_i32 = arith.constant 0 : i32
    %c0_i32_0 = arith.constant 0 : i32
    %c0_i32_1 = arith.constant 0 : i32
    return %c0_i32, %c0_i32_0 : i32, i32
  }
  func.func @transform_5(%arg0: i32) -> (i32, i32) {
    %c0_i32 = arith.constant 0 : i32
    %c0_i32_0 = arith.constant 0 : i32
    %c0_i32_1 = arith.constant 0 : i32
    return %c0_i32, %c0_i32_0 : i32, i32
  }
  func.func @transform_6(%arg0: i32) -> (i32, i32) {
    %c0_i32 = arith.constant 0 : i32
    %c0_i32_0 = arith.constant 0 : i32
    %c0_i32_1 = arith.constant 0 : i32
    return %c0_i32, %c0_i32_0 : i32, i32
  }
  func.func @transform_7(%arg0: i32) -> (i32, i32) {
    %c0_i32 = arith.constant 0 : i32
    %c0_i32_0 = arith.constant 0 : i32
    %c0_i32_1 = arith.constant 0 : i32
    return %c0_i32, %c0_i32_0 : i32, i32
  }
  func.func @transform_8(%arg0: i32) -> (i32, i32) {
    %c0_i32 = arith.constant 0 : i32
    %c0_i32_0 = arith.constant 0 : i32
    %c0_i32_1 = arith.constant 0 : i32
    return %c0_i32, %c0_i32_0 : i32, i32
  }
  func.func @transform_9(%arg0: i32) -> (i32, i32) {
    %c0_i32 = arith.constant 0 : i32
    %c0_i32_0 = arith.constant 0 : i32
    %c0_i32_1 = arith.constant 0 : i32
    return %c0_i32, %c0_i32_0 : i32, i32
  }
  func.func @transform_10(%arg0: i32) -> (i32, i32) {
    %c0_i32 = arith.constant 0 : i32
    %c0_i32_0 = arith.constant 0 : i32
    %c0_i32_1 = arith.constant 0 : i32
    return %c0_i32, %c0_i32_0 : i32, i32
  }
  func.func @transform_11(%arg0: i32) -> (i32, i32) {
    %c0_i32 = arith.constant 0 : i32
    %c0_i32_0 = arith.constant 0 : i32
    %c0_i32_1 = arith.constant 0 : i32
    return %c0_i32, %c0_i32_0 : i32, i32
  }
  func.func @transform_12(%arg0: i32) -> (i32, i32) {
    %c0_i32 = arith.constant 0 : i32
    %c0_i32_0 = arith.constant 0 : i32
    return %arg0, %c0_i32 : i32, i32
  }
}

</mosaic_0001>

<llo_original>
// kernel: tpu_custom_call.1
$region0: #{tpu_custom_call.1}
  #allocation0 [shape = 'u32[]', space=smem, size = 0x4, offset = 0x4, fixed_abs, tag = 'smem constant byte address 0x4 - core index']
  #allocation1 [shape = 'u32[144,128]{1,0:T(1,128)}', space=vmem, size = 0x12000, scoped, tag = 'internal scratch']
  %s0 = inlined_call_operand.hbm [shape: bf16[16,16], index: 0, kind: input, shape index: {}]
  %s1 = inlined_call_operand.hbm [shape: f32[5,16,16], index: 1, kind: input, shape index: {}]
  %s2 = inlined_call_operand.hbm [shape: bf16[5,16,32], index: 2, kind: input, shape index: {}]
  %s3 = inlined_call_operand.hbm [shape: f32[16,256], index: 3, kind: input, shape index: {}]
  %s4 = inlined_call_operand.hbm [shape: bf16[256,256], index: 4, kind: input, shape index: {}]
  %s5 = inlined_call_operand.vmem [shape: f32[1,256], index: 5, kind: input, shape index: {}]
  %s6 = inlined_call_operand.hbm [shape: bf16[256,256], index: 6, kind: input, shape index: {}]
  %s7 = inlined_call_operand.vmem [shape: f32[1,256], index: 7, kind: input, shape index: {}]
  %s8 = inlined_call_operand.hbm [shape: bf16[256,256], index: 8, kind: input, shape index: {}]
  %s9 = inlined_call_operand.vmem [shape: f32[1,256], index: 9, kind: input, shape index: {}]
  %s10 = inlined_call_operand.hbm [shape: bf16[256,128], index: 10, kind: input, shape index: {}]
  %s11 = inlined_call_operand.vmem [shape: f32[1,128], index: 11, kind: input, shape index: {}]
  %s12 = inlined_call_operand.hbm [shape: f32[16,128], index: 12, kind: output, shape index: {}]
  %s13 = sld [smem:[#allocation0]]
  $region90: #{tpu_custom_call.1} parent=0
    _
  %s15 = ssub.s32 1, %s13
  %s16 = scalar_select 0, %s15, %s13
  $region1: #{tpu_custom_call.1} parent=0
    #allocation2 [shape = 'u8[4096]{0}', space=vmem, size = 0x1000, scoped, tag = 'input window, operand 0, single buffered']
    #allocation3 [shape = 's32[1]{0}', space=sflag, size = 0x4, scoped, tag = 'scoped memory for tpu_custom_call.1']
    #allocation4 [shape = 's32[1]{0}', space=sflag, size = 0x4, scoped, tag = 'scoped memory for tpu_custom_call.1']
    #allocation5 [shape = 'u8[40960]{0}', space=vmem, size = 0xa000, scoped, tag = 'input window, operand 1, single buffered']
    #allocation6 [shape = 's32[1]{0}', space=sflag, size = 0x4, scoped, tag = 'scoped memory for tpu_custom_call.1']
    #allocation7 [shape = 'u8[20480]{0}', space=vmem, size = 0x5000, scoped, tag = 'input window, operand 2, single buffered']
    #allocation8 [shape = 'u8[16384]{0}', space=vmem, size = 0x4000, scoped, tag = 'input window, operand 3, single buffered']
    #allocation9 [shape = 's32[1]{0}', space=sflag, size = 0x4, scoped, tag = 'scoped memory for tpu_custom_call.1']
    #allocation10 [shape = 'u8[131072]{0}', space=vmem, size = 0x20000, scoped, tag = 'input window, operand 4, single buffered']
    #allocation11 [shape = 'u8[131072]{0}', space=vmem, size = 0x20000, scoped, tag = 'input window, operand 6, single buffered']
    #allocation12 [shape = 's32[1]{0}', space=sflag, size = 0x4, scoped, tag = 'scoped memory for tpu_custom_call.1']
    #allocation13 [shape = 'u8[131072]{0}', space=vmem, size = 0x20000, scoped, tag = 'input window, operand 8, single buffered']
    #allocation14 [shape = 'u8[65536]{0}', space=vmem, size = 0x10000, scoped, tag = 'input window, operand 10, single buffered']
    #allocation15 [shape = 's32[1]{0}', space=sflag, size = 0x4, scoped, tag = 'scoped memory for tpu_custom_call.1']
    #allocation16 [shape = 'u8[8192]{0}', space=vmem, size = 0x2000, scoped, tag = 'output window, operand 0, single buffered']
    %17 = vsyncpa [#allocation3], 0
    %18 = vsyncpa [#allocation6], 0
    %19 = vsyncpa [#allocation9], 0
    %20 = vsyncpa [#allocation12], 0
    %21 = vsyncpa [#allocation15], 0
    %22 = vsyncpa [#allocation4], 0
    // Predicated region
    $region2: #{tpu_custom_call.1} parent=1 // pred_check
      _
    $region3: #{tpu_custom_call.1} parent=1 // pred_check_branch
      %24 = sbr.rel (0) target = $region5
    $region4: #{tpu_custom_call.1} parent=1 // pred_region
      %s26 = ssub.s32 128, 128
      %27 = vsyncadd [#allocation3], %s26
      %s28 = sshll.u32 [#allocation2], 4
      %s29 = int_to_ptr.vmem [resolvable:$true] %s28
      %34 = dma.hbm_to_vmem [thread:$0]  %s0, 128, %s29, [#allocation3], 64, 64, 4
    $region5: #{tpu_custom_call.1} parent=1 // pred_fallthru
      _
    // Predicated region
    $region6: #{tpu_custom_call.1} parent=1 // pred_check
      _
    $region7: #{tpu_custom_call.1} parent=1 // pred_check_branch
      %36 = sbr.rel (0) target = $region9
    $region8: #{tpu_custom_call.1} parent=1 // pred_region
      %s38 = ssub.s32 1280, 1280
      %39 = vsyncadd [#allocation6], %s38
      %s40 = sshll.u32 [#allocation5], 4
      %s41 = int_to_ptr.vmem [resolvable:$true] %s40
      %46 = dma.hbm_to_vmem [thread:$0]  %s1, 1280, %s41, [#allocation6], 128, 128, 8
    $region9: #{tpu_custom_call.1} parent=1 // pred_fallthru
      _
    // Predicated region
    $region10: #{tpu_custom_call.1} parent=1 // pred_check
      _
    $region11: #{tpu_custom_call.1} parent=1 // pred_check_branch
      %48 = sbr.rel (0) target = $region13
    $region12: #{tpu_custom_call.1} parent=1 // pred_region
      %s50 = ssub.s32 640, 640
      %51 = vsyncadd [#allocation6], %s50
      %s52 = sshll.u32 [#allocation7], 4
      %s53 = int_to_ptr.vmem [resolvable:$true] %s52
      %58 = dma.hbm_to_vmem [thread:$0]  %s2, 640, %s53, [#allocation6], 64, 64, 4
    $region13: #{tpu_custom_call.1} parent=1 // pred_fallthru
      _
    // Predicated region
    $region14: #{tpu_custom_call.1} parent=1 // pred_check
      _
    $region15: #{tpu_custom_call.1} parent=1 // pred_check_branch
      %60 = sbr.rel (0) target = $region17
    $region16: #{tpu_custom_call.1} parent=1 // pred_region
      %s62 = ssub.s32 512, 512
      %63 = vsyncadd [#allocation9], %s62
      %s64 = sshll.u32 [#allocation8], 4
      %s65 = int_to_ptr.vmem [resolvable:$true] %s64
      %70 = dma.hbm_to_vmem [thread:$0]  %s3, 512, %s65, [#allocation9], 256, 256, 16
    $region17: #{tpu_custom_call.1} parent=1 // pred_fallthru
      _
    // Predicated region
    $region18: #{tpu_custom_call.1} parent=1 // pred_check
      _
    $region19: #{tpu_custom_call.1} parent=1 // pred_check_branch
      %72 = sbr.rel (0) target = $region21
    $region20: #{tpu_custom_call.1} parent=1 // pred_region
      %s74 = ssub.s32 4096, 4096
      %75 = vsyncadd [#allocation9], %s74
      %s76 = sshll.u32 [#allocation10], 4
      %s77 = int_to_ptr.vmem [resolvable:$true] %s76
      %82 = dma.hbm_to_vmem [thread:$0]  %s4, 4096, %s77, [#allocation9], 128, 128, 8
    $region21: #{tpu_custom_call.1} parent=1 // pred_fallthru
      _
    // Predicated region
    $region22: #{tpu_custom_call.1} parent=1 // pred_check
      _
    $region23: #{tpu_custom_call.1} parent=1 // pred_check_branch
      %84 = sbr.rel (0) target = $region25
    $region24: #{tpu_custom_call.1} parent=1 // pred_region
      _
    $region25: #{tpu_custom_call.1} parent=1 // pred_fallthru
      _
    // Predicated region
    $region26: #{tpu_custom_call.1} parent=1 // pred_check
      _
    $region27: #{tpu_custom_call.1} parent=1 // pred_check_branch
      %86 = sbr.rel (0) target = $region29
    $region28: #{tpu_custom_call.1} parent=1 // pred_region
      %s88 = ssub.s32 4096, 4096
      %89 = vsyncadd [#allocation12], %s88
      %s90 = sshll.u32 [#allocation11], 4
      %s91 = int_to_ptr.vmem [resolvable:$true] %s90
      %96 = dma.hbm_to_vmem [thread:$0]  %s6, 4096, %s91, [#allocation12], 128, 128, 8
    $region29: #{tpu_custom_call.1} parent=1 // pred_fallthru
      _
    // Predicated region
    $region30: #{tpu_custom_call.1} parent=1 // pred_check
      _
    $region31: #{tpu_custom_call.1} parent=1 // pred_check_branch
      %98 = sbr.rel (0) target = $region33
    $region32: #{tpu_custom_call.1} parent=1 // pred_region
      _
    $region33: #{tpu_custom_call.1} parent=1 // pred_fallthru
      _
    // Predicated region
    $region34: #{tpu_custom_call.1} parent=1 // pred_check
      _
    $region35: #{tpu_custom_call.1} parent=1 // pred_check_branch
      %100 = sbr.rel (0) target = $region37
    $region36: #{tpu_custom_call.1} parent=1 // pred_region
      %s102 = ssub.s32 4096, 4096
      %103 = vsyncadd [#allocation12], %s102
      %s104 = sshll.u32 [#allocation13], 4
      %s105 = int_to_ptr.vmem [resolvable:$true] %s104
      %110 = dma.hbm_to_vmem [thread:$0]  %s8, 4096, %s105, [#allocation12], 128, 128, 8
    $region37: #{tpu_custom_call.1} parent=1 // pred_fallthru
      _
    // Predicated region
    $region38: #{tpu_custom_call.1} parent=1 // pred_check
      _
    $region39: #{tpu_custom_call.1} parent=1 // pred_check_branch
      %112 = sbr.rel (0) target = $region41
    $region40: #{tpu_custom_call.1} parent=1 // pred_region
      _
    $region41: #{tpu_custom_call.1} parent=1 // pred_fallthru
      _
    // Predicated region
    $region42: #{tpu_custom_call.1} parent=1 // pred_check
      _
    $region43: #{tpu_custom_call.1} parent=1 // pred_check_branch
      %114 = sbr.rel (0) target = $region45
    $region44: #{tpu_custom_call.1} parent=1 // pred_region
      %s116 = ssub.s32 2048, 2048
      %117 = vsyncadd [#allocation15], %s116
      %s118 = sshll.u32 [#allocation14], 4
      %s119 = int_to_ptr.vmem [resolvable:$true] %s118
      %124 = dma.hbm_to_vmem [thread:$0]  %s10, 2048, %s119, [#allocation15], 64, 64, 4
    $region45: #{tpu_custom_call.1} parent=1 // pred_fallthru
      _
    // Predicated region
    $region46: #{tpu_custom_call.1} parent=1 // pred_check
      _
    $region47: #{tpu_custom_call.1} parent=1 // pred_check_branch
      %126 = sbr.rel (0) target = $region49
    $region48: #{tpu_custom_call.1} parent=1 // pred_region
      _
    $region49: #{tpu_custom_call.1} parent=1 // pred_fallthru
      _
    // Predicated region
    $region50: #{tpu_custom_call.1} parent=1 // pred_check
      _
    $region51: #{tpu_custom_call.1} parent=1 // pred_check_branch
      %128 = sbr.rel (0) target = $region53
    $region52: #{tpu_custom_call.1} parent=1 // pred_region
      %129 = dma.done [#allocation3], 128
    $region53: #{tpu_custom_call.1} parent=1 // pred_fallthru
      _
    // Predicated region
    $region54: #{tpu_custom_call.1} parent=1 // pred_check
      _
    $region55: #{tpu_custom_call.1} parent=1 // pred_check_branch
      %131 = sbr.rel (0) target = $region57
    $region56: #{tpu_custom_call.1} parent=1 // pred_region
      %132 = dma.done [#allocation6], 1280
    $region57: #{tpu_custom_call.1} parent=1 // pred_fallthru
      _
    // Predicated region
    $region58: #{tpu_custom_call.1} parent=1 // pred_check
      _
    $region59: #{tpu_custom_call.1} parent=1 // pred_check_branch
      %134 = sbr.rel (0) target = $region61
    $region60: #{tpu_custom_call.1} parent=1 // pred_region
      %135 = dma.done [#allocation6], 640
    $region61: #{tpu_custom_call.1} parent=1 // pred_fallthru
      _
    // Predicated region
    $region62: #{tpu_custom_call.1} parent=1 // pred_check
      _
    $region63: #{tpu_custom_call.1} parent=1 // pred_check_branch
      %137 = sbr.rel (0) target = $region65
    $region64: #{tpu_custom_call.1} parent=1 // pred_region
      %138 = dma.done [#allocation9], 512
    $region65: #{tpu_custom_call.1} parent=1 // pred_fallthru
      _
    // Predicated region
    $region66: #{tpu_custom_call.1} parent=1 // pred_check
      _
    $region67: #{tpu_custom_call.1} parent=1 // pred_check_branch
      %140 = sbr.rel (0) target = $region69
    $region68: #{tpu_custom_call.1} parent=1 // pred_region
      %141 = dma.done [#allocation9], 4096
    $region69: #{tpu_custom_call.1} parent=1 // pred_fallthru
      _
    // Predicated region
    $region70: #{tpu_custom_call.1} parent=1 // pred_check
      _
    $region71: #{tpu_custom_call.1} parent=1 // pred_check_branch
      %143 = sbr.rel (0) target = $region73
    $region72: #{tpu_custom_call.1} parent=1 // pred_region
      %144 = dma.done [#allocation12], 4096
    $region73: #{tpu_custom_call.1} parent=1 // pred_fallthru
      _
    // Predicated region
    $region74: #{tpu_custom_call.1} parent=1 // pred_check
      _
    $region75: #{tpu_custom_call.1} parent=1 // pred_check_branch
      %146 = sbr.rel (0) target = $region77
    $region76: #{tpu_custom_call.1} parent=1 // pred_region
      %147 = dma.done [#allocation12], 4096
    $region77: #{tpu_custom_call.1} parent=1 // pred_fallthru
      _
    // Predicated region
    $region78: #{tpu_custom_call.1} parent=1 // pred_check
      _
    $region79: #{tpu_custom_call.1} parent=1 // pred_check_branch
      %149 = sbr.rel (0) target = $region81
    $region80: #{tpu_custom_call.1} parent=1 // pred_region
      %150 = dma.done [#allocation15], 2048
    $region81: #{tpu_custom_call.1} parent=1 // pred_fallthru
      _
    %v152 = vld [vmem:[#allocation2] sm:$0xf]
    %v153 = vld [vmem:[#allocation2 + $0x4] sm:$0xf]
    %v154 = vunpack.c.l.bf16 %v152
    %v155 = vunpack.c.l.bf16 %v153
    %v156 = vld [vmem:[#allocation5] sm:$0xff]
    %v157 = vld [vmem:[#allocation5 + $0x8] sm:$0xff]
    %v158 = vmul.f32 %v154, %v156
    %v159 = vmul.f32 %v155, %v157
    %v160 = vpack.c.bf16 %v159, %v158
    %v161 = vld [vmem:[#allocation7] sm:$0xf]
    %v162 = vld [vmem:[#allocation7 + $0x4] sm:$0xf]
    %v165 = vunpack.c.l.b16 %v161
    %v166 = vunpack.c.l.b16 %v162
    %v167 = vpack.c.b16 %v166, %v165
    %vm169 = vcmask 130048
    %v171 = vsel %vm169, %v160, 0
    %173 = vmatprep.subr.bf16.mxu0 0
    %174 = vmatpush1.bf16.msra.mxu0 %v167
    %175 = vmatprep.subr.bf16.mxu0 0
    %176 = vmatpush1.bf16.msra.mxu0 0
    %177 = vmatprep.subr.bf16.mxu0 0
    %178 = vmatpush1.bf16.msra.mxu0 0
    %179 = vmatprep.subr.bf16.mxu0 0
    %180 = vmatpush1.bf16.msra.mxu0 0
    %181 = vmatprep.subr.bf16.mxu0 0
    %182 = vmatpush1.bf16.msra.mxu0 0
    %183 = vmatprep.subr.bf16.mxu0 0
    %184 = vmatpush1.bf16.msra.mxu0 0
    %185 = vmatprep.subr.bf16.mxu0 0
    %186 = vmatpush1.bf16.msra.mxu0 0
    %187 = vmatprep.subr.bf16.mxu0 0
    %188 = vmatpush1.bf16.msra.mxu0 0
    %189 = vmatprep.subr.bf16.mxu0 0
    %190 = vmatpush1.bf16.msra.mxu0 0
    %191 = vmatprep.subr.bf16.mxu0 0
    %192 = vmatpush1.bf16.msra.mxu0 0
    %193 = vmatprep.subr.bf16.mxu0 0
    %194 = vmatpush1.bf16.msra.mxu0 0
    %195 = vmatprep.subr.bf16.mxu0 0
    %196 = vmatpush1.bf16.msra.mxu0 0
    %197 = vmatprep.subr.bf16.mxu0 0
    %198 = vmatpush1.bf16.msra.mxu0 0
    %199 = vmatprep.subr.bf16.mxu0 0
    %200 = vmatpush1.bf16.msra.mxu0 0
    %201 = vmatprep.subr.bf16.mxu0 0
    %202 = vmatpush1.bf16.msra.mxu0 0
    %203 = vmatprep.subr.bf16.mxu0 0
    %204 = vmatpush1.bf16.msra.mxu0 0
    %205 = vmatprep.mubr.bf16.mxu0 0
    %206 = vmatmul.mubr.bf16.gmra.mrb[0].mxu0 %v171
    %v207 = vpop.f32.mrb[0].mxu0
    %v208 = vadd.f32 0.0, %v207
    %v209 = vpop.f32.mrb[0].mxu0
    %v210 = vpop.f32.mrb[0].mxu0
    %v211 = vadd.f32 0.0, %v210
    %v212 = vpop.f32.mrb[0].mxu0
    %213 = vdwg.mxu0
    %s214 = scalar_lea.vmem [#allocation5], 16
    %v215 = vld [vmem:[%s214] sm:$0xff]
    %v216 = vld [vmem:[%s214 + $0x8] sm:$0xff]
    %v217 = vmul.f32 %v154, %v215
    %v218 = vmul.f32 %v155, %v216
    %v219 = vpack.c.bf16 %v218, %v217
    %s220 = scalar_lea.vmem [#allocation7], 8
    %v221 = vld [vmem:[%s220] sm:$0xf]
    %v222 = vld [vmem:[%s220 + $0x4] sm:$0xf]
    %v225 = vunpack.c.l.b16 %v221
    %v226 = vunpack.c.l.b16 %v222
    %v227 = vpack.c.b16 %v226, %v225
    %v230 = vsel %vm169, %v219, 0
    %232 = vmatprep.subr.bf16.mxu0 0
    %233 = vmatpush1.bf16.msra.mxu0 %v227
    %234 = vmatprep.subr.bf16.mxu0 0
    %235 = vmatpush1.bf16.msra.mxu0 0
    %236 = vmatprep.subr.bf16.mxu0 0
    %237 = vmatpush1.bf16.msra.mxu0 0
    %238 = vmatprep.subr.bf16.mxu0 0
    %239 = vmatpush1.bf16.msra.mxu0 0
    %240 = vmatprep.subr.bf16.mxu0 0
    %241 = vmatpush1.bf16.msra.mxu0 0
    %242 = vmatprep.subr.bf16.mxu0 0
    %243 = vmatpush1.bf16.msra.mxu0 0
    %244 = vmatprep.subr.bf16.mxu0 0
    %245 = vmatpush1.bf16.msra.mxu0 0
    %246 = vmatprep.subr.bf16.mxu0 0
    %247 = vmatpush1.bf16.msra.mxu0 0
    %248 = vmatprep.subr.bf16.mxu0 0
    %249 = vmatpush1.bf16.msra.mxu0 0
    %250 = vmatprep.subr.bf16.mxu0 0
    %251 = vmatpush1.bf16.msra.mxu0 0
    %252 = vmatprep.subr.bf16.mxu0 0
    %253 = vmatpush1.bf16.msra.mxu0 0
    %254 = vmatprep.subr.bf16.mxu0 0
    %255 = vmatpush1.bf16.msra.mxu0 0
    %256 = vmatprep.subr.bf16.mxu0 0
    %257 = vmatpush1.bf16.msra.mxu0 0
    %258 = vmatprep.subr.bf16.mxu0 0
    %259 = vmatpush1.bf16.msra.mxu0 0
    %260 = vmatprep.subr.bf16.mxu0 0
    %261 = vmatpush1.bf16.msra.mxu0 0
    %262 = vmatprep.subr.bf16.mxu0 0
    %263 = vmatpush1.bf16.msra.mxu0 0
    %264 = vmatprep.mubr.bf16.mxu0 0
    %265 = vmatmul.mubr.bf16.gmra.mrb[0].mxu0 %v230
    %v266 = vpop.f32.mrb[0].mxu0
    %v267 = vadd.f32 0.0, %v266
    %v268 = vpop.f32.mrb[0].mxu0
    %v269 = vpop.f32.mrb[0].mxu0
    %v270 = vadd.f32 0.0, %v269
    %v271 = vpop.f32.mrb[0].mxu0
    %272 = vdwg.mxu0
    %s273 = scalar_lea.vmem [#allocation5], 32
    %v274 = vld [vmem:[%s273] sm:$0xff]
    %v275 = vld [vmem:[%s273 + $0x8] sm:$0xff]
    %v276 = vmul.f32 %v154, %v274
    %v277 = vmul.f32 %v155, %v275
    %v278 = vpack.c.bf16 %v277, %v276
    %s279 = scalar_lea.vmem [#allocation7], 16
    %v280 = vld [vmem:[%s279] sm:$0xf]
    %v281 = vld [vmem:[%s279 + $0x4] sm:$0xf]
    %v284 = vunpack.c.l.b16 %v280
    %v285 = vunpack.c.l.b16 %v281
    %v286 = vpack.c.b16 %v285, %v284
    %v289 = vsel %vm169, %v278, 0
    %291 = vmatprep.subr.bf16.mxu0 0
    %292 = vmatpush1.bf16.msra.mxu0 %v286
    %293 = vmatprep.subr.bf16.mxu0 0
    %294 = vmatpush1.bf16.msra.mxu0 0
    %295 = vmatprep.subr.bf16.mxu0 0
    %296 = vmatpush1.bf16.msra.mxu0 0
    %297 = vmatprep.subr.bf16.mxu0 0
    %298 = vmatpush1.bf16.msra.mxu0 0
    %299 = vmatprep.subr.bf16.mxu0 0
    %300 = vmatpush1.bf16.msra.mxu0 0
    %301 = vmatprep.subr.bf16.mxu0 0
    %302 = vmatpush1.bf16.msra.mxu0 0
    %303 = vmatprep.subr.bf16.mxu0 0
    %304 = vmatpush1.bf16.msra.mxu0 0
    %305 = vmatprep.subr.bf16.mxu0 0
    %306 = vmatpush1.bf16.msra.mxu0 0
    %307 = vmatprep.subr.bf16.mxu0 0
    %308 = vmatpush1.bf16.msra.mxu0 0
    %309 = vmatprep.subr.bf16.mxu0 0
    %310 = vmatpush1.bf16.msra.mxu0 0
    %311 = vmatprep.subr.bf16.mxu0 0
    %312 = vmatpush1.bf16.msra.mxu0 0
    %313 = vmatprep.subr.bf16.mxu0 0
    %314 = vmatpush1.bf16.msra.mxu0 0
    %315 = vmatprep.subr.bf16.mxu0 0
    %316 = vmatpush1.bf16.msra.mxu0 0
    %317 = vmatprep.subr.bf16.mxu0 0
    %318 = vmatpush1.bf16.msra.mxu0 0
    %319 = vmatprep.subr.bf16.mxu0 0
    %320 = vmatpush1.bf16.msra.mxu0 0
    %321 = vmatprep.subr.bf16.mxu0 0
    %322 = vmatpush1.bf16.msra.mxu0 0
    %323 = vmatprep.mubr.bf16.mxu0 0
    %324 = vmatmul.mubr.bf16.gmra.mrb[0].mxu0 %v289
    %v325 = vpop.f32.mrb[0].mxu0
    %v326 = vadd.f32 0.0, %v325
    %v327 = vpop.f32.mrb[0].mxu0
    %v328 = vpop.f32.mrb[0].mxu0
    %v329 = vadd.f32 0.0, %v328
    %v330 = vpop.f32.mrb[0].mxu0
    %331 = vdwg.mxu0
    %s332 = scalar_lea.vmem [#allocation5], 48
    %v333 = vld [vmem:[%s332] sm:$0xff]
    %v334 = vld [vmem:[%s332 + $0x8] sm:$0xff]
    %v335 = vmul.f32 %v154, %v333
    %v336 = vmul.f32 %v155, %v334
    %v337 = vpack.c.bf16 %v336, %v335
    %s338 = scalar_lea.vmem [#allocation7], 24
    %v339 = vld [vmem:[%s338] sm:$0xf]
    %v340 = vld [vmem:[%s338 + $0x4] sm:$0xf]
    %v343 = vunpack.c.l.b16 %v339
    %v344 = vunpack.c.l.b16 %v340
    %v345 = vpack.c.b16 %v344, %v343
    %v348 = vsel %vm169, %v337, 0
    %350 = vmatprep.subr.bf16.mxu0 0
    %351 = vmatpush1.bf16.msra.mxu0 %v345
    %352 = vmatprep.subr.bf16.mxu0 0
    %353 = vmatpush1.bf16.msra.mxu0 0
    %354 = vmatprep.subr.bf16.mxu0 0
    %355 = vmatpush1.bf16.msra.mxu0 0
    %356 = vmatprep.subr.bf16.mxu0 0
    %357 = vmatpush1.bf16.msra.mxu0 0
    %358 = vmatprep.subr.bf16.mxu0 0
    %359 = vmatpush1.bf16.msra.mxu0 0
    %360 = vmatprep.subr.bf16.mxu0 0
    %361 = vmatpush1.bf16.msra.mxu0 0
    %362 = vmatprep.subr.bf16.mxu0 0
    %363 = vmatpush1.bf16.msra.mxu0 0
    %364 = vmatprep.subr.bf16.mxu0 0
    %365 = vmatpush1.bf16.msra.mxu0 0
    %366 = vmatprep.subr.bf16.mxu0 0
    %367 = vmatpush1.bf16.msra.mxu0 0
    %368 = vmatprep.subr.bf16.mxu0 0
    %369 = vmatpush1.bf16.msra.mxu0 0
    %370 = vmatprep.subr.bf16.mxu0 0
    %371 = vmatpush1.bf16.msra.mxu0 0
    %372 = vmatprep.subr.bf16.mxu0 0
    %373 = vmatpush1.bf16.msra.mxu0 0
    %374 = vmatprep.subr.bf16.mxu0 0
    %375 = vmatpush1.bf16.msra.mxu0 0
    %376 = vmatprep.subr.bf16.mxu0 0
    %377 = vmatpush1.bf16.msra.mxu0 0
    %378 = vmatprep.subr.bf16.mxu0 0
    %379 = vmatpush1.bf16.msra.mxu0 0
    %380 = vmatprep.subr.bf16.mxu0 0
    %381 = vmatpush1.bf16.msra.mxu0 0
    %382 = vmatprep.mubr.bf16.mxu0 0
    %383 = vmatmul.mubr.bf16.gmra.mrb[0].mxu0 %v348
    %v384 = vpop.f32.mrb[0].mxu0
    %v385 = vadd.f32 0.0, %v384
    %v386 = vpop.f32.mrb[0].mxu0
    %v387 = vpop.f32.mrb[0].mxu0
    %v388 = vadd.f32 0.0, %v387
    %v389 = vpop.f32.mrb[0].mxu0
    %390 = vdwg.mxu0
    %s391 = scalar_lea.vmem [#allocation5], 64
    %v392 = vld [vmem:[%s391] sm:$0xff]
    %v393 = vld [vmem:[%s391 + $0x8] sm:$0xff]
    %v394 = vmul.f32 %v154, %v392
    %v395 = vmul.f32 %v155, %v393
    %v396 = vpack.c.bf16 %v395, %v394
    %s397 = scalar_lea.vmem [#allocation7], 32
    %v398 = vld [vmem:[%s397] sm:$0xf]
    %v399 = vld [vmem:[%s397 + $0x4] sm:$0xf]
    %v402 = vunpack.c.l.b16 %v398
    %v403 = vunpack.c.l.b16 %v399
    %v404 = vpack.c.b16 %v403, %v402
    %v407 = vsel %vm169, %v396, 0
    %409 = vmatprep.subr.bf16.mxu0 0
    %410 = vmatpush1.bf16.msra.mxu0 %v404
    %411 = vmatprep.subr.bf16.mxu0 0
    %412 = vmatpush1.bf16.msra.mxu0 0
    %413 = vmatprep.subr.bf16.mxu0 0
    %414 = vmatpush1.bf16.msra.mxu0 0
    %415 = vmatprep.subr.bf16.mxu0 0
    %416 = vmatpush1.bf16.msra.mxu0 0
    %417 = vmatprep.subr.bf16.mxu0 0
    %418 = vmatpush1.bf16.msra.mxu0 0
    %419 = vmatprep.subr.bf16.mxu0 0
    %420 = vmatpush1.bf16.msra.mxu0 0
    %421 = vmatprep.subr.bf16.mxu0 0
    %422 = vmatpush1.bf16.msra.mxu0 0
    %423 = vmatprep.subr.bf16.mxu0 0
    %424 = vmatpush1.bf16.msra.mxu0 0
    %425 = vmatprep.subr.bf16.mxu0 0
    %426 = vmatpush1.bf16.msra.mxu0 0
    %427 = vmatprep.subr.bf16.mxu0 0
    %428 = vmatpush1.bf16.msra.mxu0 0
    %429 = vmatprep.subr.bf16.mxu0 0
    %430 = vmatpush1.bf16.msra.mxu0 0
    %431 = vmatprep.subr.bf16.mxu0 0
    %432 = vmatpush1.bf16.msra.mxu0 0
    %433 = vmatprep.subr.bf16.mxu0 0
    %434 = vmatpush1.bf16.msra.mxu0 0
    %435 = vmatprep.subr.bf16.mxu0 0
    %436 = vmatpush1.bf16.msra.mxu0 0
    %437 = vmatprep.subr.bf16.mxu0 0
    %438 = vmatpush1.bf16.msra.mxu0 0
    %439 = vmatprep.subr.bf16.mxu0 0
    %440 = vmatpush1.bf16.msra.mxu0 0
    %441 = vmatprep.mubr.bf16.mxu0 0
    %442 = vmatmul.mubr.bf16.gmra.mrb[0].mxu0 %v407
    %v443 = vpop.f32.mrb[0].mxu0
    %v444 = vadd.f32 0.0, %v443
    %v445 = vpop.f32.mrb[0].mxu0
    %v446 = vpop.f32.mrb[0].mxu0
    %v447 = vadd.f32 0.0, %v446
    %v448 = vpop.f32.mrb[0].mxu0
    %449 = vdwg.mxu0
    %452 = vrot.lane.b32.xlu0 %v267, 32
    %v453 = vpop.permute.xlu0 %452
    %454 = vrot.lane.b32.xlu0 %v270, 32
    %v455 = vpop.permute.xlu0 %454
    %460 = vrot.lane.b32.xlu0 %v326, 64
    %v461 = vpop.permute.xlu0 %460
    %462 = vrot.lane.b32.xlu0 %v329, 64
    %v463 = vpop.permute.xlu0 %462
    %468 = vrot.lane.b32.xlu0 %v385, 96
    %v469 = vpop.permute.xlu0 %468
    %470 = vrot.lane.b32.xlu0 %v388, 96
    %v471 = vpop.permute.xlu0 %470
    %vm474 = vcmask 261120
    %v475 = vsel %vm474, %v208, %v453
    %v476 = vsel %vm474, %v211, %v455
    %vm477 = vcmask 523264
    %v478 = vsel %vm477, %v475, %v461
    %v479 = vsel %vm477, %v476, %v463
    %vm480 = vcmask 785408
    %v481 = vsel %vm480, %v478, %v469
    %v482 = vsel %vm480, %v479, %v471
    %v483 = vsel %vm474, %v444, 0.0
    %v484 = vsel %vm474, %v447, 0.0
    %v485 = vld [vmem:[#allocation8] sm:$0xff]
    %v486 = vld [vmem:[#allocation8 + $0x8] sm:$0xff]
    %v487 = vld [vmem:[#allocation8 + $0x10] sm:$0xff]
    %v488 = vld [vmem:[#allocation8 + $0x18] sm:$0xff]
    %v489 = vadd.f32 %v481, %v485
    %v490 = vadd.f32 %v483, %v486
    %v491 = vadd.f32 %v482, %v487
    %v492 = vadd.f32 %v484, %v488
    %v493 = vpack.c.bf16 %v491, %v489
    %v494 = vpack.c.bf16 %v492, %v490
    %v495 = vld [vmem:[#allocation10] sm:$0xff]
    %v496 = vld [vmem:[#allocation10 + $0x8] sm:$0xff]
    %v497 = vld [vmem:[#allocation10 + $0x10] sm:$0xff]
    %v498 = vld [vmem:[#allocation10 + $0x18] sm:$0xff]
    %v499 = vld [vmem:[#allocation10 + $0x20] sm:$0xff]
    %v500 = vld [vmem:[#allocation10 + $0x28] sm:$0xff]
    %v501 = vld [vmem:[#allocation10 + $0x30] sm:$0xff]
    %v502 = vld [vmem:[#allocation10 + $0x38] sm:$0xff]
    %v503 = vld [vmem:[#allocation10 + $0x40] sm:$0xff]
    %v504 = vld [vmem:[#allocation10 + $0x48] sm:$0xff]
    %v505 = vld [vmem:[#allocation10 + $0x50] sm:$0xff]
    %v506 = vld [vmem:[#allocation10 + $0x58] sm:$0xff]
    %v507 = vld [vmem:[#allocation10 + $0x60] sm:$0xff]
    %v508 = vld [vmem:[#allocation10 + $0x68] sm:$0xff]
    %v509 = vld [vmem:[#allocation10 + $0x70] sm:$0xff]
    %v510 = vld [vmem:[#allocation10 + $0x78] sm:$0xff]
    %v511 = vld [vmem:[#allocation10 + $0x80] sm:$0xff]
    %v512 = vld [vmem:[#allocation10 + $0x88] sm:$0xff]
    %v513 = vld [vmem:[#allocation10 + $0x90] sm:$0xff]
    %v514 = vld [vmem:[#allocation10 + $0x98] sm:$0xff]
    %v515 = vld [vmem:[#allocation10 + $0xa0] sm:$0xff]
    %v516 = vld [vmem:[#allocation10 + $0xa8] sm:$0xff]
    %v517 = vld [vmem:[#allocation10 + $0xb0] sm:$0xff]
    %v518 = vld [vmem:[#allocation10 + $0xb8] sm:$0xff]
    %v519 = vld [vmem:[#allocation10 + $0xc0] sm:$0xff]
    %v520 = vld [vmem:[#allocation10 + $0xc8] sm:$0xff]
    %v521 = vld [vmem:[#allocation10 + $0xd0] sm:$0xff]
    %v522 = vld [vmem:[#allocation10 + $0xd8] sm:$0xff]
    %v523 = vld [vmem:[#allocation10 + $0xe0] sm:$0xff]
    %v524 = vld [vmem:[#allocation10 + $0xe8] sm:$0xff]
    %v525 = vld [vmem:[#allocation10 + $0xf0] sm:$0xff]
    %v526 = vld [vmem:[#allocation10 + $0xf8] sm:$0xff]
    %v527 = vld [vmem:[%s5] sm:$0x3]
    %v529 = vlaneseq
    %v530 = vshrl.u32 %v529, 7
    %v531 = vsub.s32 0, %v530
    %v532 = vrot.slane %v527, %v531
    %v533 = vlaneseq
    %v534 = vshrl.u32 %v533, 7
    %v535 = vsub.s32 1, %v534
    %v536 = vrot.slane %v527, %v535
    %v571 = vunpack.c.l.b16 %v495
    %v572 = vunpack.c.h.b16 %v495
    %v573 = vunpack.c.l.b16 %v496
    %v574 = vunpack.c.h.b16 %v496
    %v575 = vunpack.c.l.b16 %v497
    %v576 = vunpack.c.h.b16 %v497
    %v577 = vunpack.c.l.b16 %v498
    %v578 = vunpack.c.h.b16 %v498
    %v579 = vunpack.c.l.b16 %v499
    %v580 = vunpack.c.h.b16 %v499
    %v581 = vunpack.c.l.b16 %v500
    %v582 = vunpack.c.h.b16 %v500
    %v583 = vunpack.c.l.b16 %v501
    %v584 = vunpack.c.h.b16 %v501
    %v585 = vunpack.c.l.b16 %v502
    %v586 = vunpack.c.h.b16 %v502
    %v587 = vunpack.c.l.b16 %v503
    %v588 = vunpack.c.h.b16 %v503
    %v589 = vunpack.c.l.b16 %v504
    %v590 = vunpack.c.h.b16 %v504
    %v591 = vunpack.c.l.b16 %v505
    %v592 = vunpack.c.h.b16 %v505
    %v593 = vunpack.c.l.b16 %v506
    %v594 = vunpack.c.h.b16 %v506
    %v595 = vunpack.c.l.b16 %v507
    %v596 = vunpack.c.h.b16 %v507
    %v597 = vunpack.c.l.b16 %v508
    %v598 = vunpack.c.h.b16 %v508
    %v599 = vunpack.c.l.b16 %v509
    %v600 = vunpack.c.h.b16 %v509
    %v601 = vunpack.c.l.b16 %v510
    %v602 = vunpack.c.h.b16 %v510
    %v603 = vunpack.c.l.b16 %v511
    %v604 = vunpack.c.h.b16 %v511
    %v605 = vunpack.c.l.b16 %v512
    %v606 = vunpack.c.h.b16 %v512
    %v607 = vunpack.c.l.b16 %v513
    %v608 = vunpack.c.h.b16 %v513
    %v609 = vunpack.c.l.b16 %v514
    %v610 = vunpack.c.h.b16 %v514
    %v611 = vunpack.c.l.b16 %v515
    %v612 = vunpack.c.h.b16 %v515
    %v613 = vunpack.c.l.b16 %v516
    %v614 = vunpack.c.h.b16 %v516
    %v615 = vunpack.c.l.b16 %v517
    %v616 = vunpack.c.h.b16 %v517
    %v617 = vunpack.c.l.b16 %v518
    %v618 = vunpack.c.h.b16 %v518
    %v619 = vunpack.c.l.b16 %v519
    %v620 = vunpack.c.h.b16 %v519
    %v621 = vunpack.c.l.b16 %v520
    %v622 = vunpack.c.h.b16 %v520
    %v623 = vunpack.c.l.b16 %v521
    %v624 = vunpack.c.h.b16 %v521
    %v625 = vunpack.c.l.b16 %v522
    %v626 = vunpack.c.h.b16 %v522
    %v627 = vunpack.c.l.b16 %v523
    %v628 = vunpack.c.h.b16 %v523
    %v629 = vunpack.c.l.b16 %v524
    %v630 = vunpack.c.h.b16 %v524
    %v631 = vunpack.c.l.b16 %v525
    %v632 = vunpack.c.h.b16 %v525
    %v633 = vunpack.c.l.b16 %v526
    %v634 = vunpack.c.h.b16 %v526
    %v635 = vpack.c.b16 %v573, %v571
    %v636 = vpack.c.b16 %v574, %v572
    %v637 = vpack.c.b16 %v577, %v575
    %v638 = vpack.c.b16 %v578, %v576
    %v639 = vpack.c.b16 %v581, %v579
    %v640 = vpack.c.b16 %v582, %v580
    %v641 = vpack.c.b16 %v585, %v583
    %v642 = vpack.c.b16 %v586, %v584
    %v643 = vpack.c.b16 %v589, %v587
    %v644 = vpack.c.b16 %v590, %v588
    %v645 = vpack.c.b16 %v593, %v591
    %v646 = vpack.c.b16 %v594, %v592
    %v647 = vpack.c.b16 %v597, %v595
    %v648 = vpack.c.b16 %v598, %v596
    %v649 = vpack.c.b16 %v601, %v599
    %v650 = vpack.c.b16 %v602, %v600
    %v651 = vpack.c.b16 %v605, %v603
    %v652 = vpack.c.b16 %v606, %v604
    %v653 = vpack.c.b16 %v609, %v607
    %v654 = vpack.c.b16 %v610, %v608
    %v655 = vpack.c.b16 %v613, %v611
    %v656 = vpack.c.b16 %v614, %v612
    %v657 = vpack.c.b16 %v617, %v615
    %v658 = vpack.c.b16 %v618, %v616
    %v659 = vpack.c.b16 %v621, %v619
    %v660 = vpack.c.b16 %v622, %v620
    %v661 = vpack.c.b16 %v625, %v623
    %v662 = vpack.c.b16 %v626, %v624
    %v663 = vpack.c.b16 %v629, %v627
    %v664 = vpack.c.b16 %v630, %v628
    %v665 = vpack.c.b16 %v633, %v631
    %v666 = vpack.c.b16 %v634, %v632
    %699 = vmatprep.subr.bf16.mxu0 %v636
    %700 = vmatpush1.bf16.msra.mxu0 %v635
    %701 = vmatprep.subr.bf16.mxu0 %v638
    %702 = vmatpush1.bf16.msra.mxu0 %v637
    %703 = vmatprep.subr.bf16.mxu0 %v640
    %704 = vmatpush1.bf16.msra.mxu0 %v639
    %705 = vmatprep.subr.bf16.mxu0 %v642
    %706 = vmatpush1.bf16.msra.mxu0 %v641
    %707 = vmatprep.subr.bf16.mxu0 %v644
    %708 = vmatpush1.bf16.msra.mxu0 %v643
    %709 = vmatprep.subr.bf16.mxu0 %v646
    %710 = vmatpush1.bf16.msra.mxu0 %v645
    %711 = vmatprep.subr.bf16.mxu0 %v648
    %712 = vmatpush1.bf16.msra.mxu0 %v647
    %713 = vmatprep.subr.bf16.mxu0 %v650
    %714 = vmatpush1.bf16.msra.mxu0 %v649
    %715 = vmatprep.subr.bf16.mxu0 %v652
    %716 = vmatpush1.bf16.msra.mxu0 %v651
    %717 = vmatprep.subr.bf16.mxu0 %v654
    %718 = vmatpush1.bf16.msra.mxu0 %v653
    %719 = vmatprep.subr.bf16.mxu0 %v656
    %720 = vmatpush1.bf16.msra.mxu0 %v655
    %721 = vmatprep.subr.bf16.mxu0 %v658
    %722 = vmatpush1.bf16.msra.mxu0 %v657
    %723 = vmatprep.subr.bf16.mxu0 %v660
    %724 = vmatpush1.bf16.msra.mxu0 %v659
    %725 = vmatprep.subr.bf16.mxu0 %v662
    %726 = vmatpush1.bf16.msra.mxu0 %v661
    %727 = vmatprep.subr.bf16.mxu0 %v664
    %728 = vmatpush1.bf16.msra.mxu0 %v663
    %729 = vmatprep.subr.bf16.mxu0 %v666
    %730 = vmatpush1.bf16.msra.mxu0 %v665
    %731 = vmatprep.mubr.bf16.mxu0 %v494
    %732 = vmatmul.mubr.bf16.gmra.mrb[0].mxu0 %v493
    %v733 = vpop.f32.mrb[0].mxu0
    %v734 = vadd.f32 %v532, %v733
    %v735 = vpop.f32.mrb[0].mxu0
    %v736 = vadd.f32 %v536, %v735
    %v737 = vpop.f32.mrb[0].mxu0
    %v738 = vadd.f32 %v532, %v737
    %v739 = vpop.f32.mrb[0].mxu0
    %v740 = vadd.f32 %v536, %v739
    %741 = vdwg.mxu0
    %v742 = vmax.f32 %v734, 0.0
    %v743 = vmax.f32 %v736, 0.0
    %v744 = vmax.f32 %v738, 0.0
    %v745 = vmax.f32 %v740, 0.0
    %v746 = vadd.f32 %v742, %v489
    %v747 = vadd.f32 %v743, %v490
    %v748 = vadd.f32 %v744, %v491
    %v749 = vadd.f32 %v745, %v492
    %v750 = vpack.c.bf16 %v748, %v746
    %v751 = vpack.c.bf16 %v749, %v747
    %v752 = vld [vmem:[#allocation11] sm:$0xff]
    %v753 = vld [vmem:[#allocation11 + $0x8] sm:$0xff]
    %v754 = vld [vmem:[#allocation11 + $0x10] sm:$0xff]
    %v755 = vld [vmem:[#allocation11 + $0x18] sm:$0xff]
    %v756 = vld [vmem:[#allocation11 + $0x20] sm:$0xff]
    %v757 = vld [vmem:[#allocation11 + $0x28] sm:$0xff]
    %v758 = vld [vmem:[#allocation11 + $0x30] sm:$0xff]
    %v759 = vld [vmem:[#allocation11 + $0x38] sm:$0xff]
    %v760 = vld [vmem:[#allocation11 + $0x40] sm:$0xff]
    %v761 = vld [vmem:[#allocation11 + $0x48] sm:$0xff]
    %v762 = vld [vmem:[#allocation11 + $0x50] sm:$0xff]
    %v763 = vld [vmem:[#allocation11 + $0x58] sm:$0xff]
    %v764 = vld [vmem:[#allocation11 + $0x60] sm:$0xff]
    %v765 = vld [vmem:[#allocation11 + $0x68] sm:$0xff]
    %v766 = vld [vmem:[#allocation11 + $0x70] sm:$0xff]
    %v767 = vld [vmem:[#allocation11 + $0x78] sm:$0xff]
    %v768 = vld [vmem:[#allocation11 + $0x80] sm:$0xff]
    %v769 = vld [vmem:[#allocation11 + $0x88] sm:$0xff]
    %v770 = vld [vmem:[#allocation11 + $0x90] sm:$0xff]
    %v771 = vld [vmem:[#allocation11 + $0x98] sm:$0xff]
    %v772 = vld [vmem:[#allocation11 + $0xa0] sm:$0xff]
    %v773 = vld [vmem:[#allocation11 + $0xa8] sm:$0xff]
    %v774 = vld [vmem:[#allocation11 + $0xb0] sm:$0xff]
    %v775 = vld [vmem:[#allocation11 + $0xb8] sm:$0xff]
    %v776 = vld [vmem:[#allocation11 + $0xc0] sm:$0xff]
    %v777 = vld [vmem:[#allocation11 + $0xc8] sm:$0xff]
    %v778 = vld [vmem:[#allocation11 + $0xd0] sm:$0xff]
    %v779 = vld [vmem:[#allocation11 + $0xd8] sm:$0xff]
    %v780 = vld [vmem:[#allocation11 + $0xe0] sm:$0xff]
    %v781 = vld [vmem:[#allocation11 + $0xe8] sm:$0xff]
    %v782 = vld [vmem:[#allocation11 + $0xf0] sm:$0xff]
    %v783 = vld [vmem:[#allocation11 + $0xf8] sm:$0xff]
    %v784 = vld [vmem:[%s7] sm:$0x3]
    %v786 = vlaneseq
    %v787 = vshrl.u32 %v786, 7
    %v788 = vsub.s32 0, %v787
    %v789 = vrot.slane %v784, %v788
    %v790 = vlaneseq
    %v791 = vshrl.u32 %v790, 7
    %v792 = vsub.s32 1, %v791
    %v793 = vrot.slane %v784, %v792
    %v828 = vunpack.c.l.b16 %v752
    %v829 = vunpack.c.h.b16 %v752
    %v830 = vunpack.c.l.b16 %v753
    %v831 = vunpack.c.h.b16 %v753
    %v832 = vunpack.c.l.b16 %v754
    %v833 = vunpack.c.h.b16 %v754
    %v834 = vunpack.c.l.b16 %v755
    %v835 = vunpack.c.h.b16 %v755
    %v836 = vunpack.c.l.b16 %v756
    %v837 = vunpack.c.h.b16 %v756
    %v838 = vunpack.c.l.b16 %v757
    %v839 = vunpack.c.h.b16 %v757
    %v840 = vunpack.c.l.b16 %v758
    %v841 = vunpack.c.h.b16 %v758
    %v842 = vunpack.c.l.b16 %v759
    %v843 = vunpack.c.h.b16 %v759
    %v844 = vunpack.c.l.b16 %v760
    %v845 = vunpack.c.h.b16 %v760
    %v846 = vunpack.c.l.b16 %v761
    %v847 = vunpack.c.h.b16 %v761
    %v848 = vunpack.c.l.b16 %v762
    %v849 = vunpack.c.h.b16 %v762
    %v850 = vunpack.c.l.b16 %v763
    %v851 = vunpack.c.h.b16 %v763
    %v852 = vunpack.c.l.b16 %v764
    %v853 = vunpack.c.h.b16 %v764
    %v854 = vunpack.c.l.b16 %v765
    %v855 = vunpack.c.h.b16 %v765
    %v856 = vunpack.c.l.b16 %v766
    %v857 = vunpack.c.h.b16 %v766
    %v858 = vunpack.c.l.b16 %v767
    %v859 = vunpack.c.h.b16 %v767
    %v860 = vunpack.c.l.b16 %v768
    %v861 = vunpack.c.h.b16 %v768
    %v862 = vunpack.c.l.b16 %v769
    %v863 = vunpack.c.h.b16 %v769
    %v864 = vunpack.c.l.b16 %v770
    %v865 = vunpack.c.h.b16 %v770
    %v866 = vunpack.c.l.b16 %v771
    %v867 = vunpack.c.h.b16 %v771
    %v868 = vunpack.c.l.b16 %v772
    %v869 = vunpack.c.h.b16 %v772
    %v870 = vunpack.c.l.b16 %v773
    %v871 = vunpack.c.h.b16 %v773
    %v872 = vunpack.c.l.b16 %v774
    %v873 = vunpack.c.h.b16 %v774
    %v874 = vunpack.c.l.b16 %v775
    %v875 = vunpack.c.h.b16 %v775
    %v876 = vunpack.c.l.b16 %v776
    %v877 = vunpack.c.h.b16 %v776
    %v878 = vunpack.c.l.b16 %v777
    %v879 = vunpack.c.h.b16 %v777
    %v880 = vunpack.c.l.b16 %v778
    %v881 = vunpack.c.h.b16 %v778
    %v882 = vunpack.c.l.b16 %v779
    %v883 = vunpack.c.h.b16 %v779
    %v884 = vunpack.c.l.b16 %v780
    %v885 = vunpack.c.h.b16 %v780
    %v886 = vunpack.c.l.b16 %v781
    %v887 = vunpack.c.h.b16 %v781
    %v888 = vunpack.c.l.b16 %v782
    %v889 = vunpack.c.h.b16 %v782
    %v890 = vunpack.c.l.b16 %v783
    %v891 = vunpack.c.h.b16 %v783
    %v892 = vpack.c.b16 %v830, %v828
    %v893 = vpack.c.b16 %v831, %v829
    %v894 = vpack.c.b16 %v834, %v832
    %v895 = vpack.c.b16 %v835, %v833
    %v896 = vpack.c.b16 %v838, %v836
    %v897 = vpack.c.b16 %v839, %v837
    %v898 = vpack.c.b16 %v842, %v840
    %v899 = vpack.c.b16 %v843, %v841
    %v900 = vpack.c.b16 %v846, %v844
    %v901 = vpack.c.b16 %v847, %v845
    %v902 = vpack.c.b16 %v850, %v848
    %v903 = vpack.c.b16 %v851, %v849
    %v904 = vpack.c.b16 %v854, %v852
    %v905 = vpack.c.b16 %v855, %v853
    %v906 = vpack.c.b16 %v858, %v856
    %v907 = vpack.c.b16 %v859, %v857
    %v908 = vpack.c.b16 %v862, %v860
    %v909 = vpack.c.b16 %v863, %v861
    %v910 = vpack.c.b16 %v866, %v864
    %v911 = vpack.c.b16 %v867, %v865
    %v912 = vpack.c.b16 %v870, %v868
    %v913 = vpack.c.b16 %v871, %v869
    %v914 = vpack.c.b16 %v874, %v872
    %v915 = vpack.c.b16 %v875, %v873
    %v916 = vpack.c.b16 %v878, %v876
    %v917 = vpack.c.b16 %v879, %v877
    %v918 = vpack.c.b16 %v882, %v880
    %v919 = vpack.c.b16 %v883, %v881
    %v920 = vpack.c.b16 %v886, %v884
    %v921 = vpack.c.b16 %v887, %v885
    %v922 = vpack.c.b16 %v890, %v888
    %v923 = vpack.c.b16 %v891, %v889
    %956 = vmatprep.subr.bf16.mxu0 %v893
    %957 = vmatpush1.bf16.msra.mxu0 %v892
    %958 = vmatprep.subr.bf16.mxu0 %v895
    %959 = vmatpush1.bf16.msra.mxu0 %v894
    %960 = vmatprep.subr.bf16.mxu0 %v897
    %961 = vmatpush1.bf16.msra.mxu0 %v896
    %962 = vmatprep.subr.bf16.mxu0 %v899
    %963 = vmatpush1.bf16.msra.mxu0 %v898
    %964 = vmatprep.subr.bf16.mxu0 %v901
    %965 = vmatpush1.bf16.msra.mxu0 %v900
    %966 = vmatprep.subr.bf16.mxu0 %v903
    %967 = vmatpush1.bf16.msra.mxu0 %v902
    %968 = vmatprep.subr.bf16.mxu0 %v905
    %969 = vmatpush1.bf16.msra.mxu0 %v904
    %970 = vmatprep.subr.bf16.mxu0 %v907
    %971 = vmatpush1.bf16.msra.mxu0 %v906
    %972 = vmatprep.subr.bf16.mxu0 %v909
    %973 = vmatpush1.bf16.msra.mxu0 %v908
    %974 = vmatprep.subr.bf16.mxu0 %v911
    %975 = vmatpush1.bf16.msra.mxu0 %v910
    %976 = vmatprep.subr.bf16.mxu0 %v913
    %977 = vmatpush1.bf16.msra.mxu0 %v912
    %978 = vmatprep.subr.bf16.mxu0 %v915
    %979 = vmatpush1.bf16.msra.mxu0 %v914
    %980 = vmatprep.subr.bf16.mxu0 %v917
    %981 = vmatpush1.bf16.msra.mxu0 %v916
    %982 = vmatprep.subr.bf16.mxu0 %v919
    %983 = vmatpush1.bf16.msra.mxu0 %v918
    %984 = vmatprep.subr.bf16.mxu0 %v921
    %985 = vmatpush1.bf16.msra.mxu0 %v920
    %986 = vmatprep.subr.bf16.mxu0 %v923
    %987 = vmatpush1.bf16.msra.mxu0 %v922
    %988 = vmatprep.mubr.bf16.mxu0 %v751
    %989 = vmatmul.mubr.bf16.gmra.mrb[0].mxu0 %v750
    %v990 = vpop.f32.mrb[0].mxu0
    %v991 = vadd.f32 %v789, %v990
    %v992 = vpop.f32.mrb[0].mxu0
    %v993 = vadd.f32 %v793, %v992
    %v994 = vpop.f32.mrb[0].mxu0
    %v995 = vadd.f32 %v789, %v994
    %v996 = vpop.f32.mrb[0].mxu0
    %v997 = vadd.f32 %v793, %v996
    %998 = vdwg.mxu0
    %v999 = vmax.f32 %v991, 0.0
    %v1000 = vmax.f32 %v993, 0.0
    %v1001 = vmax.f32 %v995, 0.0
    %v1002 = vmax.f32 %v997, 0.0
    %v1003 = vadd.f32 %v999, %v746
    %v1004 = vadd.f32 %v1000, %v747
    %v1005 = vadd.f32 %v1001, %v748
    %v1006 = vadd.f32 %v1002, %v749
    %v1007 = vpack.c.bf16 %v1005, %v1003
    %v1008 = vpack.c.bf16 %v1006, %v1004
    %v1009 = vld [vmem:[#allocation13] sm:$0xff]
    %v1010 = vld [vmem:[#allocation13 + $0x8] sm:$0xff]
    %v1011 = vld [vmem:[#allocation13 + $0x10] sm:$0xff]
    %v1012 = vld [vmem:[#allocation13 + $0x18] sm:$0xff]
    %v1013 = vld [vmem:[#allocation13 + $0x20] sm:$0xff]
    %v1014 = vld [vmem:[#allocation13 + $0x28] sm:$0xff]
    %v1015 = vld [vmem:[#allocation13 + $0x30] sm:$0xff]
    %v1016 = vld [vmem:[#allocation13 + $0x38] sm:$0xff]
    %v1017 = vld [vmem:[#allocation13 + $0x40] sm:$0xff]
    %v1018 = vld [vmem:[#allocation13 + $0x48] sm:$0xff]
    %v1019 = vld [vmem:[#allocation13 + $0x50] sm:$0xff]
    %v1020 = vld [vmem:[#allocation13 + $0x58] sm:$0xff]
    %v1021 = vld [vmem:[#allocation13 + $0x60] sm:$0xff]
    %v1022 = vld [vmem:[#allocation13 + $0x68] sm:$0xff]
    %v1023 = vld [vmem:[#allocation13 + $0x70] sm:$0xff]
    %v1024 = vld [vmem:[#allocation13 + $0x78] sm:$0xff]
    %v1025 = vld [vmem:[#allocation13 + $0x80] sm:$0xff]
    %v1026 = vld [vmem:[#allocation13 + $0x88] sm:$0xff]
    %v1027 = vld [vmem:[#allocation13 + $0x90] sm:$0xff]
    %v1028 = vld [vmem:[#allocation13 + $0x98] sm:$0xff]
    %v1029 = vld [vmem:[#allocation13 + $0xa0] sm:$0xff]
    %v1030 = vld [vmem:[#allocation13 + $0xa8] sm:$0xff]
    %v1031 = vld [vmem:[#allocation13 + $0xb0] sm:$0xff]
    %v1032 = vld [vmem:[#allocation13 + $0xb8] sm:$0xff]
    %v1033 = vld [vmem:[#allocation13 + $0xc0] sm:$0xff]
    %v1034 = vld [vmem:[#allocation13 + $0xc8] sm:$0xff]
    %v1035 = vld [vmem:[#allocation13 + $0xd0] sm:$0xff]
    %v1036 = vld [vmem:[#allocation13 + $0xd8] sm:$0xff]
    %v1037 = vld [vmem:[#allocation13 + $0xe0] sm:$0xff]
    %v1038 = vld [vmem:[#allocation13 + $0xe8] sm:$0xff]
    %v1039 = vld [vmem:[#allocation13 + $0xf0] sm:$0xff]
    %v1040 = vld [vmem:[#allocation13 + $0xf8] sm:$0xff]
    %v1041 = vld [vmem:[%s9] sm:$0x3]
    %v1043 = vlaneseq
    %v1044 = vshrl.u32 %v1043, 7
    %v1045 = vsub.s32 0, %v1044
    %v1046 = vrot.slane %v1041, %v1045
    %v1047 = vlaneseq
    %v1048 = vshrl.u32 %v1047, 7
    %v1049 = vsub.s32 1, %v1048
    %v1050 = vrot.slane %v1041, %v1049
    %v1085 = vunpack.c.l.b16 %v1009
    %v1086 = vunpack.c.h.b16 %v1009
    %v1087 = vunpack.c.l.b16 %v1010
    %v1088 = vunpack.c.h.b16 %v1010
    %v1089 = vunpack.c.l.b16 %v1011
    %v1090 = vunpack.c.h.b16 %v1011
    %v1091 = vunpack.c.l.b16 %v1012
    %v1092 = vunpack.c.h.b16 %v1012
    %v1093 = vunpack.c.l.b16 %v1013
    %v1094 = vunpack.c.h.b16 %v1013
    %v1095 = vunpack.c.l.b16 %v1014
    %v1096 = vunpack.c.h.b16 %v1014
    %v1097 = vunpack.c.l.b16 %v1015
    %v1098 = vunpack.c.h.b16 %v1015
    %v1099 = vunpack.c.l.b16 %v1016
    %v1100 = vunpack.c.h.b16 %v1016
    %v1101 = vunpack.c.l.b16 %v1017
    %v1102 = vunpack.c.h.b16 %v1017
    %v1103 = vunpack.c.l.b16 %v1018
    %v1104 = vunpack.c.h.b16 %v1018
    %v1105 = vunpack.c.l.b16 %v1019
    %v1106 = vunpack.c.h.b16 %v1019
    %v1107 = vunpack.c.l.b16 %v1020
    %v1108 = vunpack.c.h.b16 %v1020
    %v1109 = vunpack.c.l.b16 %v1021
    %v1110 = vunpack.c.h.b16 %v1021
    %v1111 = vunpack.c.l.b16 %v1022
    %v1112 = vunpack.c.h.b16 %v1022
    %v1113 = vunpack.c.l.b16 %v1023
    %v1114 = vunpack.c.h.b16 %v1023
    %v1115 = vunpack.c.l.b16 %v1024
    %v1116 = vunpack.c.h.b16 %v1024
    %v1117 = vunpack.c.l.b16 %v1025
    %v1118 = vunpack.c.h.b16 %v1025
    %v1119 = vunpack.c.l.b16 %v1026
    %v1120 = vunpack.c.h.b16 %v1026
    %v1121 = vunpack.c.l.b16 %v1027
    %v1122 = vunpack.c.h.b16 %v1027
    %v1123 = vunpack.c.l.b16 %v1028
    %v1124 = vunpack.c.h.b16 %v1028
    %v1125 = vunpack.c.l.b16 %v1029
    %v1126 = vunpack.c.h.b16 %v1029
    %v1127 = vunpack.c.l.b16 %v1030
    %v1128 = vunpack.c.h.b16 %v1030
    %v1129 = vunpack.c.l.b16 %v1031
    %v1130 = vunpack.c.h.b16 %v1031
    %v1131 = vunpack.c.l.b16 %v1032
    %v1132 = vunpack.c.h.b16 %v1032
    %v1133 = vunpack.c.l.b16 %v1033
    %v1134 = vunpack.c.h.b16 %v1033
    %v1135 = vunpack.c.l.b16 %v1034
    %v1136 = vunpack.c.h.b16 %v1034
    %v1137 = vunpack.c.l.b16 %v1035
    %v1138 = vunpack.c.h.b16 %v1035
    %v1139 = vunpack.c.l.b16 %v1036
    %v1140 = vunpack.c.h.b16 %v1036
    %v1141 = vunpack.c.l.b16 %v1037
    %v1142 = vunpack.c.h.b16 %v1037
    %v1143 = vunpack.c.l.b16 %v1038
    %v1144 = vunpack.c.h.b16 %v1038
    %v1145 = vunpack.c.l.b16 %v1039
    %v1146 = vunpack.c.h.b16 %v1039
    %v1147 = vunpack.c.l.b16 %v1040
    %v1148 = vunpack.c.h.b16 %v1040
    %v1149 = vpack.c.b16 %v1087, %v1085
    %v1150 = vpack.c.b16 %v1088, %v1086
    %v1151 = vpack.c.b16 %v1091, %v1089
    %v1152 = vpack.c.b16 %v1092, %v1090
    %v1153 = vpack.c.b16 %v1095, %v1093
    %v1154 = vpack.c.b16 %v1096, %v1094
    %v1155 = vpack.c.b16 %v1099, %v1097
    %v1156 = vpack.c.b16 %v1100, %v1098
    %v1157 = vpack.c.b16 %v1103, %v1101
    %v1158 = vpack.c.b16 %v1104, %v1102
    %v1159 = vpack.c.b16 %v1107, %v1105
    %v1160 = vpack.c.b16 %v1108, %v1106
    %v1161 = vpack.c.b16 %v1111, %v1109
    %v1162 = vpack.c.b16 %v1112, %v1110
    %v1163 = vpack.c.b16 %v1115, %v1113
    %v1164 = vpack.c.b16 %v1116, %v1114
    %v1165 = vpack.c.b16 %v1119, %v1117
    %v1166 = vpack.c.b16 %v1120, %v1118
    %v1167 = vpack.c.b16 %v1123, %v1121
    %v1168 = vpack.c.b16 %v1124, %v1122
    %v1169 = vpack.c.b16 %v1127, %v1125
    %v1170 = vpack.c.b16 %v1128, %v1126
    %v1171 = vpack.c.b16 %v1131, %v1129
    %v1172 = vpack.c.b16 %v1132, %v1130
    %v1173 = vpack.c.b16 %v1135, %v1133
    %v1174 = vpack.c.b16 %v1136, %v1134
    %v1175 = vpack.c.b16 %v1139, %v1137
    %v1176 = vpack.c.b16 %v1140, %v1138
    %v1177 = vpack.c.b16 %v1143, %v1141
    %v1178 = vpack.c.b16 %v1144, %v1142
    %v1179 = vpack.c.b16 %v1147, %v1145
    %v1180 = vpack.c.b16 %v1148, %v1146
    %1213 = vmatprep.subr.bf16.mxu0 %v1150
    %1214 = vmatpush1.bf16.msra.mxu0 %v1149
    %1215 = vmatprep.subr.bf16.mxu0 %v1152
    %1216 = vmatpush1.bf16.msra.mxu0 %v1151
    %1217 = vmatprep.subr.bf16.mxu0 %v1154
    %1218 = vmatpush1.bf16.msra.mxu0 %v1153
    %1219 = vmatprep.subr.bf16.mxu0 %v1156
    %1220 = vmatpush1.bf16.msra.mxu0 %v1155
    %1221 = vmatprep.subr.bf16.mxu0 %v1158
    %1222 = vmatpush1.bf16.msra.mxu0 %v1157
    %1223 = vmatprep.subr.bf16.mxu0 %v1160
    %1224 = vmatpush1.bf16.msra.mxu0 %v1159
    %1225 = vmatprep.subr.bf16.mxu0 %v1162
    %1226 = vmatpush1.bf16.msra.mxu0 %v1161
    %1227 = vmatprep.subr.bf16.mxu0 %v1164
    %1228 = vmatpush1.bf16.msra.mxu0 %v1163
    %1229 = vmatprep.subr.bf16.mxu0 %v1166
    %1230 = vmatpush1.bf16.msra.mxu0 %v1165
    %1231 = vmatprep.subr.bf16.mxu0 %v1168
    %1232 = vmatpush1.bf16.msra.mxu0 %v1167
    %1233 = vmatprep.subr.bf16.mxu0 %v1170
    %1234 = vmatpush1.bf16.msra.mxu0 %v1169
    %1235 = vmatprep.subr.bf16.mxu0 %v1172
    %1236 = vmatpush1.bf16.msra.mxu0 %v1171
    %1237 = vmatprep.subr.bf16.mxu0 %v1174
    %1238 = vmatpush1.bf16.msra.mxu0 %v1173
    %1239 = vmatprep.subr.bf16.mxu0 %v1176
    %1240 = vmatpush1.bf16.msra.mxu0 %v1175
    %1241 = vmatprep.subr.bf16.mxu0 %v1178
    %1242 = vmatpush1.bf16.msra.mxu0 %v1177
    %1243 = vmatprep.subr.bf16.mxu0 %v1180
    %1244 = vmatpush1.bf16.msra.mxu0 %v1179
    %1245 = vmatprep.mubr.bf16.mxu0 %v1008
    %1246 = vmatmul.mubr.bf16.gmra.mrb[0].mxu0 %v1007
    %v1247 = vpop.f32.mrb[0].mxu0
    %v1248 = vadd.f32 %v1046, %v1247
    %v1249 = vpop.f32.mrb[0].mxu0
    %v1250 = vadd.f32 %v1050, %v1249
    %v1251 = vpop.f32.mrb[0].mxu0
    %v1252 = vadd.f32 %v1046, %v1251
    %v1253 = vpop.f32.mrb[0].mxu0
    %v1254 = vadd.f32 %v1050, %v1253
    %1255 = vdwg.mxu0
    %v1256 = vmax.f32 %v1248, 0.0
    %v1257 = vmax.f32 %v1250, 0.0
    %v1258 = vmax.f32 %v1252, 0.0
    %v1259 = vmax.f32 %v1254, 0.0
    %v1260 = vadd.f32 %v1256, %v1003
    %v1261 = vadd.f32 %v1257, %v1004
    %v1262 = vadd.f32 %v1258, %v1005
    %v1263 = vadd.f32 %v1259, %v1006
    %v1264 = vpack.c.bf16 %v1262, %v1260
    %v1265 = vpack.c.bf16 %v1263, %v1261
    %v1266 = vld [vmem:[#allocation14] sm:$0xf]
    %v1267 = vld [vmem:[#allocation14 + $0x4] sm:$0xf]
    %v1268 = vld [vmem:[#allocation14 + $0x8] sm:$0xf]
    %v1269 = vld [vmem:[#allocation14 + $0xc] sm:$0xf]
    %v1270 = vld [vmem:[#allocation14 + $0x10] sm:$0xf]
    %v1271 = vld [vmem:[#allocation14 + $0x14] sm:$0xf]
    %v1272 = vld [vmem:[#allocation14 + $0x18] sm:$0xf]
    %v1273 = vld [vmem:[#allocation14 + $0x1c] sm:$0xf]
    %v1274 = vld [vmem:[#allocation14 + $0x20] sm:$0xf]
    %v1275 = vld [vmem:[#allocation14 + $0x24] sm:$0xf]
    %v1276 = vld [vmem:[#allocation14 + $0x28] sm:$0xf]
    %v1277 = vld [vmem:[#allocation14 + $0x2c] sm:$0xf]
    %v1278 = vld [vmem:[#allocation14 + $0x30] sm:$0xf]
    %v1279 = vld [vmem:[#allocation14 + $0x34] sm:$0xf]
    %v1280 = vld [vmem:[#allocation14 + $0x38] sm:$0xf]
    %v1281 = vld [vmem:[#allocation14 + $0x3c] sm:$0xf]
    %v1282 = vld [vmem:[#allocation14 + $0x40] sm:$0xf]
    %v1283 = vld [vmem:[#allocation14 + $0x44] sm:$0xf]
    %v1284 = vld [vmem:[#allocation14 + $0x48] sm:$0xf]
    %v1285 = vld [vmem:[#allocation14 + $0x4c] sm:$0xf]
    %v1286 = vld [vmem:[#allocation14 + $0x50] sm:$0xf]
    %v1287 = vld [vmem:[#allocation14 + $0x54] sm:$0xf]
    %v1288 = vld [vmem:[#allocation14 + $0x58] sm:$0xf]
    %v1289 = vld [vmem:[#allocation14 + $0x5c] sm:$0xf]
    %v1290 = vld [vmem:[#allocation14 + $0x60] sm:$0xf]
    %v1291 = vld [vmem:[#allocation14 + $0x64] sm:$0xf]
    %v1292 = vld [vmem:[#allocation14 + $0x68] sm:$0xf]
    %v1293 = vld [vmem:[#allocation14 + $0x6c] sm:$0xf]
    %v1294 = vld [vmem:[#allocation14 + $0x70] sm:$0xf]
    %v1295 = vld [vmem:[#allocation14 + $0x74] sm:$0xf]
    %v1296 = vld [vmem:[#allocation14 + $0x78] sm:$0xf]
    %v1297 = vld [vmem:[#allocation14 + $0x7c] sm:$0xf]
    %v1298 = vld [vmem:[%s11] sm:$0x1]
    %v1300 = vlaneseq
    %v1301 = vshrl.u32 %v1300, 7
    %v1302 = vsub.s32 0, %v1301
    %v1303 = vrot.slane %v1298, %v1302
    %v1337 = vunpack.c.l.b16 %v1266
    %v1338 = vunpack.c.l.b16 %v1267
    %v1339 = vunpack.c.l.b16 %v1268
    %v1340 = vunpack.c.l.b16 %v1269
    %v1341 = vunpack.c.l.b16 %v1270
    %v1342 = vunpack.c.l.b16 %v1271
    %v1343 = vunpack.c.l.b16 %v1272
    %v1344 = vunpack.c.l.b16 %v1273
    %v1345 = vunpack.c.l.b16 %v1274
    %v1346 = vunpack.c.l.b16 %v1275
    %v1347 = vunpack.c.l.b16 %v1276
    %v1348 = vunpack.c.l.b16 %v1277
    %v1349 = vunpack.c.l.b16 %v1278
    %v1350 = vunpack.c.l.b16 %v1279
    %v1351 = vunpack.c.l.b16 %v1280
    %v1352 = vunpack.c.l.b16 %v1281
    %v1353 = vunpack.c.l.b16 %v1282
    %v1354 = vunpack.c.l.b16 %v1283
    %v1355 = vunpack.c.l.b16 %v1284
    %v1356 = vunpack.c.l.b16 %v1285
    %v1357 = vunpack.c.l.b16 %v1286
    %v1358 = vunpack.c.l.b16 %v1287
    %v1359 = vunpack.c.l.b16 %v1288
    %v1360 = vunpack.c.l.b16 %v1289
    %v1361 = vunpack.c.l.b16 %v1290
    %v1362 = vunpack.c.l.b16 %v1291
    %v1363 = vunpack.c.l.b16 %v1292
    %v1364 = vunpack.c.l.b16 %v1293
    %v1365 = vunpack.c.l.b16 %v1294
    %v1366 = vunpack.c.l.b16 %v1295
    %v1367 = vunpack.c.l.b16 %v1296
    %v1368 = vunpack.c.l.b16 %v1297
    %v1369 = vpack.c.b16 %v1338, %v1337
    %v1370 = vpack.c.b16 %v1340, %v1339
    %v1371 = vpack.c.b16 %v1342, %v1341
    %v1372 = vpack.c.b16 %v1344, %v1343
    %v1373 = vpack.c.b16 %v1346, %v1345
    %v1374 = vpack.c.b16 %v1348, %v1347
    %v1375 = vpack.c.b16 %v1350, %v1349
    %v1376 = vpack.c.b16 %v1352, %v1351
    %v1377 = vpack.c.b16 %v1354, %v1353
    %v1378 = vpack.c.b16 %v1356, %v1355
    %v1379 = vpack.c.b16 %v1358, %v1357
    %v1380 = vpack.c.b16 %v1360, %v1359
    %v1381 = vpack.c.b16 %v1362, %v1361
    %v1382 = vpack.c.b16 %v1364, %v1363
    %v1383 = vpack.c.b16 %v1366, %v1365
    %v1384 = vpack.c.b16 %v1368, %v1367
    %1401 = vmatprep.subr.bf16.mxu0 0
    %1402 = vmatpush1.bf16.msra.mxu0 %v1369
    %1403 = vmatprep.subr.bf16.mxu0 0
    %1404 = vmatpush1.bf16.msra.mxu0 %v1370
    %1405 = vmatprep.subr.bf16.mxu0 0
    %1406 = vmatpush1.bf16.msra.mxu0 %v1371
    %1407 = vmatprep.subr.bf16.mxu0 0
    %1408 = vmatpush1.bf16.msra.mxu0 %v1372
    %1409 = vmatprep.subr.bf16.mxu0 0
    %1410 = vmatpush1.bf16.msra.mxu0 %v1373
    %1411 = vmatprep.subr.bf16.mxu0 0
    %1412 = vmatpush1.bf16.msra.mxu0 %v1374
    %1413 = vmatprep.subr.bf16.mxu0 0
    %1414 = vmatpush1.bf16.msra.mxu0 %v1375
    %1415 = vmatprep.subr.bf16.mxu0 0
    %1416 = vmatpush1.bf16.msra.mxu0 %v1376
    %1417 = vmatprep.subr.bf16.mxu0 0
    %1418 = vmatpush1.bf16.msra.mxu0 %v1377
    %1419 = vmatprep.subr.bf16.mxu0 0
    %1420 = vmatpush1.bf16.msra.mxu0 %v1378
    %1421 = vmatprep.subr.bf16.mxu0 0
    %1422 = vmatpush1.bf16.msra.mxu0 %v1379
    %1423 = vmatprep.subr.bf16.mxu0 0
    %1424 = vmatpush1.bf16.msra.mxu0 %v1380
    %1425 = vmatprep.subr.bf16.mxu0 0
    %1426 = vmatpush1.bf16.msra.mxu0 %v1381
    %1427 = vmatprep.subr.bf16.mxu0 0
    %1428 = vmatpush1.bf16.msra.mxu0 %v1382
    %1429 = vmatprep.subr.bf16.mxu0 0
    %1430 = vmatpush1.bf16.msra.mxu0 %v1383
    %1431 = vmatprep.subr.bf16.mxu0 0
    %1432 = vmatpush1.bf16.msra.mxu0 %v1384
    %1433 = vmatprep.mubr.bf16.mxu0 %v1265
    %1434 = vmatmul.mubr.bf16.gmra.mrb[0].mxu0 %v1264
    %v1435 = vpop.f32.mrb[0].mxu0
    %v1436 = vadd.f32 %v1303, %v1435
    %v1437 = vpop.f32.mrb[0].mxu0
    %v1438 = vpop.f32.mrb[0].mxu0
    %v1439 = vadd.f32 %v1303, %v1438
    %v1440 = vpop.f32.mrb[0].mxu0
    %1441 = vdwg.mxu0
    %1442 = vst [vmem:[#allocation16] sm:$0xff] %v1436
    %1443 = vst [vmem:[#allocation16 + $0x8] sm:$0xff] %v1439
    // Predicated region
    $region82: #{tpu_custom_call.1} parent=1 // pred_check
      _
    $region83: #{tpu_custom_call.1} parent=1 // pred_check_branch
      %1445 = sbr.rel (0) target = $region85
    $region84: #{tpu_custom_call.1} parent=1 // pred_region
      %s1447 = ssub.s32 256, 256
      %1448 = vsyncadd [#allocation4], %s1447
      %s1449 = sshll.u32 [#allocation16], 4
      %s1450 = int_to_ptr.vmem [resolvable:$true] %s1449
      %1455 = dma.vmem_to_hbm [thread:$0]  %s1450, 256, %s12, [#allocation4], 128, 128, 8
    $region85: #{tpu_custom_call.1} parent=1 // pred_fallthru
      _
    // Predicated region
    $region86: #{tpu_custom_call.1} parent=1 // pred_check
      _
    $region87: #{tpu_custom_call.1} parent=1 // pred_check_branch
      %1457 = sbr.rel (0) target = $region89
    $region88: #{tpu_custom_call.1} parent=1 // pred_region
      %1458 = dma.done [#allocation4], 256
    $region89: #{tpu_custom_call.1} parent=1 // pred_fallthru
      _
    %1459 = vsyncpa [#allocation3], 1
    %1460 = vsyncpa [#allocation6], 1
    %1461 = vsyncpa [#allocation9], 1
    %1462 = vsyncpa [#allocation12], 1
    %1463 = vsyncpa [#allocation15], 1
    %1464 = vsyncpa [#allocation4], 1

// kernel: tpu_custom_call.1
$region0: #{tpu_custom_call.1}
  #allocation0 [shape = 'u32[]', space=smem, size = 0x4, offset = 0x4, fixed_abs, tag = 'smem constant byte address 0x4 - core index']
  #allocation1 [shape = 'u32[144,128]{1,0:T(1,128)}', space=vmem, size = 0x12000, scoped, tag = 'internal scratch']
  %s0 = inlined_call_operand.hbm [shape: bf16[16,16], index: 0, kind: input, shape index: {}]
  %s1 = inlined_call_operand.hbm [shape: f32[5,16,16], index: 1, kind: input, shape index: {}]
  %s2 = inlined_call_operand.hbm [shape: bf16[5,16,32], index: 2, kind: input, shape index: {}]
  %s3 = inlined_call_operand.hbm [shape: f32[16,256], index: 3, kind: input, shape index: {}]
  %s4 = inlined_call_operand.hbm [shape: bf16[256,256], index: 4, kind: input, shape index: {}]
  %s5 = inlined_call_operand.vmem [shape: f32[1,256], index: 5, kind: input, shape index: {}]
  %s6 = inlined_call_operand.hbm [shape: bf16[256,256], index: 6, kind: input, shape index: {}]
  %s7 = inlined_call_operand.vmem [shape: f32[1,256], index: 7, kind: input, shape index: {}]
  %s8 = inlined_call_operand.hbm [shape: bf16[256,256], index: 8, kind: input, shape index: {}]
  %s9 = inlined_call_operand.vmem [shape: f32[1,256], index: 9, kind: input, shape index: {}]
  %s10 = inlined_call_operand.hbm [shape: bf16[256,128], index: 10, kind: input, shape index: {}]
  %s11 = inlined_call_operand.vmem [shape: f32[1,128], index: 11, kind: input, shape index: {}]
  %s12 = inlined_call_operand.hbm [shape: f32[16,128], index: 12, kind: output, shape index: {}]
  %s13 = sld [smem:[#allocation0]]
  $region90: #{tpu_custom_call.1} parent=0
    _
  %s15 = ssub.s32 1, %s13
  %s16 = scalar_select 0, %s15, %s13
  $region1: #{tpu_custom_call.1} parent=0
    #allocation2 [shape = 'u8[4096]{0}', space=vmem, size = 0x1000, scoped, tag = 'input window, operand 0, single buffered']
    #allocation3 [shape = 's32[1]{0}', space=sflag, size = 0x4, scoped, tag = 'scoped memory for tpu_custom_call.1']
    #allocation4 [shape = 's32[1]{0}', space=sflag, size = 0x4, scoped, tag = 'scoped memory for tpu_custom_call.1']
    #allocation5 [shape = 'u8[40960]{0}', space=vmem, size = 0xa000, scoped, tag = 'input window, operand 1, single buffered']
    #allocation6 [shape = 's32[1]{0}', space=sflag, size = 0x4, scoped, tag = 'scoped memory for tpu_custom_call.1']
    #allocation7 [shape = 'u8[20480]{0}', space=vmem, size = 0x5000, scoped, tag = 'input window, operand 2, single buffered']
    #allocation8 [shape = 'u8[16384]{0}', space=vmem, size = 0x4000, scoped, tag = 'input window, operand 3, single buffered']
    #allocation9 [shape = 's32[1]{0}', space=sflag, size = 0x4, scoped, tag = 'scoped memory for tpu_custom_call.1']
    #allocation10 [shape = 'u8[131072]{0}', space=vmem, size = 0x20000, scoped, tag = 'input window, operand 4, single buffered']
    #allocation11 [shape = 'u8[131072]{0}', space=vmem, size = 0x20000, scoped, tag = 'input window, operand 6, single buffered']
    #allocation12 [shape = 's32[1]{0}', space=sflag, size = 0x4, scoped, tag = 'scoped memory for tpu_custom_call.1']
    #allocation13 [shape = 'u8[131072]{0}', space=vmem, size = 0x20000, scoped, tag = 'input window, operand 8, single buffered']
    #allocation14 [shape = 'u8[65536]{0}', space=vmem, size = 0x10000, scoped, tag = 'input window, operand 10, single buffered']
    #allocation15 [shape = 's32[1]{0}', space=sflag, size = 0x4, scoped, tag = 'scoped memory for tpu_custom_call.1']
    #allocation16 [shape = 'u8[8192]{0}', space=vmem, size = 0x2000, scoped, tag = 'output window, operand 0, single buffered']
    %17 = vsyncpa [#allocation3], 0
    %18 = vsyncpa [#allocation6], 0
    %19 = vsyncpa [#allocation9], 0
    %20 = vsyncpa [#allocation12], 0
    %21 = vsyncpa [#allocation15], 0
    %22 = vsyncpa [#allocation4], 0
    // Predicated region
    $region2: #{tpu_custom_call.1} parent=1 // pred_check
      _
    $region3: #{tpu_custom_call.1} parent=1 // pred_check_branch
      %24 = sbr.rel (0) target = $region5
    $region4: #{tpu_custom_call.1} parent=1 // pred_region
      %s26 = ssub.s32 128, 128
      %27 = vsyncadd [#allocation3], %s26
      %s28 = sshll.u32 [#allocation2], 4
      %s29 = int_to_ptr.vmem [resolvable:$true] %s28
      %34 = dma.hbm_to_vmem [thread:$0]  %s0, 128, %s29, [#allocation3], 64, 64, 4
    $region5: #{tpu_custom_call.1} parent=1 // pred_fallthru
      _
    // Predicated region
    $region6: #{tpu_custom_call.1} parent=1 // pred_check
      _
    $region7: #{tpu_custom_call.1} parent=1 // pred_check_branch
      %36 = sbr.rel (0) target = $region9
    $region8: #{tpu_custom_call.1} parent=1 // pred_region
      %s38 = ssub.s32 1280, 1280
      %39 = vsyncadd [#allocation6], %s38
      %s40 = sshll.u32 [#allocation5], 4
      %s41 = int_to_ptr.vmem [resolvable:$true] %s40
      %46 = dma.hbm_to_vmem [thread:$0]  %s1, 1280, %s41, [#allocation6], 128, 128, 8
    $region9: #{tpu_custom_call.1} parent=1 // pred_fallthru
      _
    // Predicated region
    $region10: #{tpu_custom_call.1} parent=1 // pred_check
      _
    $region11: #{tpu_custom_call.1} parent=1 // pred_check_branch
      %48 = sbr.rel (0) target = $region13
    $region12: #{tpu_custom_call.1} parent=1 // pred_region
      %s50 = ssub.s32 640, 640
      %51 = vsyncadd [#allocation6], %s50
      %s52 = sshll.u32 [#allocation7], 4
      %s53 = int_to_ptr.vmem [resolvable:$true] %s52
      %58 = dma.hbm_to_vmem [thread:$0]  %s2, 640, %s53, [#allocation6], 64, 64, 4
    $region13: #{tpu_custom_call.1} parent=1 // pred_fallthru
      _
    // Predicated region
    $region14: #{tpu_custom_call.1} parent=1 // pred_check
      _
    $region15: #{tpu_custom_call.1} parent=1 // pred_check_branch
      %60 = sbr.rel (0) target = $region17
    $region16: #{tpu_custom_call.1} parent=1 // pred_region
      %s62 = ssub.s32 512, 512
      %63 = vsyncadd [#allocation9], %s62
      %s64 = sshll.u32 [#allocation8], 4
      %s65 = int_to_ptr.vmem [resolvable:$true] %s64
      %70 = dma.hbm_to_vmem [thread:$0]  %s3, 512, %s65, [#allocation9], 256, 256, 16
    $region17: #{tpu_custom_call.1} parent=1 // pred_fallthru
      _
    // Predicated region
    $region18: #{tpu_custom_call.1} parent=1 // pred_check
      _
    $region19: #{tpu_custom_call.1} parent=1 // pred_check_branch
      %72 = sbr.rel (0) target = $region21
    $region20: #{tpu_custom_call.1} parent=1 // pred_region
      %s74 = ssub.s32 4096, 4096
      %75 = vsyncadd [#allocation9], %s74
      %s76 = sshll.u32 [#allocation10], 4
      %s77 = int_to_ptr.vmem [resolvable:$true] %s76
      %82 = dma.hbm_to_vmem [thread:$0]  %s4, 4096, %s77, [#allocation9], 128, 128, 8
    $region21: #{tpu_custom_call.1} parent=1 // pred_fallthru
      _
    // Predicated region
    $region22: #{tpu_custom_call.1} parent=1 // pred_check
      _
    $region23: #{tpu_custom_call.1} parent=1 // pred_check_branch
      %84 = sbr.rel (0) target = $region25
    $region24: #{tpu_custom_call.1} parent=1 // pred_region
      _
    $region25: #{tpu_custom_call.1} parent=1 // pred_fallthru
      _
    // Predicated region
    $region26: #{tpu_custom_call.1} parent=1 // pred_check
      _
    $region27: #{tpu_custom_call.1} parent=1 // pred_check_branch
      %86 = sbr.rel (0) target = $region29
    $region28: #{tpu_custom_call.1} parent=1 // pred_region
      %s88 = ssub.s32 4096, 4096
      %89 = vsyncadd [#allocation12], %s88
      %s90 = sshll.u32 [#allocation11], 4
      %s91 = int_to_ptr.vmem [resolvable:$true] %s90
      %96 = dma.hbm_to_vmem [thread:$0]  %s6, 4096, %s91, [#allocation12], 128, 128, 8
    $region29: #{tpu_custom_call.1} parent=1 // pred_fallthru
      _
    // Predicated region
    $region30: #{tpu_custom_call.1} parent=1 // pred_check
      _
    $region31: #{tpu_custom_call.1} parent=1 // pred_check_branch
      %98 = sbr.rel (0) target = $region33
    $region32: #{tpu_custom_call.1} parent=1 // pred_region
      _
    $region33: #{tpu_custom_call.1} parent=1 // pred_fallthru
      _
    // Predicated region
    $region34: #{tpu_custom_call.1} parent=1 // pred_check
      _
    $region35: #{tpu_custom_call.1} parent=1 // pred_check_branch
      %100 = sbr.rel (0) target = $region37
    $region36: #{tpu_custom_call.1} parent=1 // pred_region
      %s102 = ssub.s32 4096, 4096
      %103 = vsyncadd [#allocation12], %s102
      %s104 = sshll.u32 [#allocation13], 4
      %s105 = int_to_ptr.vmem [resolvable:$true] %s104
      %110 = dma.hbm_to_vmem [thread:$0]  %s8, 4096, %s105, [#allocation12], 128, 128, 8
    $region37: #{tpu_custom_call.1} parent=1 // pred_fallthru
      _
    // Predicated region
    $region38: #{tpu_custom_call.1} parent=1 // pred_check
      _
    $region39: #{tpu_custom_call.1} parent=1 // pred_check_branch
      %112 = sbr.rel (0) target = $region41
    $region40: #{tpu_custom_call.1} parent=1 // pred_region
      _
    $region41: #{tpu_custom_call.1} parent=1 // pred_fallthru
      _
    // Predicated region
    $region42: #{tpu_custom_call.1} parent=1 // pred_check
      _
    $region43: #{tpu_custom_call.1} parent=1 // pred_check_branch
      %114 = sbr.rel (0) target = $region45
    $region44: #{tpu_custom_call.1} parent=1 // pred_region
      %s116 = ssub.s32 2048, 2048
      %117 = vsyncadd [#allocation15], %s116
      %s118 = sshll.u32 [#allocation14], 4
      %s119 = int_to_ptr.vmem [resolvable:$true] %s118
      %124 = dma.hbm_to_vmem [thread:$0]  %s10, 2048, %s119, [#allocation15], 64, 64, 4
    $region45: #{tpu_custom_call.1} parent=1 // pred_fallthru
      _
    // Predicated region
    $region46: #{tpu_custom_call.1} parent=1 // pred_check
      _
    $region47: #{tpu_custom_call.1} parent=1 // pred_check_branch
      %126 = sbr.rel (0) target = $region49
    $region48: #{tpu_custom_call.1} parent=1 // pred_region
      _
    $region49: #{tpu_custom_call.1} parent=1 // pred_fallthru
      _
    // Predicated region
    $region50: #{tpu_custom_call.1} parent=1 // pred_check
      _
    $region51: #{tpu_custom_call.1} parent=1 // pred_check_branch
      %128 = sbr.rel (0) target = $region53
    $region52: #{tpu_custom_call.1} parent=1 // pred_region
      %129 = dma.done [#allocation3], 128
    $region53: #{tpu_custom_call.1} parent=1 // pred_fallthru
      _
    // Predicated region
    $region54: #{tpu_custom_call.1} parent=1 // pred_check
      _
    $region55: #{tpu_custom_call.1} parent=1 // pred_check_branch
      %131 = sbr.rel (0) target = $region57
    $region56: #{tpu_custom_call.1} parent=1 // pred_region
      %132 = dma.done [#allocation6], 1280
    $region57: #{tpu_custom_call.1} parent=1 // pred_fallthru
      _
    // Predicated region
    $region58: #{tpu_custom_call.1} parent=1 // pred_check
      _
    $region59: #{tpu_custom_call.1} parent=1 // pred_check_branch
      %134 = sbr.rel (0) target = $region61
    $region60: #{tpu_custom_call.1} parent=1 // pred_region
      %135 = dma.done [#allocation6], 640
    $region61: #{tpu_custom_call.1} parent=1 // pred_fallthru
      _
    // Predicated region
    $region62: #{tpu_custom_call.1} parent=1 // pred_check
      _
    $region63: #{tpu_custom_call.1} parent=1 // pred_check_branch
      %137 = sbr.rel (0) target = $region65
    $region64: #{tpu_custom_call.1} parent=1 // pred_region
      %138 = dma.done [#allocation9], 512
    $region65: #{tpu_custom_call.1} parent=1 // pred_fallthru
      _
    // Predicated region
    $region66: #{tpu_custom_call.1} parent=1 // pred_check
      _
    $region67: #{tpu_custom_call.1} parent=1 // pred_check_branch
      %140 = sbr.rel (0) target = $region69
    $region68: #{tpu_custom_call.1} parent=1 // pred_region
      %141 = dma.done [#allocation9], 4096
    $region69: #{tpu_custom_call.1} parent=1 // pred_fallthru
      _
    // Predicated region
    $region70: #{tpu_custom_call.1} parent=1 // pred_check
      _
    $region71: #{tpu_custom_call.1} parent=1 // pred_check_branch
      %143 = sbr.rel (0) target = $region73
    $region72: #{tpu_custom_call.1} parent=1 // pred_region
      %144 = dma.done [#allocation12], 4096
    $region73: #{tpu_custom_call.1} parent=1 // pred_fallthru
      _
    // Predicated region
    $region74: #{tpu_custom_call.1} parent=1 // pred_check
      _
    $region75: #{tpu_custom_call.1} parent=1 // pred_check_branch
      %146 = sbr.rel (0) target = $region77
    $region76: #{tpu_custom_call.1} parent=1 // pred_region
      %147 = dma.done [#allocation12], 4096
    $region77: #{tpu_custom_call.1} parent=1 // pred_fallthru
      _
    // Predicated region
    $region78: #{tpu_custom_call.1} parent=1 // pred_check
      _
    $region79: #{tpu_custom_call.1} parent=1 // pred_check_branch
      %149 = sbr.rel (0) target = $region81
    $region80: #{tpu_custom_call.1} parent=1 // pred_region
      %150 = dma.done [#allocation15], 2048
    $region81: #{tpu_custom_call.1} parent=1 // pred_fallthru
      _
    %v152 = vld [vmem:[#allocation2] sm:$0xf]
    %v153 = vld [vmem:[#allocation2 + $0x4] sm:$0xf]
    %v154 = vunpack.c.l.bf16 %v152
    %v155 = vunpack.c.l.bf16 %v153
    %v156 = vld [vmem:[#allocation5] sm:$0xff]
    %v157 = vld [vmem:[#allocation5 + $0x8] sm:$0xff]
    %v158 = vmul.f32 %v154, %v156
    %v159 = vmul.f32 %v155, %v157
    %v160 = vpack.c.bf16 %v159, %v158
    %v161 = vld [vmem:[#allocation7] sm:$0xf]
    %v162 = vld [vmem:[#allocation7 + $0x4] sm:$0xf]
    %v165 = vunpack.c.l.b16 %v161
    %v166 = vunpack.c.l.b16 %v162
    %v167 = vpack.c.b16 %v166, %v165
    %vm169 = vcmask 130048
    %v171 = vsel %vm169, %v160, 0
    %173 = vmatprep.subr.bf16.mxu0 0
    %174 = vmatpush1.bf16.msra.mxu0 %v167
    %175 = vmatprep.subr.bf16.mxu0 0
    %176 = vmatpush1.bf16.msra.mxu0 0
    %177 = vmatprep.subr.bf16.mxu0 0
    %178 = vmatpush1.bf16.msra.mxu0 0
    %179 = vmatprep.subr.bf16.mxu0 0
    %180 = vmatpush1.bf16.msra.mxu0 0
    %181 = vmatprep.subr.bf16.mxu0 0
    %182 = vmatpush1.bf16.msra.mxu0 0
    %183 = vmatprep.subr.bf16.mxu0 0
    %184 = vmatpush1.bf16.msra.mxu0 0
    %185 = vmatprep.subr.bf16.mxu0 0
    %186 = vmatpush1.bf16.msra.mxu0 0
    %187 = vmatprep.subr.bf16.mxu0 0
    %188 = vmatpush1.bf16.msra.mxu0 0
    %189 = vmatprep.subr.bf16.mxu0 0
    %190 = vmatpush1.bf16.msra.mxu0 0
    %191 = vmatprep.subr.bf16.mxu0 0
    %192 = vmatpush1.bf16.msra.mxu0 0
    %193 = vmatprep.subr.bf16.mxu0 0
    %194 = vmatpush1.bf16.msra.mxu0 0
    %195 = vmatprep.subr.bf16.mxu0 0
    %196 = vmatpush1.bf16.msra.mxu0 0
    %197 = vmatprep.subr.bf16.mxu0 0
    %198 = vmatpush1.bf16.msra.mxu0 0
    %199 = vmatprep.subr.bf16.mxu0 0
    %200 = vmatpush1.bf16.msra.mxu0 0
    %201 = vmatprep.subr.bf16.mxu0 0
    %202 = vmatpush1.bf16.msra.mxu0 0
    %203 = vmatprep.subr.bf16.mxu0 0
    %204 = vmatpush1.bf16.msra.mxu0 0
    %205 = vmatprep.mubr.bf16.mxu0 0
    %206 = vmatmul.mubr.bf16.gmra.mrb[0].mxu0 %v171
    %v207 = vpop.f32.mrb[0].mxu0
    %v208 = vadd.f32 0.0, %v207
    %v209 = vpop.f32.mrb[0].mxu0
    %v210 = vpop.f32.mrb[0].mxu0
    %v211 = vadd.f32 0.0, %v210
    %v212 = vpop.f32.mrb[0].mxu0
    %213 = vdwg.mxu0
    %s214 = scalar_lea.vmem [#allocation5], 16
    %v215 = vld [vmem:[%s214] sm:$0xff]
    %v216 = vld [vmem:[%s214 + $0x8] sm:$0xff]
    %v217 = vmul.f32 %v154, %v215
    %v218 = vmul.f32 %v155, %v216
    %v219 = vpack.c.bf16 %v218, %v217
    %s220 = scalar_lea.vmem [#allocation7], 8
    %v221 = vld [vmem:[%s220] sm:$0xf]
    %v222 = vld [vmem:[%s220 + $0x4] sm:$0xf]
    %v225 = vunpack.c.l.b16 %v221
    %v226 = vunpack.c.l.b16 %v222
    %v227 = vpack.c.b16 %v226, %v225
    %v230 = vsel %vm169, %v219, 0
    %232 = vmatprep.subr.bf16.mxu0 0
    %233 = vmatpush1.bf16.msra.mxu0 %v227
    %234 = vmatprep.subr.bf16.mxu0 0
    %235 = vmatpush1.bf16.msra.mxu0 0
    %236 = vmatprep.subr.bf16.mxu0 0
    %237 = vmatpush1.bf16.msra.mxu0 0
    %238 = vmatprep.subr.bf16.mxu0 0
    %239 = vmatpush1.bf16.msra.mxu0 0
    %240 = vmatprep.subr.bf16.mxu0 0
    %241 = vmatpush1.bf16.msra.mxu0 0
    %242 = vmatprep.subr.bf16.mxu0 0
    %243 = vmatpush1.bf16.msra.mxu0 0
    %244 = vmatprep.subr.bf16.mxu0 0
    %245 = vmatpush1.bf16.msra.mxu0 0
    %246 = vmatprep.subr.bf16.mxu0 0
    %247 = vmatpush1.bf16.msra.mxu0 0
    %248 = vmatprep.subr.bf16.mxu0 0
    %249 = vmatpush1.bf16.msra.mxu0 0
    %250 = vmatprep.subr.bf16.mxu0 0
    %251 = vmatpush1.bf16.msra.mxu0 0
    %252 = vmatprep.subr.bf16.mxu0 0
    %253 = vmatpush1.bf16.msra.mxu0 0
    %254 = vmatprep.subr.bf16.mxu0 0
    %255 = vmatpush1.bf16.msra.mxu0 0
    %256 = vmatprep.subr.bf16.mxu0 0
    %257 = vmatpush1.bf16.msra.mxu0 0
    %258 = vmatprep.subr.bf16.mxu0 0
    %259 = vmatpush1.bf16.msra.mxu0 0
    %260 = vmatprep.subr.bf16.mxu0 0
    %261 = vmatpush1.bf16.msra.mxu0 0
    %262 = vmatprep.subr.bf16.mxu0 0
    %263 = vmatpush1.bf16.msra.mxu0 0
    %264 = vmatprep.mubr.bf16.mxu0 0
    %265 = vmatmul.mubr.bf16.gmra.mrb[0].mxu0 %v230
    %v266 = vpop.f32.mrb[0].mxu0
    %v267 = vadd.f32 0.0, %v266
    %v268 = vpop.f32.mrb[0].mxu0
    %v269 = vpop.f32.mrb[0].mxu0
    %v270 = vadd.f32 0.0, %v269
    %v271 = vpop.f32.mrb[0].mxu0
    %272 = vdwg.mxu0
    %s273 = scalar_lea.vmem [#allocation5], 32
    %v274 = vld [vmem:[%s273] sm:$0xff]
    %v275 = vld [vmem:[%s273 + $0x8] sm:$0xff]
    %v276 = vmul.f32 %v154, %v274
    %v277 = vmul.f32 %v155, %v275
    %v278 = vpack.c.bf16 %v277, %v276
    %s279 = scalar_lea.vmem [#allocation7], 16
    %v280 = vld [vmem:[%s279] sm:$0xf]
    %v281 = vld [vmem:[%s279 + $0x4] sm:$0xf]
    %v284 = vunpack.c.l.b16 %v280
    %v285 = vunpack.c.l.b16 %v281
    %v286 = vpack.c.b16 %v285, %v284
    %v289 = vsel %vm169, %v278, 0
    %291 = vmatprep.subr.bf16.mxu0 0
    %292 = vmatpush1.bf16.msra.mxu0 %v286
    %293 = vmatprep.subr.bf16.mxu0 0
    %294 = vmatpush1.bf16.msra.mxu0 0
    %295 = vmatprep.subr.bf16.mxu0 0
    %296 = vmatpush1.bf16.msra.mxu0 0
    %297 = vmatprep.subr.bf16.mxu0 0
    %298 = vmatpush1.bf16.msra.mxu0 0
    %299 = vmatprep.subr.bf16.mxu0 0
    %300 = vmatpush1.bf16.msra.mxu0 0
    %301 = vmatprep.subr.bf16.mxu0 0
    %302 = vmatpush1.bf16.msra.mxu0 0
    %303 = vmatprep.subr.bf16.mxu0 0
    %304 = vmatpush1.bf16.msra.mxu0 0
    %305 = vmatprep.subr.bf16.mxu0 0
    %306 = vmatpush1.bf16.msra.mxu0 0
    %307 = vmatprep.subr.bf16.mxu0 0
    %308 = vmatpush1.bf16.msra.mxu0 0
    %309 = vmatprep.subr.bf16.mxu0 0
    %310 = vmatpush1.bf16.msra.mxu0 0
    %311 = vmatprep.subr.bf16.mxu0 0
    %312 = vmatpush1.bf16.msra.mxu0 0
    %313 = vmatprep.subr.bf16.mxu0 0
    %314 = vmatpush1.bf16.msra.mxu0 0
    %315 = vmatprep.subr.bf16.mxu0 0
    %316 = vmatpush1.bf16.msra.mxu0 0
    %317 = vmatprep.subr.bf16.mxu0 0
    %318 = vmatpush1.bf16.msra.mxu0 0
    %319 = vmatprep.subr.bf16.mxu0 0
    %320 = vmatpush1.bf16.msra.mxu0 0
    %321 = vmatprep.subr.bf16.mxu0 0
    %322 = vmatpush1.bf16.msra.mxu0 0
    %323 = vmatprep.mubr.bf16.mxu0 0
    %324 = vmatmul.mubr.bf16.gmra.mrb[0].mxu0 %v289
    %v325 = vpop.f32.mrb[0].mxu0
    %v326 = vadd.f32 0.0, %v325
    %v327 = vpop.f32.mrb[0].mxu0
    %v328 = vpop.f32.mrb[0].mxu0
    %v329 = vadd.f32 0.0, %v328
    %v330 = vpop.f32.mrb[0].mxu0
    %331 = vdwg.mxu0
    %s332 = scalar_lea.vmem [#allocation5], 48
    %v333 = vld [vmem:[%s332] sm:$0xff]
    %v334 = vld [vmem:[%s332 + $0x8] sm:$0xff]
    %v335 = vmul.f32 %v154, %v333
    %v336 = vmul.f32 %v155, %v334
    %v337 = vpack.c.bf16 %v336, %v335
    %s338 = scalar_lea.vmem [#allocation7], 24
    %v339 = vld [vmem:[%s338] sm:$0xf]
    %v340 = vld [vmem:[%s338 + $0x4] sm:$0xf]
    %v343 = vunpack.c.l.b16 %v339
    %v344 = vunpack.c.l.b16 %v340
    %v345 = vpack.c.b16 %v344, %v343
    %v348 = vsel %vm169, %v337, 0
    %350 = vmatprep.subr.bf16.mxu0 0
    %351 = vmatpush1.bf16.msra.mxu0 %v345
    %352 = vmatprep.subr.bf16.mxu0 0
    %353 = vmatpush1.bf16.msra.mxu0 0
    %354 = vmatprep.subr.bf16.mxu0 0
    %355 = vmatpush1.bf16.msra.mxu0 0
    %356 = vmatprep.subr.bf16.mxu0 0
    %357 = vmatpush1.bf16.msra.mxu0 0
    %358 = vmatprep.subr.bf16.mxu0 0
    %359 = vmatpush1.bf16.msra.mxu0 0
    %360 = vmatprep.subr.bf16.mxu0 0
    %361 = vmatpush1.bf16.msra.mxu0 0
    %362 = vmatprep.subr.bf16.mxu0 0
    %363 = vmatpush1.bf16.msra.mxu0 0
    %364 = vmatprep.subr.bf16.mxu0 0
    %365 = vmatpush1.bf16.msra.mxu0 0
    %366 = vmatprep.subr.bf16.mxu0 0
    %367 = vmatpush1.bf16.msra.mxu0 0
    %368 = vmatprep.subr.bf16.mxu0 0
    %369 = vmatpush1.bf16.msra.mxu0 0
    %370 = vmatprep.subr.bf16.mxu0 0
    %371 = vmatpush1.bf16.msra.mxu0 0
    %372 = vmatprep.subr.bf16.mxu0 0
    %373 = vmatpush1.bf16.msra.mxu0 0
    %374 = vmatprep.subr.bf16.mxu0 0
    %375 = vmatpush1.bf16.msra.mxu0 0
    %376 = vmatprep.subr.bf16.mxu0 0
    %377 = vmatpush1.bf16.msra.mxu0 0
    %378 = vmatprep.subr.bf16.mxu0 0
    %379 = vmatpush1.bf16.msra.mxu0 0
    %380 = vmatprep.subr.bf16.mxu0 0
    %381 = vmatpush1.bf16.msra.mxu0 0
    %382 = vmatprep.mubr.bf16.mxu0 0
    %383 = vmatmul.mubr.bf16.gmra.mrb[0].mxu0 %v348
    %v384 = vpop.f32.mrb[0].mxu0
    %v385 = vadd.f32 0.0, %v384
    %v386 = vpop.f32.mrb[0].mxu0
    %v387 = vpop.f32.mrb[0].mxu0
    %v388 = vadd.f32 0.0, %v387
    %v389 = vpop.f32.mrb[0].mxu0
    %390 = vdwg.mxu0
    %s391 = scalar_lea.vmem [#allocation5], 64
    %v392 = vld [vmem:[%s391] sm:$0xff]
    %v393 = vld [vmem:[%s391 + $0x8] sm:$0xff]
    %v394 = vmul.f32 %v154, %v392
    %v395 = vmul.f32 %v155, %v393
    %v396 = vpack.c.bf16 %v395, %v394
    %s397 = scalar_lea.vmem [#allocation7], 32
    %v398 = vld [vmem:[%s397] sm:$0xf]
    %v399 = vld [vmem:[%s397 + $0x4] sm:$0xf]
    %v402 = vunpack.c.l.b16 %v398
    %v403 = vunpack.c.l.b16 %v399
    %v404 = vpack.c.b16 %v403, %v402
    %v407 = vsel %vm169, %v396, 0
    %409 = vmatprep.subr.bf16.mxu0 0
    %410 = vmatpush1.bf16.msra.mxu0 %v404
    %411 = vmatprep.subr.bf16.mxu0 0
    %412 = vmatpush1.bf16.msra.mxu0 0
    %413 = vmatprep.subr.bf16.mxu0 0
    %414 = vmatpush1.bf16.msra.mxu0 0
    %415 = vmatprep.subr.bf16.mxu0 0
    %416 = vmatpush1.bf16.msra.mxu0 0
    %417 = vmatprep.subr.bf16.mxu0 0
    %418 = vmatpush1.bf16.msra.mxu0 0
    %419 = vmatprep.subr.bf16.mxu0 0
    %420 = vmatpush1.bf16.msra.mxu0 0
    %421 = vmatprep.subr.bf16.mxu0 0
    %422 = vmatpush1.bf16.msra.mxu0 0
    %423 = vmatprep.subr.bf16.mxu0 0
    %424 = vmatpush1.bf16.msra.mxu0 0
    %425 = vmatprep.subr.bf16.mxu0 0
    %426 = vmatpush1.bf16.msra.mxu0 0
    %427 = vmatprep.subr.bf16.mxu0 0
    %428 = vmatpush1.bf16.msra.mxu0 0
    %429 = vmatprep.subr.bf16.mxu0 0
    %430 = vmatpush1.bf16.msra.mxu0 0
    %431 = vmatprep.subr.bf16.mxu0 0
    %432 = vmatpush1.bf16.msra.mxu0 0
    %433 = vmatprep.subr.bf16.mxu0 0
    %434 = vmatpush1.bf16.msra.mxu0 0
    %435 = vmatprep.subr.bf16.mxu0 0
    %436 = vmatpush1.bf16.msra.mxu0 0
    %437 = vmatprep.subr.bf16.mxu0 0
    %438 = vmatpush1.bf16.msra.mxu0 0
    %439 = vmatprep.subr.bf16.mxu0 0
    %440 = vmatpush1.bf16.msra.mxu0 0
    %441 = vmatprep.mubr.bf16.mxu0 0
    %442 = vmatmul.mubr.bf16.gmra.mrb[0].mxu0 %v407
    %v443 = vpop.f32.mrb[0].mxu0
    %v444 = vadd.f32 0.0, %v443
    %v445 = vpop.f32.mrb[0].mxu0
    %v446 = vpop.f32.mrb[0].mxu0
    %v447 = vadd.f32 0.0, %v446
    %v448 = vpop.f32.mrb[0].mxu0
    %449 = vdwg.mxu0
    %452 = vrot.lane.b32.xlu0 %v267, 32
    %v453 = vpop.permute.xlu0 %452
    %454 = vrot.lane.b32.xlu0 %v270, 32
    %v455 = vpop.permute.xlu0 %454
    %460 = vrot.lane.b32.xlu0 %v326, 64
    %v461 = vpop.permute.xlu0 %460
    %462 = vrot.lane.b32.xlu0 %v329, 64
    %v463 = vpop.permute.xlu0 %462
    %468 = vrot.lane.b32.xlu0 %v385, 96
    %v469 = vpop.permute.xlu0 %468
    %470 = vrot.lane.b32.xlu0 %v388, 96
    %v471 = vpop.permute.xlu0 %470
    %vm474 = vcmask 261120
    %v475 = vsel %vm474, %v208, %v453
    %v476 = vsel %vm474, %v211, %v455
    %vm477 = vcmask 523264
    %v478 = vsel %vm477, %v475, %v461
    %v479 = vsel %vm477, %v476, %v463
    %vm480 = vcmask 785408
    %v481 = vsel %vm480, %v478, %v469
    %v482 = vsel %vm480, %v479, %v471
    %v483 = vsel %vm474, %v444, 0.0
    %v484 = vsel %vm474, %v447, 0.0
    %v485 = vld [vmem:[#allocation8] sm:$0xff]
    %v486 = vld [vmem:[#allocation8 + $0x8] sm:$0xff]
    %v487 = vld [vmem:[#allocation8 + $0x10] sm:$0xff]
    %v488 = vld [vmem:[#allocation8 + $0x18] sm:$0xff]
    %v489 = vadd.f32 %v481, %v485
    %v490 = vadd.f32 %v483, %v486
    %v491 = vadd.f32 %v482, %v487
    %v492 = vadd.f32 %v484, %v488
    %v493 = vpack.c.bf16 %v491, %v489
    %v494 = vpack.c.bf16 %v492, %v490
    %v495 = vld [vmem:[#allocation10] sm:$0xff]
    %v496 = vld [vmem:[#allocation10 + $0x8] sm:$0xff]
    %v497 = vld [vmem:[#allocation10 + $0x10] sm:$0xff]
    %v498 = vld [vmem:[#allocation10 + $0x18] sm:$0xff]
    %v499 = vld [vmem:[#allocation10 + $0x20] sm:$0xff]
    %v500 = vld [vmem:[#allocation10 + $0x28] sm:$0xff]
    %v501 = vld [vmem:[#allocation10 + $0x30] sm:$0xff]
    %v502 = vld [vmem:[#allocation10 + $0x38] sm:$0xff]
    %v503 = vld [vmem:[#allocation10 + $0x40] sm:$0xff]
    %v504 = vld [vmem:[#allocation10 + $0x48] sm:$0xff]
    %v505 = vld [vmem:[#allocation10 + $0x50] sm:$0xff]
    %v506 = vld [vmem:[#allocation10 + $0x58] sm:$0xff]
    %v507 = vld [vmem:[#allocation10 + $0x60] sm:$0xff]
    %v508 = vld [vmem:[#allocation10 + $0x68] sm:$0xff]
    %v509 = vld [vmem:[#allocation10 + $0x70] sm:$0xff]
    %v510 = vld [vmem:[#allocation10 + $0x78] sm:$0xff]
    %v511 = vld [vmem:[#allocation10 + $0x80] sm:$0xff]
    %v512 = vld [vmem:[#allocation10 + $0x88] sm:$0xff]
    %v513 = vld [vmem:[#allocation10 + $0x90] sm:$0xff]
    %v514 = vld [vmem:[#allocation10 + $0x98] sm:$0xff]
    %v515 = vld [vmem:[#allocation10 + $0xa0] sm:$0xff]
    %v516 = vld [vmem:[#allocation10 + $0xa8] sm:$0xff]
    %v517 = vld [vmem:[#allocation10 + $0xb0] sm:$0xff]
    %v518 = vld [vmem:[#allocation10 + $0xb8] sm:$0xff]
    %v519 = vld [vmem:[#allocation10 + $0xc0] sm:$0xff]
    %v520 = vld [vmem:[#allocation10 + $0xc8] sm:$0xff]
    %v521 = vld [vmem:[#allocation10 + $0xd0] sm:$0xff]
    %v522 = vld [vmem:[#allocation10 + $0xd8] sm:$0xff]
    %v523 = vld [vmem:[#allocation10 + $0xe0] sm:$0xff]
    %v524 = vld [vmem:[#allocation10 + $0xe8] sm:$0xff]
    %v525 = vld [vmem:[#allocation10 + $0xf0] sm:$0xff]
    %v526 = vld [vmem:[#allocation10 + $0xf8] sm:$0xff]
    %v527 = vld [vmem:[%s5] sm:$0x3]
    %v529 = vlaneseq
    %v530 = vshrl.u32 %v529, 7
    %v531 = vsub.s32 0, %v530
    %v532 = vrot.slane %v527, %v531
    %v533 = vlaneseq
    %v534 = vshrl.u32 %v533, 7
    %v535 = vsub.s32 1, %v534
    %v536 = vrot.slane %v527, %v535
    %v571 = vunpack.c.l.b16 %v495
    %v572 = vunpack.c.h.b16 %v495
    %v573 = vunpack.c.l.b16 %v496
    %v574 = vunpack.c.h.b16 %v496
    %v575 = vunpack.c.l.b16 %v497
    %v576 = vunpack.c.h.b16 %v497
    %v577 = vunpack.c.l.b16 %v498
    %v578 = vunpack.c.h.b16 %v498
    %v579 = vunpack.c.l.b16 %v499
    %v580 = vunpack.c.h.b16 %v499
    %v581 = vunpack.c.l.b16 %v500
    %v582 = vunpack.c.h.b16 %v500
    %v583 = vunpack.c.l.b16 %v501
    %v584 = vunpack.c.h.b16 %v501
    %v585 = vunpack.c.l.b16 %v502
    %v586 = vunpack.c.h.b16 %v502
    %v587 = vunpack.c.l.b16 %v503
    %v588 = vunpack.c.h.b16 %v503
    %v589 = vunpack.c.l.b16 %v504
    %v590 = vunpack.c.h.b16 %v504
    %v591 = vunpack.c.l.b16 %v505
    %v592 = vunpack.c.h.b16 %v505
    %v593 = vunpack.c.l.b16 %v506
    %v594 = vunpack.c.h.b16 %v506
    %v595 = vunpack.c.l.b16 %v507
    %v596 = vunpack.c.h.b16 %v507
    %v597 = vunpack.c.l.b16 %v508
    %v598 = vunpack.c.h.b16 %v508
    %v599 = vunpack.c.l.b16 %v509
    %v600 = vunpack.c.h.b16 %v509
    %v601 = vunpack.c.l.b16 %v510
    %v602 = vunpack.c.h.b16 %v510
    %v603 = vunpack.c.l.b16 %v511
    %v604 = vunpack.c.h.b16 %v511
    %v605 = vunpack.c.l.b16 %v512
    %v606 = vunpack.c.h.b16 %v512
    %v607 = vunpack.c.l.b16 %v513
    %v608 = vunpack.c.h.b16 %v513
    %v609 = vunpack.c.l.b16 %v514
    %v610 = vunpack.c.h.b16 %v514
    %v611 = vunpack.c.l.b16 %v515
    %v612 = vunpack.c.h.b16 %v515
    %v613 = vunpack.c.l.b16 %v516
    %v614 = vunpack.c.h.b16 %v516
    %v615 = vunpack.c.l.b16 %v517
    %v616 = vunpack.c.h.b16 %v517
    %v617 = vunpack.c.l.b16 %v518
    %v618 = vunpack.c.h.b16 %v518
    %v619 = vunpack.c.l.b16 %v519
    %v620 = vunpack.c.h.b16 %v519
    %v621 = vunpack.c.l.b16 %v520
    %v622 = vunpack.c.h.b16 %v520
    %v623 = vunpack.c.l.b16 %v521
    %v624 = vunpack.c.h.b16 %v521
    %v625 = vunpack.c.l.b16 %v522
    %v626 = vunpack.c.h.b16 %v522
    %v627 = vunpack.c.l.b16 %v523
    %v628 = vunpack.c.h.b16 %v523
    %v629 = vunpack.c.l.b16 %v524
    %v630 = vunpack.c.h.b16 %v524
    %v631 = vunpack.c.l.b16 %v525
    %v632 = vunpack.c.h.b16 %v525
    %v633 = vunpack.c.l.b16 %v526
    %v634 = vunpack.c.h.b16 %v526
    %v635 = vpack.c.b16 %v573, %v571
    %v636 = vpack.c.b16 %v574, %v572
    %v637 = vpack.c.b16 %v577, %v575
    %v638 = vpack.c.b16 %v578, %v576
    %v639 = vpack.c.b16 %v581, %v579
    %v640 = vpack.c.b16 %v582, %v580
    %v641 = vpack.c.b16 %v585, %v583
    %v642 = vpack.c.b16 %v586, %v584
    %v643 = vpack.c.b16 %v589, %v587
    %v644 = vpack.c.b16 %v590, %v588
    %v645 = vpack.c.b16 %v593, %v591
    %v646 = vpack.c.b16 %v594, %v592
    %v647 = vpack.c.b16 %v597, %v595
    %v648 = vpack.c.b16 %v598, %v596
    %v649 = vpack.c.b16 %v601, %v599
    %v650 = vpack.c.b16 %v602, %v600
    %v651 = vpack.c.b16 %v605, %v603
    %v652 = vpack.c.b16 %v606, %v604
    %v653 = vpack.c.b16 %v609, %v607
    %v654 = vpack.c.b16 %v610, %v608
    %v655 = vpack.c.b16 %v613, %v611
    %v656 = vpack.c.b16 %v614, %v612
    %v657 = vpack.c.b16 %v617, %v615
    %v658 = vpack.c.b16 %v618, %v616
    %v659 = vpack.c.b16 %v621, %v619
    %v660 = vpack.c.b16 %v622, %v620
    %v661 = vpack.c.b16 %v625, %v623
    %v662 = vpack.c.b16 %v626, %v624
    %v663 = vpack.c.b16 %v629, %v627
    %v664 = vpack.c.b16 %v630, %v628
    %v665 = vpack.c.b16 %v633, %v631
    %v666 = vpack.c.b16 %v634, %v632
    %699 = vmatprep.subr.bf16.mxu0 %v636
    %700 = vmatpush1.bf16.msra.mxu0 %v635
    %701 = vmatprep.subr.bf16.mxu0 %v638
    %702 = vmatpush1.bf16.msra.mxu0 %v637
    %703 = vmatprep.subr.bf16.mxu0 %v640
    %704 = vmatpush1.bf16.msra.mxu0 %v639
    %705 = vmatprep.subr.bf16.mxu0 %v642
    %706 = vmatpush1.bf16.msra.mxu0 %v641
    %707 = vmatprep.subr.bf16.mxu0 %v644
    %708 = vmatpush1.bf16.msra.mxu0 %v643
    %709 = vmatprep.subr.bf16.mxu0 %v646
    %710 = vmatpush1.bf16.msra.mxu0 %v645
    %711 = vmatprep.subr.bf16.mxu0 %v648
    %712 = vmatpush1.bf16.msra.mxu0 %v647
    %713 = vmatprep.subr.bf16.mxu0 %v650
    %714 = vmatpush1.bf16.msra.mxu0 %v649
    %715 = vmatprep.subr.bf16.mxu0 %v652
    %716 = vmatpush1.bf16.msra.mxu0 %v651
    %717 = vmatprep.subr.bf16.mxu0 %v654
    %718 = vmatpush1.bf16.msra.mxu0 %v653
    %719 = vmatprep.subr.bf16.mxu0 %v656
    %720 = vmatpush1.bf16.msra.mxu0 %v655
    %721 = vmatprep.subr.bf16.mxu0 %v658
    %722 = vmatpush1.bf16.msra.mxu0 %v657
    %723 = vmatprep.subr.bf16.mxu0 %v660
    %724 = vmatpush1.bf16.msra.mxu0 %v659
    %725 = vmatprep.subr.bf16.mxu0 %v662
    %726 = vmatpush1.bf16.msra.mxu0 %v661
    %727 = vmatprep.subr.bf16.mxu0 %v664
    %728 = vmatpush1.bf16.msra.mxu0 %v663
    %729 = vmatprep.subr.bf16.mxu0 %v666
    %730 = vmatpush1.bf16.msra.mxu0 %v665
    %731 = vmatprep.mubr.bf16.mxu0 %v494
    %732 = vmatmul.mubr.bf16.gmra.mrb[0].mxu0 %v493
    %v733 = vpop.f32.mrb[0].mxu0
    %v734 = vadd.f32 %v532, %v733
    %v735 = vpop.f32.mrb[0].mxu0
    %v736 = vadd.f32 %v536, %v735
    %v737 = vpop.f32.mrb[0].mxu0
    %v738 = vadd.f32 %v532, %v737
    %v739 = vpop.f32.mrb[0].mxu0
    %v740 = vadd.f32 %v536, %v739
    %741 = vdwg.mxu0
    %v742 = vmax.f32 %v734, 0.0
    %v743 = vmax.f32 %v736, 0.0
    %v744 = vmax.f32 %v738, 0.0
    %v745 = vmax.f32 %v740, 0.0
    %v746 = vadd.f32 %v742, %v489
    %v747 = vadd.f32 %v743, %v490
    %v748 = vadd.f32 %v744, %v491
    %v749 = vadd.f32 %v745, %v492
    %v750 = vpack.c.bf16 %v748, %v746
    %v751 = vpack.c.bf16 %v749, %v747
    %v752 = vld [vmem:[#allocation11] sm:$0xff]
    %v753 = vld [vmem:[#allocation11 + $0x8] sm:$0xff]
    %v754 = vld [vmem:[#allocation11 + $0x10] sm:$0xff]
    %v755 = vld [vmem:[#allocation11 + $0x18] sm:$0xff]
    %v756 = vld [vmem:[#allocation11 + $0x20] sm:$0xff]
    %v757 = vld [vmem:[#allocation11 + $0x28] sm:$0xff]
    %v758 = vld [vmem:[#allocation11 + $0x30] sm:$0xff]
    %v759 = vld [vmem:[#allocation11 + $0x38] sm:$0xff]
    %v760 = vld [vmem:[#allocation11 + $0x40] sm:$0xff]
    %v761 = vld [vmem:[#allocation11 + $0x48] sm:$0xff]
    %v762 = vld [vmem:[#allocation11 + $0x50] sm:$0xff]
    %v763 = vld [vmem:[#allocation11 + $0x58] sm:$0xff]
    %v764 = vld [vmem:[#allocation11 + $0x60] sm:$0xff]
    %v765 = vld [vmem:[#allocation11 + $0x68] sm:$0xff]
    %v766 = vld [vmem:[#allocation11 + $0x70] sm:$0xff]
    %v767 = vld [vmem:[#allocation11 + $0x78] sm:$0xff]
    %v768 = vld [vmem:[#allocation11 + $0x80] sm:$0xff]
    %v769 = vld [vmem:[#allocation11 + $0x88] sm:$0xff]
    %v770 = vld [vmem:[#allocation11 + $0x90] sm:$0xff]
    %v771 = vld [vmem:[#allocation11 + $0x98] sm:$0xff]
    %v772 = vld [vmem:[#allocation11 + $0xa0] sm:$0xff]
    %v773 = vld [vmem:[#allocation11 + $0xa8] sm:$0xff]
    %v774 = vld [vmem:[#allocation11 + $0xb0] sm:$0xff]
    %v775 = vld [vmem:[#allocation11 + $0xb8] sm:$0xff]
    %v776 = vld [vmem:[#allocation11 + $0xc0] sm:$0xff]
    %v777 = vld [vmem:[#allocation11 + $0xc8] sm:$0xff]
    %v778 = vld [vmem:[#allocation11 + $0xd0] sm:$0xff]
    %v779 = vld [vmem:[#allocation11 + $0xd8] sm:$0xff]
    %v780 = vld [vmem:[#allocation11 + $0xe0] sm:$0xff]
    %v781 = vld [vmem:[#allocation11 + $0xe8] sm:$0xff]
    %v782 = vld [vmem:[#allocation11 + $0xf0] sm:$0xff]
    %v783 = vld [vmem:[#allocation11 + $0xf8] sm:$0xff]
    %v784 = vld [vmem:[%s7] sm:$0x3]
    %v786 = vlaneseq
    %v787 = vshrl.u32 %v786, 7
    %v788 = vsub.s32 0, %v787
    %v789 = vrot.slane %v784, %v788
    %v790 = vlaneseq
    %v791 = vshrl.u32 %v790, 7
    %v792 = vsub.s32 1, %v791
    %v793 = vrot.slane %v784, %v792
    %v828 = vunpack.c.l.b16 %v752
    %v829 = vunpack.c.h.b16 %v752
    %v830 = vunpack.c.l.b16 %v753
    %v831 = vunpack.c.h.b16 %v753
    %v832 = vunpack.c.l.b16 %v754
    %v833 = vunpack.c.h.b16 %v754
    %v834 = vunpack.c.l.b16 %v755
    %v835 = vunpack.c.h.b16 %v755
    %v836 = vunpack.c.l.b16 %v756
    %v837 = vunpack.c.h.b16 %v756
    %v838 = vunpack.c.l.b16 %v757
    %v839 = vunpack.c.h.b16 %v757
    %v840 = vunpack.c.l.b16 %v758
    %v841 = vunpack.c.h.b16 %v758
    %v842 = vunpack.c.l.b16 %v759
    %v843 = vunpack.c.h.b16 %v759
    %v844 = vunpack.c.l.b16 %v760
    %v845 = vunpack.c.h.b16 %v760
    %v846 = vunpack.c.l.b16 %v761
    %v847 = vunpack.c.h.b16 %v761
    %v848 = vunpack.c.l.b16 %v762
    %v849 = vunpack.c.h.b16 %v762
    %v850 = vunpack.c.l.b16 %v763
    %v851 = vunpack.c.h.b16 %v763
    %v852 = vunpack.c.l.b16 %v764
    %v853 = vunpack.c.h.b16 %v764
    %v854 = vunpack.c.l.b16 %v765
    %v855 = vunpack.c.h.b16 %v765
    %v856 = vunpack.c.l.b16 %v766
    %v857 = vunpack.c.h.b16 %v766
    %v858 = vunpack.c.l.b16 %v767
    %v859 = vunpack.c.h.b16 %v767
    %v860 = vunpack.c.l.b16 %v768
    %v861 = vunpack.c.h.b16 %v768
    %v862 = vunpack.c.l.b16 %v769
    %v863 = vunpack.c.h.b16 %v769
    %v864 = vunpack.c.l.b16 %v770
    %v865 = vunpack.c.h.b16 %v770
    %v866 = vunpack.c.l.b16 %v771
    %v867 = vunpack.c.h.b16 %v771
    %v868 = vunpack.c.l.b16 %v772
    %v869 = vunpack.c.h.b16 %v772
    %v870 = vunpack.c.l.b16 %v773
    %v871 = vunpack.c.h.b16 %v773
    %v872 = vunpack.c.l.b16 %v774
    %v873 = vunpack.c.h.b16 %v774
    %v874 = vunpack.c.l.b16 %v775
    %v875 = vunpack.c.h.b16 %v775
    %v876 = vunpack.c.l.b16 %v776
    %v877 = vunpack.c.h.b16 %v776
    %v878 = vunpack.c.l.b16 %v777
    %v879 = vunpack.c.h.b16 %v777
    %v880 = vunpack.c.l.b16 %v778
    %v881 = vunpack.c.h.b16 %v778
    %v882 = vunpack.c.l.b16 %v779
    %v883 = vunpack.c.h.b16 %v779
    %v884 = vunpack.c.l.b16 %v780
    %v885 = vunpack.c.h.b16 %v780
    %v886 = vunpack.c.l.b16 %v781
    %v887 = vunpack.c.h.b16 %v781
    %v888 = vunpack.c.l.b16 %v782
    %v889 = vunpack.c.h.b16 %v782
    %v890 = vunpack.c.l.b16 %v783
    %v891 = vunpack.c.h.b16 %v783
    %v892 = vpack.c.b16 %v830, %v828
    %v893 = vpack.c.b16 %v831, %v829
    %v894 = vpack.c.b16 %v834, %v832
    %v895 = vpack.c.b16 %v835, %v833
    %v896 = vpack.c.b16 %v838, %v836
    %v897 = vpack.c.b16 %v839, %v837
    %v898 = vpack.c.b16 %v842, %v840
    %v899 = vpack.c.b16 %v843, %v841
    %v900 = vpack.c.b16 %v846, %v844
    %v901 = vpack.c.b16 %v847, %v845
    %v902 = vpack.c.b16 %v850, %v848
    %v903 = vpack.c.b16 %v851, %v849
    %v904 = vpack.c.b16 %v854, %v852
    %v905 = vpack.c.b16 %v855, %v853
    %v906 = vpack.c.b16 %v858, %v856
    %v907 = vpack.c.b16 %v859, %v857
    %v908 = vpack.c.b16 %v862, %v860
    %v909 = vpack.c.b16 %v863, %v861
    %v910 = vpack.c.b16 %v866, %v864
    %v911 = vpack.c.b16 %v867, %v865
    %v912 = vpack.c.b16 %v870, %v868
    %v913 = vpack.c.b16 %v871, %v869
    %v914 = vpack.c.b16 %v874, %v872
    %v915 = vpack.c.b16 %v875, %v873
    %v916 = vpack.c.b16 %v878, %v876
    %v917 = vpack.c.b16 %v879, %v877
    %v918 = vpack.c.b16 %v882, %v880
    %v919 = vpack.c.b16 %v883, %v881
    %v920 = vpack.c.b16 %v886, %v884
    %v921 = vpack.c.b16 %v887, %v885
    %v922 = vpack.c.b16 %v890, %v888
    %v923 = vpack.c.b16 %v891, %v889
    %956 = vmatprep.subr.bf16.mxu0 %v893
    %957 = vmatpush1.bf16.msra.mxu0 %v892
    %958 = vmatprep.subr.bf16.mxu0 %v895
    %959 = vmatpush1.bf16.msra.mxu0 %v894
    %960 = vmatprep.subr.bf16.mxu0 %v897
    %961 = vmatpush1.bf16.msra.mxu0 %v896
    %962 = vmatprep.subr.bf16.mxu0 %v899
    %963 = vmatpush1.bf16.msra.mxu0 %v898
    %964 = vmatprep.subr.bf16.mxu0 %v901
    %965 = vmatpush1.bf16.msra.mxu0 %v900
    %966 = vmatprep.subr.bf16.mxu0 %v903
    %967 = vmatpush1.bf16.msra.mxu0 %v902
    %968 = vmatprep.subr.bf16.mxu0 %v905
    %969 = vmatpush1.bf16.msra.mxu0 %v904
    %970 = vmatprep.subr.bf16.mxu0 %v907
    %971 = vmatpush1.bf16.msra.mxu0 %v906
    %972 = vmatprep.subr.bf16.mxu0 %v909
    %973 = vmatpush1.bf16.msra.mxu0 %v908
    %974 = vmatprep.subr.bf16.mxu0 %v911
    %975 = vmatpush1.bf16.msra.mxu0 %v910
    %976 = vmatprep.subr.bf16.mxu0 %v913
    %977 = vmatpush1.bf16.msra.mxu0 %v912
    %978 = vmatprep.subr.bf16.mxu0 %v915
    %979 = vmatpush1.bf16.msra.mxu0 %v914
    %980 = vmatprep.subr.bf16.mxu0 %v917
    %981 = vmatpush1.bf16.msra.mxu0 %v916
    %982 = vmatprep.subr.bf16.mxu0 %v919
    %983 = vmatpush1.bf16.msra.mxu0 %v918
    %984 = vmatprep.subr.bf16.mxu0 %v921
    %985 = vmatpush1.bf16.msra.mxu0 %v920
    %986 = vmatprep.subr.bf16.mxu0 %v923
    %987 = vmatpush1.bf16.msra.mxu0 %v922
    %988 = vmatprep.mubr.bf16.mxu0 %v751
    %989 = vmatmul.mubr.bf16.gmra.mrb[0].mxu0 %v750
    %v990 = vpop.f32.mrb[0].mxu0
    %v991 = vadd.f32 %v789, %v990
    %v992 = vpop.f32.mrb[0].mxu0
    %v993 = vadd.f32 %v793, %v992
    %v994 = vpop.f32.mrb[0].mxu0
    %v995 = vadd.f32 %v789, %v994
    %v996 = vpop.f32.mrb[0].mxu0
    %v997 = vadd.f32 %v793, %v996
    %998 = vdwg.mxu0
    %v999 = vmax.f32 %v991, 0.0
    %v1000 = vmax.f32 %v993, 0.0
    %v1001 = vmax.f32 %v995, 0.0
    %v1002 = vmax.f32 %v997, 0.0
    %v1003 = vadd.f32 %v999, %v746
    %v1004 = vadd.f32 %v1000, %v747
    %v1005 = vadd.f32 %v1001, %v748
    %v1006 = vadd.f32 %v1002, %v749
    %v1007 = vpack.c.bf16 %v1005, %v1003
    %v1008 = vpack.c.bf16 %v1006, %v1004
    %v1009 = vld [vmem:[#allocation13] sm:$0xff]
    %v1010 = vld [vmem:[#allocation13 + $0x8] sm:$0xff]
    %v1011 = vld [vmem:[#allocation13 + $0x10] sm:$0xff]
    %v1012 = vld [vmem:[#allocation13 + $0x18] sm:$0xff]
    %v1013 = vld [vmem:[#allocation13 + $0x20] sm:$0xff]
    %v1014 = vld [vmem:[#allocation13 + $0x28] sm:$0xff]
    %v1015 = vld [vmem:[#allocation13 + $0x30] sm:$0xff]
    %v1016 = vld [vmem:[#allocation13 + $0x38] sm:$0xff]
    %v1017 = vld [vmem:[#allocation13 + $0x40] sm:$0xff]
    %v1018 = vld [vmem:[#allocation13 + $0x48] sm:$0xff]
    %v1019 = vld [vmem:[#allocation13 + $0x50] sm:$0xff]
    %v1020 = vld [vmem:[#allocation13 + $0x58] sm:$0xff]
    %v1021 = vld [vmem:[#allocation13 + $0x60] sm:$0xff]
    %v1022 = vld [vmem:[#allocation13 + $0x68] sm:$0xff]
    %v1023 = vld [vmem:[#allocation13 + $0x70] sm:$0xff]
    %v1024 = vld [vmem:[#allocation13 + $0x78] sm:$0xff]
    %v1025 = vld [vmem:[#allocation13 + $0x80] sm:$0xff]
    %v1026 = vld [vmem:[#allocation13 + $0x88] sm:$0xff]
    %v1027 = vld [vmem:[#allocation13 + $0x90] sm:$0xff]
    %v1028 = vld [vmem:[#allocation13 + $0x98] sm:$0xff]
    %v1029 = vld [vmem:[#allocation13 + $0xa0] sm:$0xff]
    %v1030 = vld [vmem:[#allocation13 + $0xa8] sm:$0xff]
    %v1031 = vld [vmem:[#allocation13 + $0xb0] sm:$0xff]
    %v1032 = vld [vmem:[#allocation13 + $0xb8] sm:$0xff]
    %v1033 = vld [vmem:[#allocation13 + $0xc0] sm:$0xff]
    %v1034 = vld [vmem:[#allocation13 + $0xc8] sm:$0xff]
    %v1035 = vld [vmem:[#allocation13 + $0xd0] sm:$0xff]
    %v1036 = vld [vmem:[#allocation13 + $0xd8] sm:$0xff]
    %v1037 = vld [vmem:[#allocation13 + $0xe0] sm:$0xff]
    %v1038 = vld [vmem:[#allocation13 + $0xe8] sm:$0xff]
    %v1039 = vld [vmem:[#allocation13 + $0xf0] sm:$0xff]
    %v1040 = vld [vmem:[#allocation13 + $0xf8] sm:$0xff]
    %v1041 = vld [vmem:[%s9] sm:$0x3]
    %v1043 = vlaneseq
    %v1044 = vshrl.u32 %v1043, 7
    %v1045 = vsub.s32 0, %v1044
    %v1046 = vrot.slane %v1041, %v1045
    %v1047 = vlaneseq
    %v1048 = vshrl.u32 %v1047, 7
    %v1049 = vsub.s32 1, %v1048
    %v1050 = vrot.slane %v1041, %v1049
    %v1085 = vunpack.c.l.b16 %v1009
    %v1086 = vunpack.c.h.b16 %v1009
    %v1087 = vunpack.c.l.b16 %v1010
    %v1088 = vunpack.c.h.b16 %v1010
    %v1089 = vunpack.c.l.b16 %v1011
    %v1090 = vunpack.c.h.b16 %v1011
    %v1091 = vunpack.c.l.b16 %v1012
    %v1092 = vunpack.c.h.b16 %v1012
    %v1093 = vunpack.c.l.b16 %v1013
    %v1094 = vunpack.c.h.b16 %v1013
    %v1095 = vunpack.c.l.b16 %v1014
    %v1096 = vunpack.c.h.b16 %v1014
    %v1097 = vunpack.c.l.b16 %v1015
    %v1098 = vunpack.c.h.b16 %v1015
    %v1099 = vunpack.c.l.b16 %v1016
    %v1100 = vunpack.c.h.b16 %v1016
    %v1101 = vunpack.c.l.b16 %v1017
    %v1102 = vunpack.c.h.b16 %v1017
    %v1103 = vunpack.c.l.b16 %v1018
    %v1104 = vunpack.c.h.b16 %v1018
    %v1105 = vunpack.c.l.b16 %v1019
    %v1106 = vunpack.c.h.b16 %v1019
    %v1107 = vunpack.c.l.b16 %v1020
    %v1108 = vunpack.c.h.b16 %v1020
    %v1109 = vunpack.c.l.b16 %v1021
    %v1110 = vunpack.c.h.b16 %v1021
    %v1111 = vunpack.c.l.b16 %v1022
    %v1112 = vunpack.c.h.b16 %v1022
    %v1113 = vunpack.c.l.b16 %v1023
    %v1114 = vunpack.c.h.b16 %v1023
    %v1115 = vunpack.c.l.b16 %v1024
    %v1116 = vunpack.c.h.b16 %v1024
    %v1117 = vunpack.c.l.b16 %v1025
    %v1118 = vunpack.c.h.b16 %v1025
    %v1119 = vunpack.c.l.b16 %v1026
    %v1120 = vunpack.c.h.b16 %v1026
    %v1121 = vunpack.c.l.b16 %v1027
    %v1122 = vunpack.c.h.b16 %v1027
    %v1123 = vunpack.c.l.b16 %v1028
    %v1124 = vunpack.c.h.b16 %v1028
    %v1125 = vunpack.c.l.b16 %v1029
    %v1126 = vunpack.c.h.b16 %v1029
    %v1127 = vunpack.c.l.b16 %v1030
    %v1128 = vunpack.c.h.b16 %v1030
    %v1129 = vunpack.c.l.b16 %v1031
    %v1130 = vunpack.c.h.b16 %v1031
    %v1131 = vunpack.c.l.b16 %v1032
    %v1132 = vunpack.c.h.b16 %v1032
    %v1133 = vunpack.c.l.b16 %v1033
    %v1134 = vunpack.c.h.b16 %v1033
    %v1135 = vunpack.c.l.b16 %v1034
    %v1136 = vunpack.c.h.b16 %v1034
    %v1137 = vunpack.c.l.b16 %v1035
    %v1138 = vunpack.c.h.b16 %v1035
    %v1139 = vunpack.c.l.b16 %v1036
    %v1140 = vunpack.c.h.b16 %v1036
    %v1141 = vunpack.c.l.b16 %v1037
    %v1142 = vunpack.c.h.b16 %v1037
    %v1143 = vunpack.c.l.b16 %v1038
    %v1144 = vunpack.c.h.b16 %v1038
    %v1145 = vunpack.c.l.b16 %v1039
    %v1146 = vunpack.c.h.b16 %v1039
    %v1147 = vunpack.c.l.b16 %v1040
    %v1148 = vunpack.c.h.b16 %v1040
    %v1149 = vpack.c.b16 %v1087, %v1085
    %v1150 = vpack.c.b16 %v1088, %v1086
    %v1151 = vpack.c.b16 %v1091, %v1089
    %v1152 = vpack.c.b16 %v1092, %v1090
    %v1153 = vpack.c.b16 %v1095, %v1093
    %v1154 = vpack.c.b16 %v1096, %v1094
    %v1155 = vpack.c.b16 %v1099, %v1097
    %v1156 = vpack.c.b16 %v1100, %v1098
    %v1157 = vpack.c.b16 %v1103, %v1101
    %v1158 = vpack.c.b16 %v1104, %v1102
    %v1159 = vpack.c.b16 %v1107, %v1105
    %v1160 = vpack.c.b16 %v1108, %v1106
    %v1161 = vpack.c.b16 %v1111, %v1109
    %v1162 = vpack.c.b16 %v1112, %v1110
    %v1163 = vpack.c.b16 %v1115, %v1113
    %v1164 = vpack.c.b16 %v1116, %v1114
    %v1165 = vpack.c.b16 %v1119, %v1117
    %v1166 = vpack.c.b16 %v1120, %v1118
    %v1167 = vpack.c.b16 %v1123, %v1121
    %v1168 = vpack.c.b16 %v1124, %v1122
    %v1169 = vpack.c.b16 %v1127, %v1125
    %v1170 = vpack.c.b16 %v1128, %v1126
    %v1171 = vpack.c.b16 %v1131, %v1129
    %v1172 = vpack.c.b16 %v1132, %v1130
    %v1173 = vpack.c.b16 %v1135, %v1133
    %v1174 = vpack.c.b16 %v1136, %v1134
    %v1175 = vpack.c.b16 %v1139, %v1137
    %v1176 = vpack.c.b16 %v1140, %v1138
    %v1177 = vpack.c.b16 %v1143, %v1141
    %v1178 = vpack.c.b16 %v1144, %v1142
    %v1179 = vpack.c.b16 %v1147, %v1145
    %v1180 = vpack.c.b16 %v1148, %v1146
    %1213 = vmatprep.subr.bf16.mxu0 %v1150
    %1214 = vmatpush1.bf16.msra.mxu0 %v1149
    %1215 = vmatprep.subr.bf16.mxu0 %v1152
    %1216 = vmatpush1.bf16.msra.mxu0 %v1151
    %1217 = vmatprep.subr.bf16.mxu0 %v1154
    %1218 = vmatpush1.bf16.msra.mxu0 %v1153
    %1219 = vmatprep.subr.bf16.mxu0 %v1156
    %1220 = vmatpush1.bf16.msra.mxu0 %v1155
    %1221 = vmatprep.subr.bf16.mxu0 %v1158
    %1222 = vmatpush1.bf16.msra.mxu0 %v1157
    %1223 = vmatprep.subr.bf16.mxu0 %v1160
    %1224 = vmatpush1.bf16.msra.mxu0 %v1159
    %1225 = vmatprep.subr.bf16.mxu0 %v1162
    %1226 = vmatpush1.bf16.msra.mxu0 %v1161
    %1227 = vmatprep.subr.bf16.mxu0 %v1164
    %1228 = vmatpush1.bf16.msra.mxu0 %v1163
    %1229 = vmatprep.subr.bf16.mxu0 %v1166
    %1230 = vmatpush1.bf16.msra.mxu0 %v1165
    %1231 = vmatprep.subr.bf16.mxu0 %v1168
    %1232 = vmatpush1.bf16.msra.mxu0 %v1167
    %1233 = vmatprep.subr.bf16.mxu0 %v1170
    %1234 = vmatpush1.bf16.msra.mxu0 %v1169
    %1235 = vmatprep.subr.bf16.mxu0 %v1172
    %1236 = vmatpush1.bf16.msra.mxu0 %v1171
    %1237 = vmatprep.subr.bf16.mxu0 %v1174
    %1238 = vmatpush1.bf16.msra.mxu0 %v1173
    %1239 = vmatprep.subr.bf16.mxu0 %v1176
    %1240 = vmatpush1.bf16.msra.mxu0 %v1175
    %1241 = vmatprep.subr.bf16.mxu0 %v1178
    %1242 = vmatpush1.bf16.msra.mxu0 %v1177
    %1243 = vmatprep.subr.bf16.mxu0 %v1180
    %1244 = vmatpush1.bf16.msra.mxu0 %v1179
    %1245 = vmatprep.mubr.bf16.mxu0 %v1008
    %1246 = vmatmul.mubr.bf16.gmra.mrb[0].mxu0 %v1007
    %v1247 = vpop.f32.mrb[0].mxu0
    %v1248 = vadd.f32 %v1046, %v1247
    %v1249 = vpop.f32.mrb[0].mxu0
    %v1250 = vadd.f32 %v1050, %v1249
    %v1251 = vpop.f32.mrb[0].mxu0
    %v1252 = vadd.f32 %v1046, %v1251
    %v1253 = vpop.f32.mrb[0].mxu0
    %v1254 = vadd.f32 %v1050, %v1253
    %1255 = vdwg.mxu0
    %v1256 = vmax.f32 %v1248, 0.0
    %v1257 = vmax.f32 %v1250, 0.0
    %v1258 = vmax.f32 %v1252, 0.0
    %v1259 = vmax.f32 %v1254, 0.0
    %v1260 = vadd.f32 %v1256, %v1003
    %v1261 = vadd.f32 %v1257, %v1004
    %v1262 = vadd.f32 %v1258, %v1005
    %v1263 = vadd.f32 %v1259, %v1006
    %v1264 = vpack.c.bf16 %v1262, %v1260
    %v1265 = vpack.c.bf16 %v1263, %v1261
    %v1266 = vld [vmem:[#allocation14] sm:$0xf]
    %v1267 = vld [vmem:[#allocation14 + $0x4] sm:$0xf]
    %v1268 = vld [vmem:[#allocation14 + $0x8] sm:$0xf]
    %v1269 = vld [vmem:[#allocation14 + $0xc] sm:$0xf]
    %v1270 = vld [vmem:[#allocation14 + $0x10] sm:$0xf]
    %v1271 = vld [vmem:[#allocation14 + $0x14] sm:$0xf]
    %v1272 = vld [vmem:[#allocation14 + $0x18] sm:$0xf]
    %v1273 = vld [vmem:[#allocation14 + $0x1c] sm:$0xf]
    %v1274 = vld [vmem:[#allocation14 + $0x20] sm:$0xf]
    %v1275 = vld [vmem:[#allocation14 + $0x24] sm:$0xf]
    %v1276 = vld [vmem:[#allocation14 + $0x28] sm:$0xf]
    %v1277 = vld [vmem:[#allocation14 + $0x2c] sm:$0xf]
    %v1278 = vld [vmem:[#allocation14 + $0x30] sm:$0xf]
    %v1279 = vld [vmem:[#allocation14 + $0x34] sm:$0xf]
    %v1280 = vld [vmem:[#allocation14 + $0x38] sm:$0xf]
    %v1281 = vld [vmem:[#allocation14 + $0x3c] sm:$0xf]
    %v1282 = vld [vmem:[#allocation14 + $0x40] sm:$0xf]
    %v1283 = vld [vmem:[#allocation14 + $0x44] sm:$0xf]
    %v1284 = vld [vmem:[#allocation14 + $0x48] sm:$0xf]
    %v1285 = vld [vmem:[#allocation14 + $0x4c] sm:$0xf]
    %v1286 = vld [vmem:[#allocation14 + $0x50] sm:$0xf]
    %v1287 = vld [vmem:[#allocation14 + $0x54] sm:$0xf]
    %v1288 = vld [vmem:[#allocation14 + $0x58] sm:$0xf]
    %v1289 = vld [vmem:[#allocation14 + $0x5c] sm:$0xf]
    %v1290 = vld [vmem:[#allocation14 + $0x60] sm:$0xf]
    %v1291 = vld [vmem:[#allocation14 + $0x64] sm:$0xf]
    %v1292 = vld [vmem:[#allocation14 + $0x68] sm:$0xf]
    %v1293 = vld [vmem:[#allocation14 + $0x6c] sm:$0xf]
    %v1294 = vld [vmem:[#allocation14 + $0x70] sm:$0xf]
    %v1295 = vld [vmem:[#allocation14 + $0x74] sm:$0xf]
    %v1296 = vld [vmem:[#allocation14 + $0x78] sm:$0xf]
    %v1297 = vld [vmem:[#allocation14 + $0x7c] sm:$0xf]
    %v1298 = vld [vmem:[%s11] sm:$0x1]
    %v1300 = vlaneseq
    %v1301 = vshrl.u32 %v1300, 7
    %v1302 = vsub.s32 0, %v1301
    %v1303 = vrot.slane %v1298, %v1302
    %v1337 = vunpack.c.l.b16 %v1266
    %v1338 = vunpack.c.l.b16 %v1267
    %v1339 = vunpack.c.l.b16 %v1268
    %v1340 = vunpack.c.l.b16 %v1269
    %v1341 = vunpack.c.l.b16 %v1270
    %v1342 = vunpack.c.l.b16 %v1271
    %v1343 = vunpack.c.l.b16 %v1272
    %v1344 = vunpack.c.l.b16 %v1273
    %v1345 = vunpack.c.l.b16 %v1274
    %v1346 = vunpack.c.l.b16 %v1275
    %v1347 = vunpack.c.l.b16 %v1276
    %v1348 = vunpack.c.l.b16 %v1277
    %v1349 = vunpack.c.l.b16 %v1278
    %v1350 = vunpack.c.l.b16 %v1279
    %v1351 = vunpack.c.l.b16 %v1280
    %v1352 = vunpack.c.l.b16 %v1281
    %v1353 = vunpack.c.l.b16 %v1282
    %v1354 = vunpack.c.l.b16 %v1283
    %v1355 = vunpack.c.l.b16 %v1284
    %v1356 = vunpack.c.l.b16 %v1285
    %v1357 = vunpack.c.l.b16 %v1286
    %v1358 = vunpack.c.l.b16 %v1287
    %v1359 = vunpack.c.l.b16 %v1288
    %v1360 = vunpack.c.l.b16 %v1289
    %v1361 = vunpack.c.l.b16 %v1290
    %v1362 = vunpack.c.l.b16 %v1291
    %v1363 = vunpack.c.l.b16 %v1292
    %v1364 = vunpack.c.l.b16 %v1293
    %v1365 = vunpack.c.l.b16 %v1294
    %v1366 = vunpack.c.l.b16 %v1295
    %v1367 = vunpack.c.l.b16 %v1296
    %v1368 = vunpack.c.l.b16 %v1297
    %v1369 = vpack.c.b16 %v1338, %v1337
    %v1370 = vpack.c.b16 %v1340, %v1339
    %v1371 = vpack.c.b16 %v1342, %v1341
    %v1372 = vpack.c.b16 %v1344, %v1343
    %v1373 = vpack.c.b16 %v1346, %v1345
    %v1374 = vpack.c.b16 %v1348, %v1347
    %v1375 = vpack.c.b16 %v1350, %v1349
    %v1376 = vpack.c.b16 %v1352, %v1351
    %v1377 = vpack.c.b16 %v1354, %v1353
    %v1378 = vpack.c.b16 %v1356, %v1355
    %v1379 = vpack.c.b16 %v1358, %v1357
    %v1380 = vpack.c.b16 %v1360, %v1359
    %v1381 = vpack.c.b16 %v1362, %v1361
    %v1382 = vpack.c.b16 %v1364, %v1363
    %v1383 = vpack.c.b16 %v1366, %v1365
    %v1384 = vpack.c.b16 %v1368, %v1367
    %1401 = vmatprep.subr.bf16.mxu0 0
    %1402 = vmatpush1.bf16.msra.mxu0 %v1369
    %1403 = vmatprep.subr.bf16.mxu0 0
    %1404 = vmatpush1.bf16.msra.mxu0 %v1370
    %1405 = vmatprep.subr.bf16.mxu0 0
    %1406 = vmatpush1.bf16.msra.mxu0 %v1371
    %1407 = vmatprep.subr.bf16.mxu0 0
    %1408 = vmatpush1.bf16.msra.mxu0 %v1372
    %1409 = vmatprep.subr.bf16.mxu0 0
    %1410 = vmatpush1.bf16.msra.mxu0 %v1373
    %1411 = vmatprep.subr.bf16.mxu0 0
    %1412 = vmatpush1.bf16.msra.mxu0 %v1374
    %1413 = vmatprep.subr.bf16.mxu0 0
    %1414 = vmatpush1.bf16.msra.mxu0 %v1375
    %1415 = vmatprep.subr.bf16.mxu0 0
    %1416 = vmatpush1.bf16.msra.mxu0 %v1376
    %1417 = vmatprep.subr.bf16.mxu0 0
    %1418 = vmatpush1.bf16.msra.mxu0 %v1377
    %1419 = vmatprep.subr.bf16.mxu0 0
    %1420 = vmatpush1.bf16.msra.mxu0 %v1378
    %1421 = vmatprep.subr.bf16.mxu0 0
    %1422 = vmatpush1.bf16.msra.mxu0 %v1379
    %1423 = vmatprep.subr.bf16.mxu0 0
    %1424 = vmatpush1.bf16.msra.mxu0 %v1380
    %1425 = vmatprep.subr.bf16.mxu0 0
    %1426 = vmatpush1.bf16.msra.mxu0 %v1381
    %1427 = vmatprep.subr.bf16.mxu0 0
    %1428 = vmatpush1.bf16.msra.mxu0 %v1382
    %1429 = vmatprep.subr.bf16.mxu0 0
    %1430 = vmatpush1.bf16.msra.mxu0 %v1383
    %1431 = vmatprep.subr.bf16.mxu0 0
    %1432 = vmatpush1.bf16.msra.mxu0 %v1384
    %1433 = vmatprep.mubr.bf16.mxu0 %v1265
    %1434 = vmatmul.mubr.bf16.gmra.mrb[0].mxu0 %v1264
    %v1435 = vpop.f32.mrb[0].mxu0
    %v1436 = vadd.f32 %v1303, %v1435
    %v1437 = vpop.f32.mrb[0].mxu0
    %v1438 = vpop.f32.mrb[0].mxu0
    %v1439 = vadd.f32 %v1303, %v1438
    %v1440 = vpop.f32.mrb[0].mxu0
    %1441 = vdwg.mxu0
    %1442 = vst [vmem:[#allocation16] sm:$0xff] %v1436
    %1443 = vst [vmem:[#allocation16 + $0x8] sm:$0xff] %v1439
    // Predicated region
    $region82: #{tpu_custom_call.1} parent=1 // pred_check
      _
    $region83: #{tpu_custom_call.1} parent=1 // pred_check_branch
      %1445 = sbr.rel (0) target = $region85
    $region84: #{tpu_custom_call.1} parent=1 // pred_region
      %s1447 = ssub.s32 256, 256
      %1448 = vsyncadd [#allocation4], %s1447
      %s1449 = sshll.u32 [#allocation16], 4
      %s1450 = int_to_ptr.vmem [resolvable:$true] %s1449
      %1455 = dma.vmem_to_hbm [thread:$0]  %s1450, 256, %s12, [#allocation4], 128, 128, 8
    $region85: #{tpu_custom_call.1} parent=1 // pred_fallthru
      _
    // Predicated region
    $region86: #{tpu_custom_call.1} parent=1 // pred_check
      _
    $region87: #{tpu_custom_call.1} parent=1 // pred_check_branch
      %1457 = sbr.rel (0) target = $region89
    $region88: #{tpu_custom_call.1} parent=1 // pred_region
      %1458 = dma.done [#allocation4], 256
    $region89: #{tpu_custom_call.1} parent=1 // pred_fallthru
      _
    %1459 = vsyncpa [#allocation3], 1
    %1460 = vsyncpa [#allocation6], 1
    %1461 = vsyncpa [#allocation9], 1
    %1462 = vsyncpa [#allocation12], 1
    %1463 = vsyncpa [#allocation15], 1
    %1464 = vsyncpa [#allocation4], 1

</llo_original>
